<compile_context>
chip_gen: v7x
topology: tpu7x:2x2x1
jax: 0.10.0
libtpu: 0.0.40
codegen_flags: <defaults>
</compile_context>

<pallas_src>
import functools

import numpy as np
import jax
import jax.numpy as jnp
from jax import lax
from jax.experimental import pallas as pl
from jax.experimental.pallas import tpu as pltpu

F32 = jnp.float32
PSI_EPS = 1e-6    # floor before 1/psi and log(psi) (reference has none; psi ~ O(1))
_VMEM = pl.BlockSpec(memory_space=pltpu.MemorySpace.VMEM)


# ---------------------------------------------------------------------------
# In-kernel helpers
# ---------------------------------------------------------------------------
def _recip(x):
    """EUP approximate reciprocal + one Newton step (~f32 accurate)."""
    r = pl.reciprocal(x, approx=True)
    return r * (2.0 - x * r)


def _eye(k, dtype=F32):
    r = lax.broadcasted_iota(jnp.int32, (k, k), 0)
    c = lax.broadcasted_iota(jnp.int32, (k, k), 1)
    return (r == c).astype(dtype)


def _make_inv_spd(k):
    """Return inv(a) for a tiny SPD (k, k) matrix; constants hoisted once.

    k <= 4: closed-form adjugate/determinant inverse (parallel elementwise
            work on static (1,1) slices, single reciprocal).
    k  > 4: unpivoted Gauss-Jordan with static diagonal-slice pivots.
    """
    if k == 1:
        return _recip

    row_ids = lax.broadcasted_iota(jnp.int32, (k, k), 0)
    col_ids = lax.broadcasted_iota(jnp.int32, (k, k), 1)

    if k <= 4:
        # One-hot row / column masks for scatter-free reassembly (hoisted).
        col_onehot = [(lax.broadcasted_iota(jnp.int32, (1, k), 1) == j).astype(F32)
                      for j in range(k)]
        row_onehot = [(lax.broadcasted_iota(jnp.int32, (k, 1), 0) == i).astype(F32)
                      for i in range(k)]

        def inv_adj(a):
            e = [[a[i:i + 1, j:j + 1] for j in range(k)] for i in range(k)]
            memo = {}

            def minor_det(rs, cs):
                key = (rs, cs)
                if key in memo:
                    return memo[key]
                m = len(rs)
                if m == 1:
                    v = e[rs[0]][cs[0]]
                elif m == 2:
                    v = (e[rs[0]][cs[0]] * e[rs[1]][cs[1]]
                         - e[rs[0]][cs[1]] * e[rs[1]][cs[0]])
                else:
                    v = None
                    for jpos in range(m):
                        t = e[rs[0]][cs[jpos]] * minor_det(
                            rs[1:], cs[:jpos] + cs[jpos + 1:])
                        if jpos % 2 == 1:
                            t = -t
                        v = t if v is None else v + t
                memo[key] = v
                return v

            # Cofactors cof[i][j] = (-1)^(i+j) * det(A without row i, col j).
            cof = [[None] * k for _ in range(k)]
            for i in range(k):
                rs = tuple(r for r in range(k) if r != i)
                for j in range(k):
                    cs = tuple(c for c in range(k) if c != j)
                    m = minor_det(rs, cs)
                    cof[i][j] = m if (i + j) % 2 == 0 else -m

            det = None                              # Laplace along row 0
            for j in range(k):
                t = e[0][j] * cof[0][j]
                det = t if det is None else det + t
            inv_det = _recip(det)

            # inv[i, j] = cof[j][i] / det, assembled via one-hot masks.
            out = None
            for i in range(k):
                row_vals = None
                for j in range(k):
                    t = cof[j][i] * col_onehot[j]   # (1, k)
                    row_vals = t if row_vals is None else row_vals + t
                t = row_vals * row_onehot[i]        # (k, k) via broadcast
                out = t if out is None else out + t
            return out * inv_det

        return inv_adj

    # ---- k > 4 fallback: Gauss-Jordan, static (1,1) diagonal pivots --------
    col_sel = lax.broadcasted_iota(jnp.int32, (k, 1), 0)
    eye_k = (row_ids == col_ids).astype(F32)

    def inv_gj(a):
        b = eye_k
        for i in range(k):                          # static unroll
            inv_p = _recip(a[i:i + 1, i:i + 1])
            arow = a[i:i + 1, :] * inv_p
            brow = b[i:i + 1, :] * inv_p
            col = jnp.where(col_sel == i, 0.0, a[:, i:i + 1])
            a = a - col * arow
            b = b - col * brow
            rsel = row_ids == i
            a = jnp.where(rsel, arow, a)
            b = jnp.where(rsel, brow, b)
        return b

    return inv_gj


# ---------------------------------------------------------------------------
# Whole-fit kernel: fori_loop over EM iterations, single pallas_call
# ---------------------------------------------------------------------------
def _pcca_fit_kernel(y_ref, lam0_ref, psi0_ref, out_ref, nll_ref):
    """out_ref: (k+1, p) -> rows [0:k] = Lambda_new^T, row [k] = Psi_diag_new.
    nll_ref: (1, n_iters) -> NLL after each EM iteration (new parameters)."""
    y = y_ref[...]                                  # (p, n), samples on lanes
    n = y.shape[1]
    k = lam0_ref.shape[0]
    n_iters = nll_ref.shape[1]
    nf = float(n)
    inv_nf = 1.0 / nf

    # ---- Loop-invariant values (hoisted; JAX does not CSE broadcasts) ----
    inv_spd = _make_inv_spd(k)
    eye_k = _eye(k)
    it_lane = lax.broadcasted_iota(jnp.int32, (1, n_iters), 1)
    # diag(Y Y^T) as a lane-dense (1, p) row; constant across EM iterations.
    yy_row = lax.dot_general(jnp.ones((1, n), dtype=F32), y * y,
                             (((1,), (1,)), ((), ())),
                             preferred_element_type=F32)           # (1, p)

    def em_iter(it, carry):
        lam, psi, nlls = carry                      # (k, p), (1, p), (1, n_iters)

        # ---- E-step with OLD params (Woodbury: only k x k inverses) -------
        psi_inv = _recip(jnp.maximum(psi, PSI_EPS))                # (1, p)
        lp = lam * psi_inv                                         # (k, p) = L^T Psi^-1
        c = lax.dot_general(lp, lam, (((1,), (1,)), ((), ())),
                            preferred_element_type=F32)            # (k, k)
        m_inv = inv_spd(eye_k + c)                                 # (k, k)
        t = jnp.dot(lp, y, preferred_element_type=F32)             # (k, n)
        ez = jnp.dot(m_inv, t, preferred_element_type=F32)         # (k, n) = E[z|y]
        # sum_i E[zz^T|y_i] = n*(I - beta L) + Ez Ez^T, and I - beta L = m_inv.
        ezz_sum = nf * m_inv + lax.dot_general(
            ez, ez, (((1,), (1,)), ((), ())), preferred_element_type=F32)

        # ---- M-step --------------------------------------------------------
        zy = lax.dot_general(ez, y, (((1,), (1,)), ((), ())),
                             preferred_element_type=F32)           # (k, p) = Ez Y^T
        lam_new = jnp.dot(inv_spd(ezz_sum), zy,
                          preferred_element_type=F32)              # (k, p)
        psi_new = (yy_row - jnp.sum(lam_new * zy, axis=0,
                                    keepdims=True)) * inv_nf       # (1, p)

        # ---- NLL with NEW params (Ghahramani & Hinton '96, App. A) ---------
        psin_inv = _recip(jnp.maximum(psi_new, PSI_EPS))           # (1, p)
        lpn = lam_new * psin_inv                                   # (k, p)
        w = lax.dot_general(lpn, lam_new, (((1,), (1,)), ((), ())),
                            preferred_element_type=F32)            # (k, k)
        mn_inv = inv_spd(eye_k + w)
        ezn = jnp.dot(mn_inv, jnp.dot(lpn, y, preferred_element_type=F32),
                      preferred_element_type=F32)                  # (k, n)
        zyn = lax.dot_general(ezn, y, (((1,), (1,)), ((), ())),
                              preferred_element_type=F32)          # (k, p)
        # A - B term without any (p, n) temporaries.
        ab = 0.5 * jnp.sum(psin_inv * yy_row) - jnp.sum(lpn * zyn)
        # C = 0.5 * tr(W @ sum_i Ezz_i), sum_i Ezz_i = n * mn_inv + Ezn Ezn^T.
        wez = jnp.dot(w, ezn, preferred_element_type=F32)          # (k, n)
        c_term = 0.5 * (nf * jnp.sum(w * mn_inv) + jnp.sum(wez * ezn))
        logdet = 0.5 * nf * jnp.sum(jnp.log(jnp.maximum(psi_new, PSI_EPS)))
        nll = ab + c_term + logdet

        nlls = jnp.where(it_lane == it, nll, nlls)
        return lam_new, psi_new, nlls

    lam, psi, nlls = lax.fori_loop(
        0, n_iters, em_iter,
        (lam0_ref[...], psi0_ref[...], jnp.zeros((1, n_iters), dtype=F32)))

    out_ref[0:k, :] = lam
    out_ref[k:k + 1, :] = psi
    nll_ref[...] = nlls


# ---------------------------------------------------------------------------
# Driver (mirrors PCCASimple.forward): one jit, one pallas_call
# ---------------------------------------------------------------------------
@functools.partial(jax.jit, static_argnames=("n_iters",))
def pcca_forward(y, lam1, lam2, psi1, psi2, n_iters):
    assert n_iters >= 1
    p1, k = lam1.shape
    p2 = lam2.shape[0]
    p = p1 + p2
    # Lane-dense parameter layouts: Lambda as (k, p), Psi as (1, p).
    lam0 = jnp.concatenate([lam1, lam2], axis=0).astype(F32).T     # (k, p)
    psi0 = jnp.concatenate([psi1, psi2]).astype(F32).reshape(1, p)  # (1, p)
    y = y.astype(F32)

    packed, nlls = pl.pallas_call(
        _pcca_fit_kernel,
        out_shape=(jax.ShapeDtypeStruct((k + 1, p), F32),
                   jax.ShapeDtypeStruct((1, n_iters), F32)),
        in_specs=[_VMEM, _VMEM, _VMEM],
        out_specs=(_VMEM, _VMEM),
    )(y, lam0, psi0)

    lam = packed[:k, :].T                                          # (p, k)
    psi = packed[k, :]                                             # (p,)
    return lam[:p1], lam[p1:], psi[:p1], psi[p1:], nlls[0]


# ---------------------------------------------------------------------------
# Pure-JAX reference (mirrors the torch per-sample loops via vmap)
# ---------------------------------------------------------------------------
def _ref_em_step(y, lam, psi):
    p, n = y.shape
    k = lam.shape[1]
    beta = lam.T @ jnp.linalg.inv(jnp.diag(psi) + lam @ lam.T)

    def ez_fn(yi):
        return beta @ yi

    def ezz_fn(yi):
        by = beta @ yi
        return jnp.eye(k) - beta @ lam + jnp.outer(by, by)

    ezs = jax.vmap(ez_fn, in_axes=1)(y)          # (n, k)
    ezzs = jax.vmap(ezz_fn, in_axes=1)(y)        # (n, k, k)
    lam_new = (y @ ezs) @ jnp.linalg.inv(ezzs.sum(0))
    psi_new = (jnp.sum(y * y, axis=1)
               - jnp.sum((lam_new @ ezs.T) * y, axis=1)) / n
    return lam_new, psi_new


def _ref_nll(y, lam, psi):
    p, n = y.shape
    k = lam.shape[1]
    beta = lam.T @ jnp.linalg.inv(jnp.diag(psi) + lam @ lam.T)
    psi_inv = jnp.diag(1.0 / psi)

    def term(yi):
        ez = beta @ yi
        ezz = jnp.eye(k) - beta @ lam + jnp.outer(ez, ez)
        a = 0.5 * yi @ psi_inv @ yi
        b = yi @ psi_inv @ lam @ ez
        c = 0.5 * jnp.trace(lam.T @ psi_inv @ lam @ ezz)
        return a - b + c

    rsum = jax.vmap(term, in_axes=1)(y).sum()
    logdet = -n / 2.0 * jnp.sum(jnp.log(psi))
    return -(logdet - rsum)


def _ref_forward(y, lam1, lam2, psi1, psi2, n_iters):
    p1, k = lam1.shape
    lam = jnp.concatenate([lam1, lam2], axis=0)
    psi = jnp.concatenate([psi1, psi2])
    nlls = []
    for _ in range(n_iters):
        lam, psi = _ref_em_step(y, lam, psi)
        nlls.append(_ref_nll(y, lam, psi))
    return lam[:p1, :k], lam[p1:, :k], psi[:p1], psi[p1:], nlls


# ---------------------------------------------------------------------------
if __name__ == "__main__":
    latent_dim = 4
    p1, p2 = 8, 8
    n_iters = 3
    n = 32

    key = jax.random.PRNGKey(0)
    k1, k2, k3 = jax.random.split(key, 3)
    lambda1 = jax.random.normal(k1, (p1, latent_dim), dtype=F32)
    lambda2 = jax.random.normal(k2, (p2, latent_dim), dtype=F32)
    psi1 = jnp.ones((p1,), dtype=F32)
    psi2 = jnp.ones((p2,), dtype=F32)
    y = jax.random.normal(k3, (p1 + p2, n), dtype=F32)   # (p, n) = (dims, samples)

    out = pcca_forward(y, lambda1, lambda2, psi1, psi2, n_iters=n_iters)
    out = jax.block_until_ready(out)
    l1_new, l2_new, p1_new, p2_new, nlls = out

    # correctness check against the pure-JAX (torch-mirroring) reference
    with jax.default_matmul_precision("highest"):
        ref = _ref_forward(y, lambda1, lambda2, psi1, psi2, n_iters)
    rl1, rl2, rp1, rp2, rnlls = jax.block_until_ready(ref)

    np.testing.assert_allclose(np.asarray(l1_new), np.asarray(rl1),
                               rtol=5e-3, atol=5e-3)
    np.testing.assert_allclose(np.asarray(l2_new), np.asarray(rl2),
                               rtol=5e-3, atol=5e-3)
    np.testing.assert_allclose(np.asarray(p1_new), np.asarray(rp1),
                               rtol=5e-3, atol=5e-3)
    np.testing.assert_allclose(np.asarray(p2_new), np.asarray(rp2),
                               rtol=5e-3, atol=5e-3)
    np.testing.assert_allclose(np.asarray(nlls), np.asarray(jnp.stack(rnlls)),
                               rtol=5e-3, atol=5e-3)

    print("KERNEL_OK")
</pallas_src>

<mosaic_0001>
module attributes {stable_mosaic.version = 11 : i64} {
  func.func @_pcca_fit_kernel(%arg0: memref<16x32xf32, #tpu.memory_space<vmem>>, %arg1: memref<4x16xf32, #tpu.memory_space<vmem>>, %arg2: memref<1x16xf32, #tpu.memory_space<vmem>>, %arg3: memref<5x16xf32, #tpu.memory_space<vmem>>, %arg4: memref<1x3xf32, #tpu.memory_space<vmem>>) attributes {dimension_semantics = [], scalar_prefetch = 0 : i64, scratch_operands = 0 : i64, tpu.core_type = #tpu.core_type<tc>} {
    %c0 = arith.constant 0 : index
    %c0_0 = arith.constant 0 : index
    %0 = vector.load %arg0[%c0, %c0_0] : memref<16x32xf32, #tpu.memory_space<vmem>>, vector<16x32xf32>
    %1 = tpu.iota {dimensions = array<i32: 1>} : vector<1x4xi32>
    %c0_i32 = arith.constant 0 : i32
    %2 = vector.broadcast %c0_i32 : i32 to vector<1x4xi32>
    %3 = arith.cmpi eq, %1, %2 : vector<1x4xi32>
    %4 = arith.extui %3 : vector<1x4xi1> to vector<1x4xi32>
    %5 = arith.sitofp %4 : vector<1x4xi32> to vector<1x4xf32>
    %6 = tpu.iota {dimensions = array<i32: 1>} : vector<1x4xi32>
    %c1_i32 = arith.constant 1 : i32
    %7 = vector.broadcast %c1_i32 : i32 to vector<1x4xi32>
    %8 = arith.cmpi eq, %6, %7 : vector<1x4xi32>
    %9 = arith.extui %8 : vector<1x4xi1> to vector<1x4xi32>
    %10 = arith.sitofp %9 : vector<1x4xi32> to vector<1x4xf32>
    %11 = tpu.iota {dimensions = array<i32: 1>} : vector<1x4xi32>
    %c2_i32 = arith.constant 2 : i32
    %12 = vector.broadcast %c2_i32 : i32 to vector<1x4xi32>
    %13 = arith.cmpi eq, %11, %12 : vector<1x4xi32>
    %14 = arith.extui %13 : vector<1x4xi1> to vector<1x4xi32>
    %15 = arith.sitofp %14 : vector<1x4xi32> to vector<1x4xf32>
    %16 = tpu.iota {dimensions = array<i32: 1>} : vector<1x4xi32>
    %c3_i32 = arith.constant 3 : i32
    %17 = vector.broadcast %c3_i32 : i32 to vector<1x4xi32>
    %18 = arith.cmpi eq, %16, %17 : vector<1x4xi32>
    %19 = arith.extui %18 : vector<1x4xi1> to vector<1x4xi32>
    %20 = arith.sitofp %19 : vector<1x4xi32> to vector<1x4xf32>
    %21 = tpu.iota {dimensions = array<i32: 0>} : vector<4x1xi32>
    %c0_i32_1 = arith.constant 0 : i32
    %22 = vector.broadcast %c0_i32_1 : i32 to vector<4x1xi32>
    %23 = arith.cmpi eq, %21, %22 : vector<4x1xi32>
    %24 = arith.extui %23 : vector<4x1xi1> to vector<4x1xi32>
    %25 = arith.sitofp %24 : vector<4x1xi32> to vector<4x1xf32>
    %26 = tpu.iota {dimensions = array<i32: 0>} : vector<4x1xi32>
    %c1_i32_2 = arith.constant 1 : i32
    %27 = vector.broadcast %c1_i32_2 : i32 to vector<4x1xi32>
    %28 = arith.cmpi eq, %26, %27 : vector<4x1xi32>
    %29 = arith.extui %28 : vector<4x1xi1> to vector<4x1xi32>
    %30 = arith.sitofp %29 : vector<4x1xi32> to vector<4x1xf32>
    %31 = tpu.iota {dimensions = array<i32: 0>} : vector<4x1xi32>
    %c2_i32_3 = arith.constant 2 : i32
    %32 = vector.broadcast %c2_i32_3 : i32 to vector<4x1xi32>
    %33 = arith.cmpi eq, %31, %32 : vector<4x1xi32>
    %34 = arith.extui %33 : vector<4x1xi1> to vector<4x1xi32>
    %35 = arith.sitofp %34 : vector<4x1xi32> to vector<4x1xf32>
    %36 = tpu.iota {dimensions = array<i32: 0>} : vector<4x1xi32>
    %c3_i32_4 = arith.constant 3 : i32
    %37 = vector.broadcast %c3_i32_4 : i32 to vector<4x1xi32>
    %38 = arith.cmpi eq, %36, %37 : vector<4x1xi32>
    %39 = arith.extui %38 : vector<4x1xi1> to vector<4x1xi32>
    %40 = arith.sitofp %39 : vector<4x1xi32> to vector<4x1xf32>
    %41 = tpu.iota {dimensions = array<i32: 0>} : vector<4x4xi32>
    %42 = tpu.iota {dimensions = array<i32: 1>} : vector<4x4xi32>
    %43 = arith.cmpi eq, %41, %42 : vector<4x4xi32>
    %44 = arith.extui %43 : vector<4x4xi1> to vector<4x4xi32>
    %45 = arith.sitofp %44 : vector<4x4xi32> to vector<4x4xf32>
    %46 = tpu.iota {dimensions = array<i32: 1>} : vector<1x3xi32>
    %cst = arith.constant 1.000000e+00 : f32
    %47 = vector.broadcast %cst : f32 to vector<1x32xf32>
    %48 = arith.mulf %0, %0 : vector<16x32xf32>
    %cst_5 = arith.constant dense<0.000000e+00> : vector<1x16xf32>
    %49 = tpu.matmul %47, %48, %cst_5 {dimension_numbers = #tpu.dot_dimension_numbers<[1], [1], [0], [0], [0, 0, 1, 0], [], []>} : vector<1x32xf32>, vector<16x32xf32>, vector<1x16xf32> -> vector<1x16xf32>
    %c0_6 = arith.constant 0 : index
    %c0_7 = arith.constant 0 : index
    %50 = vector.load %arg1[%c0_6, %c0_7] : memref<4x16xf32, #tpu.memory_space<vmem>>, vector<4x16xf32>
    %c0_8 = arith.constant 0 : index
    %c0_9 = arith.constant 0 : index
    %51 = vector.load %arg2[%c0_8, %c0_9] : memref<1x16xf32, #tpu.memory_space<vmem>>, vector<1x16xf32>
    %cst_10 = arith.constant 0.000000e+00 : f32
    %52 = vector.broadcast %cst_10 : f32 to vector<1x3xf32>
    %c0_i32_11 = arith.constant 0 : i32
    %c3_i32_12 = arith.constant 3 : i32
    %53 = arith.addi %c0_i32_11, %c3_i32_12 : i32
    %c1_i32_13 = arith.constant 1 : i32
    %54:3 = scf.for %arg5 = %c0_i32_11 to %53 step %c1_i32_13 iter_args(%arg6 = %50, %arg7 = %51, %arg8 = %52) -> (vector<4x16xf32>, vector<1x16xf32>, vector<1x3xf32>)  : i32 {
      %cst_20 = arith.constant 9.99999997E-7 : f32
      %58 = vector.broadcast %cst_20 : f32 to vector<1x16xf32>
      %59 = arith.maximumf %arg7, %58 : vector<1x16xf32>
      %60 = tpu.reciprocal %59 {approx = true} : vector<1x16xf32> -> vector<1x16xf32>
      %61 = arith.mulf %59, %60 : vector<1x16xf32>
      %cst_21 = arith.constant 2.000000e+00 : f32
      %62 = vector.broadcast %cst_21 : f32 to vector<1x16xf32>
      %63 = arith.subf %62, %61 : vector<1x16xf32>
      %64 = arith.mulf %60, %63 : vector<1x16xf32>
      %65 = vector.broadcast %64 : vector<1x16xf32> to vector<4x16xf32>
      %66 = arith.mulf %arg6, %65 : vector<4x16xf32>
      %cst_22 = arith.constant dense<0.000000e+00> : vector<4x4xf32>
      %67 = tpu.matmul %66, %arg6, %cst_22 {dimension_numbers = #tpu.dot_dimension_numbers<[1], [1], [0], [0], [0, 0, 1, 0], [], []>} : vector<4x16xf32>, vector<4x16xf32>, vector<4x4xf32> -> vector<4x4xf32>
      %68 = arith.addf %45, %67 : vector<4x4xf32>
      %69 = vector.extract_strided_slice %68 {offsets = [0, 0], sizes = [1, 1], strides = [1, 1]} : vector<4x4xf32> to vector<1x1xf32>
      %70 = vector.extract_strided_slice %68 {offsets = [0, 1], sizes = [1, 1], strides = [1, 1]} : vector<4x4xf32> to vector<1x1xf32>
      %71 = vector.extract_strided_slice %68 {offsets = [0, 2], sizes = [1, 1], strides = [1, 1]} : vector<4x4xf32> to vector<1x1xf32>
      %72 = vector.extract_strided_slice %68 {offsets = [0, 3], sizes = [1, 1], strides = [1, 1]} : vector<4x4xf32> to vector<1x1xf32>
      %73 = vector.extract_strided_slice %68 {offsets = [1, 0], sizes = [1, 1], strides = [1, 1]} : vector<4x4xf32> to vector<1x1xf32>
      %74 = vector.extract_strided_slice %68 {offsets = [1, 1], sizes = [1, 1], strides = [1, 1]} : vector<4x4xf32> to vector<1x1xf32>
      %75 = vector.extract_strided_slice %68 {offsets = [1, 2], sizes = [1, 1], strides = [1, 1]} : vector<4x4xf32> to vector<1x1xf32>
      %76 = vector.extract_strided_slice %68 {offsets = [1, 3], sizes = [1, 1], strides = [1, 1]} : vector<4x4xf32> to vector<1x1xf32>
      %77 = vector.extract_strided_slice %68 {offsets = [2, 0], sizes = [1, 1], strides = [1, 1]} : vector<4x4xf32> to vector<1x1xf32>
      %78 = vector.extract_strided_slice %68 {offsets = [2, 1], sizes = [1, 1], strides = [1, 1]} : vector<4x4xf32> to vector<1x1xf32>
      %79 = vector.extract_strided_slice %68 {offsets = [2, 2], sizes = [1, 1], strides = [1, 1]} : vector<4x4xf32> to vector<1x1xf32>
      %80 = vector.extract_strided_slice %68 {offsets = [2, 3], sizes = [1, 1], strides = [1, 1]} : vector<4x4xf32> to vector<1x1xf32>
      %81 = vector.extract_strided_slice %68 {offsets = [3, 0], sizes = [1, 1], strides = [1, 1]} : vector<4x4xf32> to vector<1x1xf32>
      %82 = vector.extract_strided_slice %68 {offsets = [3, 1], sizes = [1, 1], strides = [1, 1]} : vector<4x4xf32> to vector<1x1xf32>
      %83 = vector.extract_strided_slice %68 {offsets = [3, 2], sizes = [1, 1], strides = [1, 1]} : vector<4x4xf32> to vector<1x1xf32>
      %84 = vector.extract_strided_slice %68 {offsets = [3, 3], sizes = [1, 1], strides = [1, 1]} : vector<4x4xf32> to vector<1x1xf32>
      %85 = arith.mulf %79, %84 : vector<1x1xf32>
      %86 = arith.mulf %80, %83 : vector<1x1xf32>
      %87 = arith.subf %85, %86 : vector<1x1xf32>
      %88 = arith.mulf %74, %87 : vector<1x1xf32>
      %89 = arith.mulf %78, %84 : vector<1x1xf32>
      %90 = arith.mulf %80, %82 : vector<1x1xf32>
      %91 = arith.subf %89, %90 : vector<1x1xf32>
      %92 = arith.mulf %75, %91 : vector<1x1xf32>
      %cst_23 = arith.constant 0.000000e+00 : f32
      %93 = vector.broadcast %cst_23 : f32 to vector<1x1xf32>
      %94 = arith.subf %93, %92 : vector<1x1xf32>
      %95 = arith.addf %88, %94 : vector<1x1xf32>
      %96 = arith.mulf %78, %83 : vector<1x1xf32>
      %97 = arith.mulf %79, %82 : vector<1x1xf32>
      %98 = arith.subf %96, %97 : vector<1x1xf32>
      %99 = arith.mulf %76, %98 : vector<1x1xf32>
      %100 = arith.addf %95, %99 : vector<1x1xf32>
      %101 = arith.mulf %73, %87 : vector<1x1xf32>
      %102 = arith.mulf %77, %84 : vector<1x1xf32>
      %103 = arith.mulf %80, %81 : vector<1x1xf32>
      %104 = arith.subf %102, %103 : vector<1x1xf32>
      %105 = arith.mulf %75, %104 : vector<1x1xf32>
      %cst_24 = arith.constant 0.000000e+00 : f32
      %106 = vector.broadcast %cst_24 : f32 to vector<1x1xf32>
      %107 = arith.subf %106, %105 : vector<1x1xf32>
      %108 = arith.addf %101, %107 : vector<1x1xf32>
      %109 = arith.mulf %77, %83 : vector<1x1xf32>
      %110 = arith.mulf %79, %81 : vector<1x1xf32>
      %111 = arith.subf %109, %110 : vector<1x1xf32>
      %112 = arith.mulf %76, %111 : vector<1x1xf32>
      %113 = arith.addf %108, %112 : vector<1x1xf32>
      %cst_25 = arith.constant 0.000000e+00 : f32
      %114 = vector.broadcast %cst_25 : f32 to vector<1x1xf32>
      %115 = arith.subf %114, %113 : vector<1x1xf32>
      %116 = arith.mulf %73, %91 : vector<1x1xf32>
      %117 = arith.mulf %74, %104 : vector<1x1xf32>
      %cst_26 = arith.constant 0.000000e+00 : f32
      %118 = vector.broadcast %cst_26 : f32 to vector<1x1xf32>
      %119 = arith.subf %118, %117 : vector<1x1xf32>
      %120 = arith.addf %116, %119 : vector<1x1xf32>
      %121 = arith.mulf %77, %82 : vector<1x1xf32>
      %122 = arith.mulf %78, %81 : vector<1x1xf32>
      %123 = arith.subf %121, %122 : vector<1x1xf32>
      %124 = arith.mulf %76, %123 : vector<1x1xf32>
      %125 = arith.addf %120, %124 : vector<1x1xf32>
      %126 = arith.mulf %73, %98 : vector<1x1xf32>
      %127 = arith.mulf %74, %111 : vector<1x1xf32>
      %cst_27 = arith.constant 0.000000e+00 : f32
      %128 = vector.broadcast %cst_27 : f32 to vector<1x1xf32>
      %129 = arith.subf %128, %127 : vector<1x1xf32>
      %130 = arith.addf %126, %129 : vector<1x1xf32>
      %131 = arith.mulf %75, %123 : vector<1x1xf32>
      %132 = arith.addf %130, %131 : vector<1x1xf32>
      %cst_28 = arith.constant 0.000000e+00 : f32
      %133 = vector.broadcast %cst_28 : f32 to vector<1x1xf32>
      %134 = arith.subf %133, %132 : vector<1x1xf32>
      %135 = arith.mulf %70, %87 : vector<1x1xf32>
      %136 = arith.mulf %71, %91 : vector<1x1xf32>
      %cst_29 = arith.constant 0.000000e+00 : f32
      %137 = vector.broadcast %cst_29 : f32 to vector<1x1xf32>
      %138 = arith.subf %137, %136 : vector<1x1xf32>
      %139 = arith.addf %135, %138 : vector<1x1xf32>
      %140 = arith.mulf %72, %98 : vector<1x1xf32>
      %141 = arith.addf %139, %140 : vector<1x1xf32>
      %cst_30 = arith.constant 0.000000e+00 : f32
      %142 = vector.broadcast %cst_30 : f32 to vector<1x1xf32>
      %143 = arith.subf %142, %141 : vector<1x1xf32>
      %144 = arith.mulf %69, %87 : vector<1x1xf32>
      %145 = arith.mulf %71, %104 : vector<1x1xf32>
      %cst_31 = arith.constant 0.000000e+00 : f32
      %146 = vector.broadcast %cst_31 : f32 to vector<1x1xf32>
      %147 = arith.subf %146, %145 : vector<1x1xf32>
      %148 = arith.addf %144, %147 : vector<1x1xf32>
      %149 = arith.mulf %72, %111 : vector<1x1xf32>
      %150 = arith.addf %148, %149 : vector<1x1xf32>
      %151 = arith.mulf %69, %91 : vector<1x1xf32>
      %152 = arith.mulf %70, %104 : vector<1x1xf32>
      %cst_32 = arith.constant 0.000000e+00 : f32
      %153 = vector.broadcast %cst_32 : f32 to vector<1x1xf32>
      %154 = arith.subf %153, %152 : vector<1x1xf32>
      %155 = arith.addf %151, %154 : vector<1x1xf32>
      %156 = arith.mulf %72, %123 : vector<1x1xf32>
      %157 = arith.addf %155, %156 : vector<1x1xf32>
      %cst_33 = arith.constant 0.000000e+00 : f32
      %158 = vector.broadcast %cst_33 : f32 to vector<1x1xf32>
      %159 = arith.subf %158, %157 : vector<1x1xf32>
      %160 = arith.mulf %69, %98 : vector<1x1xf32>
      %161 = arith.mulf %70, %111 : vector<1x1xf32>
      %cst_34 = arith.constant 0.000000e+00 : f32
      %162 = vector.broadcast %cst_34 : f32 to vector<1x1xf32>
      %163 = arith.subf %162, %161 : vector<1x1xf32>
      %164 = arith.addf %160, %163 : vector<1x1xf32>
      %165 = arith.mulf %71, %123 : vector<1x1xf32>
      %166 = arith.addf %164, %165 : vector<1x1xf32>
      %167 = arith.mulf %75, %84 : vector<1x1xf32>
      %168 = arith.mulf %76, %83 : vector<1x1xf32>
      %169 = arith.subf %167, %168 : vector<1x1xf32>
      %170 = arith.mulf %70, %169 : vector<1x1xf32>
      %171 = arith.mulf %74, %84 : vector<1x1xf32>
      %172 = arith.mulf %76, %82 : vector<1x1xf32>
      %173 = arith.subf %171, %172 : vector<1x1xf32>
      %174 = arith.mulf %71, %173 : vector<1x1xf32>
      %cst_35 = arith.constant 0.000000e+00 : f32
      %175 = vector.broadcast %cst_35 : f32 to vector<1x1xf32>
      %176 = arith.subf %175, %174 : vector<1x1xf32>
      %177 = arith.addf %170, %176 : vector<1x1xf32>
      %178 = arith.mulf %74, %83 : vector<1x1xf32>
      %179 = arith.mulf %75, %82 : vector<1x1xf32>
      %180 = arith.subf %178, %179 : vector<1x1xf32>
      %181 = arith.mulf %72, %180 : vector<1x1xf32>
      %182 = arith.addf %177, %181 : vector<1x1xf32>
      %183 = arith.mulf %69, %169 : vector<1x1xf32>
      %184 = arith.mulf %73, %84 : vector<1x1xf32>
      %185 = arith.mulf %76, %81 : vector<1x1xf32>
      %186 = arith.subf %184, %185 : vector<1x1xf32>
      %187 = arith.mulf %71, %186 : vector<1x1xf32>
      %cst_36 = arith.constant 0.000000e+00 : f32
      %188 = vector.broadcast %cst_36 : f32 to vector<1x1xf32>
      %189 = arith.subf %188, %187 : vector<1x1xf32>
      %190 = arith.addf %183, %189 : vector<1x1xf32>
      %191 = arith.mulf %73, %83 : vector<1x1xf32>
      %192 = arith.mulf %75, %81 : vector<1x1xf32>
      %193 = arith.subf %191, %192 : vector<1x1xf32>
      %194 = arith.mulf %72, %193 : vector<1x1xf32>
      %195 = arith.addf %190, %194 : vector<1x1xf32>
      %cst_37 = arith.constant 0.000000e+00 : f32
      %196 = vector.broadcast %cst_37 : f32 to vector<1x1xf32>
      %197 = arith.subf %196, %195 : vector<1x1xf32>
      %198 = arith.mulf %69, %173 : vector<1x1xf32>
      %199 = arith.mulf %70, %186 : vector<1x1xf32>
      %cst_38 = arith.constant 0.000000e+00 : f32
      %200 = vector.broadcast %cst_38 : f32 to vector<1x1xf32>
      %201 = arith.subf %200, %199 : vector<1x1xf32>
      %202 = arith.addf %198, %201 : vector<1x1xf32>
      %203 = arith.mulf %73, %82 : vector<1x1xf32>
      %204 = arith.mulf %74, %81 : vector<1x1xf32>
      %205 = arith.subf %203, %204 : vector<1x1xf32>
      %206 = arith.mulf %72, %205 : vector<1x1xf32>
      %207 = arith.addf %202, %206 : vector<1x1xf32>
      %208 = arith.mulf %69, %180 : vector<1x1xf32>
      %209 = arith.mulf %70, %193 : vector<1x1xf32>
      %cst_39 = arith.constant 0.000000e+00 : f32
      %210 = vector.broadcast %cst_39 : f32 to vector<1x1xf32>
      %211 = arith.subf %210, %209 : vector<1x1xf32>
      %212 = arith.addf %208, %211 : vector<1x1xf32>
      %213 = arith.mulf %71, %205 : vector<1x1xf32>
      %214 = arith.addf %212, %213 : vector<1x1xf32>
      %cst_40 = arith.constant 0.000000e+00 : f32
      %215 = vector.broadcast %cst_40 : f32 to vector<1x1xf32>
      %216 = arith.subf %215, %214 : vector<1x1xf32>
      %217 = arith.mulf %75, %80 : vector<1x1xf32>
      %218 = arith.mulf %76, %79 : vector<1x1xf32>
      %219 = arith.subf %217, %218 : vector<1x1xf32>
      %220 = arith.mulf %70, %219 : vector<1x1xf32>
      %221 = arith.mulf %74, %80 : vector<1x1xf32>
      %222 = arith.mulf %76, %78 : vector<1x1xf32>
      %223 = arith.subf %221, %222 : vector<1x1xf32>
      %224 = arith.mulf %71, %223 : vector<1x1xf32>
      %cst_41 = arith.constant 0.000000e+00 : f32
      %225 = vector.broadcast %cst_41 : f32 to vector<1x1xf32>
      %226 = arith.subf %225, %224 : vector<1x1xf32>
      %227 = arith.addf %220, %226 : vector<1x1xf32>
      %228 = arith.mulf %74, %79 : vector<1x1xf32>
      %229 = arith.mulf %75, %78 : vector<1x1xf32>
      %230 = arith.subf %228, %229 : vector<1x1xf32>
      %231 = arith.mulf %72, %230 : vector<1x1xf32>
      %232 = arith.addf %227, %231 : vector<1x1xf32>
      %cst_42 = arith.constant 0.000000e+00 : f32
      %233 = vector.broadcast %cst_42 : f32 to vector<1x1xf32>
      %234 = arith.subf %233, %232 : vector<1x1xf32>
      %235 = arith.mulf %69, %219 : vector<1x1xf32>
      %236 = arith.mulf %73, %80 : vector<1x1xf32>
      %237 = arith.mulf %76, %77 : vector<1x1xf32>
      %238 = arith.subf %236, %237 : vector<1x1xf32>
      %239 = arith.mulf %71, %238 : vector<1x1xf32>
      %cst_43 = arith.constant 0.000000e+00 : f32
      %240 = vector.broadcast %cst_43 : f32 to vector<1x1xf32>
      %241 = arith.subf %240, %239 : vector<1x1xf32>
      %242 = arith.addf %235, %241 : vector<1x1xf32>
      %243 = arith.mulf %73, %79 : vector<1x1xf32>
      %244 = arith.mulf %75, %77 : vector<1x1xf32>
      %245 = arith.subf %243, %244 : vector<1x1xf32>
      %246 = arith.mulf %72, %245 : vector<1x1xf32>
      %247 = arith.addf %242, %246 : vector<1x1xf32>
      %248 = arith.mulf %69, %223 : vector<1x1xf32>
      %249 = arith.mulf %70, %238 : vector<1x1xf32>
      %cst_44 = arith.constant 0.000000e+00 : f32
      %250 = vector.broadcast %cst_44 : f32 to vector<1x1xf32>
      %251 = arith.subf %250, %249 : vector<1x1xf32>
      %252 = arith.addf %248, %251 : vector<1x1xf32>
      %253 = arith.mulf %73, %78 : vector<1x1xf32>
      %254 = arith.mulf %74, %77 : vector<1x1xf32>
      %255 = arith.subf %253, %254 : vector<1x1xf32>
      %256 = arith.mulf %72, %255 : vector<1x1xf32>
      %257 = arith.addf %252, %256 : vector<1x1xf32>
      %cst_45 = arith.constant 0.000000e+00 : f32
      %258 = vector.broadcast %cst_45 : f32 to vector<1x1xf32>
      %259 = arith.subf %258, %257 : vector<1x1xf32>
      %260 = arith.mulf %69, %230 : vector<1x1xf32>
      %261 = arith.mulf %70, %245 : vector<1x1xf32>
      %cst_46 = arith.constant 0.000000e+00 : f32
      %262 = vector.broadcast %cst_46 : f32 to vector<1x1xf32>
      %263 = arith.subf %262, %261 : vector<1x1xf32>
      %264 = arith.addf %260, %263 : vector<1x1xf32>
      %265 = arith.mulf %71, %255 : vector<1x1xf32>
      %266 = arith.addf %264, %265 : vector<1x1xf32>
      %267 = arith.mulf %69, %100 : vector<1x1xf32>
      %268 = arith.mulf %70, %115 : vector<1x1xf32>
      %269 = arith.addf %267, %268 : vector<1x1xf32>
      %270 = arith.mulf %71, %125 : vector<1x1xf32>
      %271 = arith.addf %269, %270 : vector<1x1xf32>
      %272 = arith.mulf %72, %134 : vector<1x1xf32>
      %273 = arith.addf %271, %272 : vector<1x1xf32>
      %274 = tpu.reciprocal %273 {approx = true} : vector<1x1xf32> -> vector<1x1xf32>
      %275 = arith.mulf %273, %274 : vector<1x1xf32>
      %cst_47 = arith.constant 2.000000e+00 : f32
      %276 = vector.broadcast %cst_47 : f32 to vector<1x1xf32>
      %277 = arith.subf %276, %275 : vector<1x1xf32>
      %278 = arith.mulf %274, %277 : vector<1x1xf32>
      %279 = vector.broadcast %100 : vector<1x1xf32> to vector<1x4xf32>
      %280 = arith.mulf %279, %5 : vector<1x4xf32>
      %281 = vector.broadcast %143 : vector<1x1xf32> to vector<1x4xf32>
      %282 = arith.mulf %281, %10 : vector<1x4xf32>
      %283 = arith.addf %280, %282 : vector<1x4xf32>
      %284 = vector.broadcast %182 : vector<1x1xf32> to vector<1x4xf32>
      %285 = arith.mulf %284, %15 : vector<1x4xf32>
      %286 = arith.addf %283, %285 : vector<1x4xf32>
      %287 = vector.broadcast %234 : vector<1x1xf32> to vector<1x4xf32>
      %288 = arith.mulf %287, %20 : vector<1x4xf32>
      %289 = arith.addf %286, %288 : vector<1x4xf32>
      %290 = vector.broadcast %289 : vector<1x4xf32> to vector<4x4xf32>
      %291 = vector.broadcast %25 : vector<4x1xf32> to vector<4x4xf32>
      %292 = arith.mulf %290, %291 : vector<4x4xf32>
      %293 = vector.broadcast %115 : vector<1x1xf32> to vector<1x4xf32>
      %294 = arith.mulf %293, %5 : vector<1x4xf32>
      %295 = vector.broadcast %150 : vector<1x1xf32> to vector<1x4xf32>
      %296 = arith.mulf %295, %10 : vector<1x4xf32>
      %297 = arith.addf %294, %296 : vector<1x4xf32>
      %298 = vector.broadcast %197 : vector<1x1xf32> to vector<1x4xf32>
      %299 = arith.mulf %298, %15 : vector<1x4xf32>
      %300 = arith.addf %297, %299 : vector<1x4xf32>
      %301 = vector.broadcast %247 : vector<1x1xf32> to vector<1x4xf32>
      %302 = arith.mulf %301, %20 : vector<1x4xf32>
      %303 = arith.addf %300, %302 : vector<1x4xf32>
      %304 = vector.broadcast %303 : vector<1x4xf32> to vector<4x4xf32>
      %305 = vector.broadcast %30 : vector<4x1xf32> to vector<4x4xf32>
      %306 = arith.mulf %304, %305 : vector<4x4xf32>
      %307 = arith.addf %292, %306 : vector<4x4xf32>
      %308 = vector.broadcast %125 : vector<1x1xf32> to vector<1x4xf32>
      %309 = arith.mulf %308, %5 : vector<1x4xf32>
      %310 = vector.broadcast %159 : vector<1x1xf32> to vector<1x4xf32>
      %311 = arith.mulf %310, %10 : vector<1x4xf32>
      %312 = arith.addf %309, %311 : vector<1x4xf32>
      %313 = vector.broadcast %207 : vector<1x1xf32> to vector<1x4xf32>
      %314 = arith.mulf %313, %15 : vector<1x4xf32>
      %315 = arith.addf %312, %314 : vector<1x4xf32>
      %316 = vector.broadcast %259 : vector<1x1xf32> to vector<1x4xf32>
      %317 = arith.mulf %316, %20 : vector<1x4xf32>
      %318 = arith.addf %315, %317 : vector<1x4xf32>
      %319 = vector.broadcast %318 : vector<1x4xf32> to vector<4x4xf32>
      %320 = vector.broadcast %35 : vector<4x1xf32> to vector<4x4xf32>
      %321 = arith.mulf %319, %320 : vector<4x4xf32>
      %322 = arith.addf %307, %321 : vector<4x4xf32>
      %323 = vector.broadcast %134 : vector<1x1xf32> to vector<1x4xf32>
      %324 = arith.mulf %323, %5 : vector<1x4xf32>
      %325 = vector.broadcast %166 : vector<1x1xf32> to vector<1x4xf32>
      %326 = arith.mulf %325, %10 : vector<1x4xf32>
      %327 = arith.addf %324, %326 : vector<1x4xf32>
      %328 = vector.broadcast %216 : vector<1x1xf32> to vector<1x4xf32>
      %329 = arith.mulf %328, %15 : vector<1x4xf32>
      %330 = arith.addf %327, %329 : vector<1x4xf32>
      %331 = vector.broadcast %266 : vector<1x1xf32> to vector<1x4xf32>
      %332 = arith.mulf %331, %20 : vector<1x4xf32>
      %333 = arith.addf %330, %332 : vector<1x4xf32>
      %334 = vector.broadcast %333 : vector<1x4xf32> to vector<4x4xf32>
      %335 = vector.broadcast %40 : vector<4x1xf32> to vector<4x4xf32>
      %336 = arith.mulf %334, %335 : vector<4x4xf32>
      %337 = arith.addf %322, %336 : vector<4x4xf32>
      %338 = vector.broadcast %278 : vector<1x1xf32> to vector<4x4xf32>
      %339 = arith.mulf %337, %338 : vector<4x4xf32>
      %cst_48 = arith.constant dense<0.000000e+00> : vector<4x32xf32>
      %340 = tpu.matmul %66, %0, %cst_48 {dimension_numbers = #tpu.dot_dimension_numbers<[1], [0], [0], [1], [0, 0, 1, 1], [], []>} : vector<4x16xf32>, vector<16x32xf32>, vector<4x32xf32> -> vector<4x32xf32>
      %cst_49 = arith.constant dense<0.000000e+00> : vector<4x32xf32>
      %341 = tpu.matmul %339, %340, %cst_49 {dimension_numbers = #tpu.dot_dimension_numbers<[1], [0], [0], [1], [0, 0, 1, 1], [], []>} : vector<4x4xf32>, vector<4x32xf32>, vector<4x32xf32> -> vector<4x32xf32>
      %cst_50 = arith.constant 3.200000e+01 : f32
      %342 = vector.broadcast %cst_50 : f32 to vector<4x4xf32>
      %343 = arith.mulf %342, %339 : vector<4x4xf32>
      %cst_51 = arith.constant dense<0.000000e+00> : vector<4x4xf32>
      %344 = tpu.matmul %341, %341, %cst_51 {dimension_numbers = #tpu.dot_dimension_numbers<[1], [1], [0], [0], [0, 0, 1, 0], [], []>} : vector<4x32xf32>, vector<4x32xf32>, vector<4x4xf32> -> vector<4x4xf32>
      %345 = arith.addf %343, %344 : vector<4x4xf32>
      %cst_52 = arith.constant dense<0.000000e+00> : vector<4x16xf32>
      %346 = tpu.matmul %341, %0, %cst_52 {dimension_numbers = #tpu.dot_dimension_numbers<[1], [1], [0], [0], [0, 0, 1, 0], [], []>} : vector<4x32xf32>, vector<16x32xf32>, vector<4x16xf32> -> vector<4x16xf32>
      %347 = vector.extract_strided_slice %345 {offsets = [0, 0], sizes = [1, 1], strides = [1, 1]} : vector<4x4xf32> to vector<1x1xf32>
      %348 = vector.extract_strided_slice %345 {offsets = [0, 1], sizes = [1, 1], strides = [1, 1]} : vector<4x4xf32> to vector<1x1xf32>
      %349 = vector.extract_strided_slice %345 {offsets = [0, 2], sizes = [1, 1], strides = [1, 1]} : vector<4x4xf32> to vector<1x1xf32>
      %350 = vector.extract_strided_slice %345 {offsets = [0, 3], sizes = [1, 1], strides = [1, 1]} : vector<4x4xf32> to vector<1x1xf32>
      %351 = vector.extract_strided_slice %345 {offsets = [1, 0], sizes = [1, 1], strides = [1, 1]} : vector<4x4xf32> to vector<1x1xf32>
      %352 = vector.extract_strided_slice %345 {offsets = [1, 1], sizes = [1, 1], strides = [1, 1]} : vector<4x4xf32> to vector<1x1xf32>
      %353 = vector.extract_strided_slice %345 {offsets = [1, 2], sizes = [1, 1], strides = [1, 1]} : vector<4x4xf32> to vector<1x1xf32>
      %354 = vector.extract_strided_slice %345 {offsets = [1, 3], sizes = [1, 1], strides = [1, 1]} : vector<4x4xf32> to vector<1x1xf32>
      %355 = vector.extract_strided_slice %345 {offsets = [2, 0], sizes = [1, 1], strides = [1, 1]} : vector<4x4xf32> to vector<1x1xf32>
      %356 = vector.extract_strided_slice %345 {offsets = [2, 1], sizes = [1, 1], strides = [1, 1]} : vector<4x4xf32> to vector<1x1xf32>
      %357 = vector.extract_strided_slice %345 {offsets = [2, 2], sizes = [1, 1], strides = [1, 1]} : vector<4x4xf32> to vector<1x1xf32>
      %358 = vector.extract_strided_slice %345 {offsets = [2, 3], sizes = [1, 1], strides = [1, 1]} : vector<4x4xf32> to vector<1x1xf32>
      %359 = vector.extract_strided_slice %345 {offsets = [3, 0], sizes = [1, 1], strides = [1, 1]} : vector<4x4xf32> to vector<1x1xf32>
      %360 = vector.extract_strided_slice %345 {offsets = [3, 1], sizes = [1, 1], strides = [1, 1]} : vector<4x4xf32> to vector<1x1xf32>
      %361 = vector.extract_strided_slice %345 {offsets = [3, 2], sizes = [1, 1], strides = [1, 1]} : vector<4x4xf32> to vector<1x1xf32>
      %362 = vector.extract_strided_slice %345 {offsets = [3, 3], sizes = [1, 1], strides = [1, 1]} : vector<4x4xf32> to vector<1x1xf32>
      %363 = arith.mulf %357, %362 : vector<1x1xf32>
      %364 = arith.mulf %358, %361 : vector<1x1xf32>
      %365 = arith.subf %363, %364 : vector<1x1xf32>
      %366 = arith.mulf %352, %365 : vector<1x1xf32>
      %367 = arith.mulf %356, %362 : vector<1x1xf32>
      %368 = arith.mulf %358, %360 : vector<1x1xf32>
      %369 = arith.subf %367, %368 : vector<1x1xf32>
      %370 = arith.mulf %353, %369 : vector<1x1xf32>
      %cst_53 = arith.constant 0.000000e+00 : f32
      %371 = vector.broadcast %cst_53 : f32 to vector<1x1xf32>
      %372 = arith.subf %371, %370 : vector<1x1xf32>
      %373 = arith.addf %366, %372 : vector<1x1xf32>
      %374 = arith.mulf %356, %361 : vector<1x1xf32>
      %375 = arith.mulf %357, %360 : vector<1x1xf32>
      %376 = arith.subf %374, %375 : vector<1x1xf32>
      %377 = arith.mulf %354, %376 : vector<1x1xf32>
      %378 = arith.addf %373, %377 : vector<1x1xf32>
      %379 = arith.mulf %351, %365 : vector<1x1xf32>
      %380 = arith.mulf %355, %362 : vector<1x1xf32>
      %381 = arith.mulf %358, %359 : vector<1x1xf32>
      %382 = arith.subf %380, %381 : vector<1x1xf32>
      %383 = arith.mulf %353, %382 : vector<1x1xf32>
      %cst_54 = arith.constant 0.000000e+00 : f32
      %384 = vector.broadcast %cst_54 : f32 to vector<1x1xf32>
      %385 = arith.subf %384, %383 : vector<1x1xf32>
      %386 = arith.addf %379, %385 : vector<1x1xf32>
      %387 = arith.mulf %355, %361 : vector<1x1xf32>
      %388 = arith.mulf %357, %359 : vector<1x1xf32>
      %389 = arith.subf %387, %388 : vector<1x1xf32>
      %390 = arith.mulf %354, %389 : vector<1x1xf32>
      %391 = arith.addf %386, %390 : vector<1x1xf32>
      %cst_55 = arith.constant 0.000000e+00 : f32
      %392 = vector.broadcast %cst_55 : f32 to vector<1x1xf32>
      %393 = arith.subf %392, %391 : vector<1x1xf32>
      %394 = arith.mulf %351, %369 : vector<1x1xf32>
      %395 = arith.mulf %352, %382 : vector<1x1xf32>
      %cst_56 = arith.constant 0.000000e+00 : f32
      %396 = vector.broadcast %cst_56 : f32 to vector<1x1xf32>
      %397 = arith.subf %396, %395 : vector<1x1xf32>
      %398 = arith.addf %394, %397 : vector<1x1xf32>
      %399 = arith.mulf %355, %360 : vector<1x1xf32>
      %400 = arith.mulf %356, %359 : vector<1x1xf32>
      %401 = arith.subf %399, %400 : vector<1x1xf32>
      %402 = arith.mulf %354, %401 : vector<1x1xf32>
      %403 = arith.addf %398, %402 : vector<1x1xf32>
      %404 = arith.mulf %351, %376 : vector<1x1xf32>
      %405 = arith.mulf %352, %389 : vector<1x1xf32>
      %cst_57 = arith.constant 0.000000e+00 : f32
      %406 = vector.broadcast %cst_57 : f32 to vector<1x1xf32>
      %407 = arith.subf %406, %405 : vector<1x1xf32>
      %408 = arith.addf %404, %407 : vector<1x1xf32>
      %409 = arith.mulf %353, %401 : vector<1x1xf32>
      %410 = arith.addf %408, %409 : vector<1x1xf32>
      %cst_58 = arith.constant 0.000000e+00 : f32
      %411 = vector.broadcast %cst_58 : f32 to vector<1x1xf32>
      %412 = arith.subf %411, %410 : vector<1x1xf32>
      %413 = arith.mulf %348, %365 : vector<1x1xf32>
      %414 = arith.mulf %349, %369 : vector<1x1xf32>
      %cst_59 = arith.constant 0.000000e+00 : f32
      %415 = vector.broadcast %cst_59 : f32 to vector<1x1xf32>
      %416 = arith.subf %415, %414 : vector<1x1xf32>
      %417 = arith.addf %413, %416 : vector<1x1xf32>
      %418 = arith.mulf %350, %376 : vector<1x1xf32>
      %419 = arith.addf %417, %418 : vector<1x1xf32>
      %cst_60 = arith.constant 0.000000e+00 : f32
      %420 = vector.broadcast %cst_60 : f32 to vector<1x1xf32>
      %421 = arith.subf %420, %419 : vector<1x1xf32>
      %422 = arith.mulf %347, %365 : vector<1x1xf32>
      %423 = arith.mulf %349, %382 : vector<1x1xf32>
      %cst_61 = arith.constant 0.000000e+00 : f32
      %424 = vector.broadcast %cst_61 : f32 to vector<1x1xf32>
      %425 = arith.subf %424, %423 : vector<1x1xf32>
      %426 = arith.addf %422, %425 : vector<1x1xf32>
      %427 = arith.mulf %350, %389 : vector<1x1xf32>
      %428 = arith.addf %426, %427 : vector<1x1xf32>
      %429 = arith.mulf %347, %369 : vector<1x1xf32>
      %430 = arith.mulf %348, %382 : vector<1x1xf32>
      %cst_62 = arith.constant 0.000000e+00 : f32
      %431 = vector.broadcast %cst_62 : f32 to vector<1x1xf32>
      %432 = arith.subf %431, %430 : vector<1x1xf32>
      %433 = arith.addf %429, %432 : vector<1x1xf32>
      %434 = arith.mulf %350, %401 : vector<1x1xf32>
      %435 = arith.addf %433, %434 : vector<1x1xf32>
      %cst_63 = arith.constant 0.000000e+00 : f32
      %436 = vector.broadcast %cst_63 : f32 to vector<1x1xf32>
      %437 = arith.subf %436, %435 : vector<1x1xf32>
      %438 = arith.mulf %347, %376 : vector<1x1xf32>
      %439 = arith.mulf %348, %389 : vector<1x1xf32>
      %cst_64 = arith.constant 0.000000e+00 : f32
      %440 = vector.broadcast %cst_64 : f32 to vector<1x1xf32>
      %441 = arith.subf %440, %439 : vector<1x1xf32>
      %442 = arith.addf %438, %441 : vector<1x1xf32>
      %443 = arith.mulf %349, %401 : vector<1x1xf32>
      %444 = arith.addf %442, %443 : vector<1x1xf32>
      %445 = arith.mulf %353, %362 : vector<1x1xf32>
      %446 = arith.mulf %354, %361 : vector<1x1xf32>
      %447 = arith.subf %445, %446 : vector<1x1xf32>
      %448 = arith.mulf %348, %447 : vector<1x1xf32>
      %449 = arith.mulf %352, %362 : vector<1x1xf32>
      %450 = arith.mulf %354, %360 : vector<1x1xf32>
      %451 = arith.subf %449, %450 : vector<1x1xf32>
      %452 = arith.mulf %349, %451 : vector<1x1xf32>
      %cst_65 = arith.constant 0.000000e+00 : f32
      %453 = vector.broadcast %cst_65 : f32 to vector<1x1xf32>
      %454 = arith.subf %453, %452 : vector<1x1xf32>
      %455 = arith.addf %448, %454 : vector<1x1xf32>
      %456 = arith.mulf %352, %361 : vector<1x1xf32>
      %457 = arith.mulf %353, %360 : vector<1x1xf32>
      %458 = arith.subf %456, %457 : vector<1x1xf32>
      %459 = arith.mulf %350, %458 : vector<1x1xf32>
      %460 = arith.addf %455, %459 : vector<1x1xf32>
      %461 = arith.mulf %347, %447 : vector<1x1xf32>
      %462 = arith.mulf %351, %362 : vector<1x1xf32>
      %463 = arith.mulf %354, %359 : vector<1x1xf32>
      %464 = arith.subf %462, %463 : vector<1x1xf32>
      %465 = arith.mulf %349, %464 : vector<1x1xf32>
      %cst_66 = arith.constant 0.000000e+00 : f32
      %466 = vector.broadcast %cst_66 : f32 to vector<1x1xf32>
      %467 = arith.subf %466, %465 : vector<1x1xf32>
      %468 = arith.addf %461, %467 : vector<1x1xf32>
      %469 = arith.mulf %351, %361 : vector<1x1xf32>
      %470 = arith.mulf %353, %359 : vector<1x1xf32>
      %471 = arith.subf %469, %470 : vector<1x1xf32>
      %472 = arith.mulf %350, %471 : vector<1x1xf32>
      %473 = arith.addf %468, %472 : vector<1x1xf32>
      %cst_67 = arith.constant 0.000000e+00 : f32
      %474 = vector.broadcast %cst_67 : f32 to vector<1x1xf32>
      %475 = arith.subf %474, %473 : vector<1x1xf32>
      %476 = arith.mulf %347, %451 : vector<1x1xf32>
      %477 = arith.mulf %348, %464 : vector<1x1xf32>
      %cst_68 = arith.constant 0.000000e+00 : f32
      %478 = vector.broadcast %cst_68 : f32 to vector<1x1xf32>
      %479 = arith.subf %478, %477 : vector<1x1xf32>
      %480 = arith.addf %476, %479 : vector<1x1xf32>
      %481 = arith.mulf %351, %360 : vector<1x1xf32>
      %482 = arith.mulf %352, %359 : vector<1x1xf32>
      %483 = arith.subf %481, %482 : vector<1x1xf32>
      %484 = arith.mulf %350, %483 : vector<1x1xf32>
      %485 = arith.addf %480, %484 : vector<1x1xf32>
      %486 = arith.mulf %347, %458 : vector<1x1xf32>
      %487 = arith.mulf %348, %471 : vector<1x1xf32>
      %cst_69 = arith.constant 0.000000e+00 : f32
      %488 = vector.broadcast %cst_69 : f32 to vector<1x1xf32>
      %489 = arith.subf %488, %487 : vector<1x1xf32>
      %490 = arith.addf %486, %489 : vector<1x1xf32>
      %491 = arith.mulf %349, %483 : vector<1x1xf32>
      %492 = arith.addf %490, %491 : vector<1x1xf32>
      %cst_70 = arith.constant 0.000000e+00 : f32
      %493 = vector.broadcast %cst_70 : f32 to vector<1x1xf32>
      %494 = arith.subf %493, %492 : vector<1x1xf32>
      %495 = arith.mulf %353, %358 : vector<1x1xf32>
      %496 = arith.mulf %354, %357 : vector<1x1xf32>
      %497 = arith.subf %495, %496 : vector<1x1xf32>
      %498 = arith.mulf %348, %497 : vector<1x1xf32>
      %499 = arith.mulf %352, %358 : vector<1x1xf32>
      %500 = arith.mulf %354, %356 : vector<1x1xf32>
      %501 = arith.subf %499, %500 : vector<1x1xf32>
      %502 = arith.mulf %349, %501 : vector<1x1xf32>
      %cst_71 = arith.constant 0.000000e+00 : f32
      %503 = vector.broadcast %cst_71 : f32 to vector<1x1xf32>
      %504 = arith.subf %503, %502 : vector<1x1xf32>
      %505 = arith.addf %498, %504 : vector<1x1xf32>
      %506 = arith.mulf %352, %357 : vector<1x1xf32>
      %507 = arith.mulf %353, %356 : vector<1x1xf32>
      %508 = arith.subf %506, %507 : vector<1x1xf32>
      %509 = arith.mulf %350, %508 : vector<1x1xf32>
      %510 = arith.addf %505, %509 : vector<1x1xf32>
      %cst_72 = arith.constant 0.000000e+00 : f32
      %511 = vector.broadcast %cst_72 : f32 to vector<1x1xf32>
      %512 = arith.subf %511, %510 : vector<1x1xf32>
      %513 = arith.mulf %347, %497 : vector<1x1xf32>
      %514 = arith.mulf %351, %358 : vector<1x1xf32>
      %515 = arith.mulf %354, %355 : vector<1x1xf32>
      %516 = arith.subf %514, %515 : vector<1x1xf32>
      %517 = arith.mulf %349, %516 : vector<1x1xf32>
      %cst_73 = arith.constant 0.000000e+00 : f32
      %518 = vector.broadcast %cst_73 : f32 to vector<1x1xf32>
      %519 = arith.subf %518, %517 : vector<1x1xf32>
      %520 = arith.addf %513, %519 : vector<1x1xf32>
      %521 = arith.mulf %351, %357 : vector<1x1xf32>
      %522 = arith.mulf %353, %355 : vector<1x1xf32>
      %523 = arith.subf %521, %522 : vector<1x1xf32>
      %524 = arith.mulf %350, %523 : vector<1x1xf32>
      %525 = arith.addf %520, %524 : vector<1x1xf32>
      %526 = arith.mulf %347, %501 : vector<1x1xf32>
      %527 = arith.mulf %348, %516 : vector<1x1xf32>
      %cst_74 = arith.constant 0.000000e+00 : f32
      %528 = vector.broadcast %cst_74 : f32 to vector<1x1xf32>
      %529 = arith.subf %528, %527 : vector<1x1xf32>
      %530 = arith.addf %526, %529 : vector<1x1xf32>
      %531 = arith.mulf %351, %356 : vector<1x1xf32>
      %532 = arith.mulf %352, %355 : vector<1x1xf32>
      %533 = arith.subf %531, %532 : vector<1x1xf32>
      %534 = arith.mulf %350, %533 : vector<1x1xf32>
      %535 = arith.addf %530, %534 : vector<1x1xf32>
      %cst_75 = arith.constant 0.000000e+00 : f32
      %536 = vector.broadcast %cst_75 : f32 to vector<1x1xf32>
      %537 = arith.subf %536, %535 : vector<1x1xf32>
      %538 = arith.mulf %347, %508 : vector<1x1xf32>
      %539 = arith.mulf %348, %523 : vector<1x1xf32>
      %cst_76 = arith.constant 0.000000e+00 : f32
      %540 = vector.broadcast %cst_76 : f32 to vector<1x1xf32>
      %541 = arith.subf %540, %539 : vector<1x1xf32>
      %542 = arith.addf %538, %541 : vector<1x1xf32>
      %543 = arith.mulf %349, %533 : vector<1x1xf32>
      %544 = arith.addf %542, %543 : vector<1x1xf32>
      %545 = arith.mulf %347, %378 : vector<1x1xf32>
      %546 = arith.mulf %348, %393 : vector<1x1xf32>
      %547 = arith.addf %545, %546 : vector<1x1xf32>
      %548 = arith.mulf %349, %403 : vector<1x1xf32>
      %549 = arith.addf %547, %548 : vector<1x1xf32>
      %550 = arith.mulf %350, %412 : vector<1x1xf32>
      %551 = arith.addf %549, %550 : vector<1x1xf32>
      %552 = tpu.reciprocal %551 {approx = true} : vector<1x1xf32> -> vector<1x1xf32>
      %553 = arith.mulf %551, %552 : vector<1x1xf32>
      %cst_77 = arith.constant 2.000000e+00 : f32
      %554 = vector.broadcast %cst_77 : f32 to vector<1x1xf32>
      %555 = arith.subf %554, %553 : vector<1x1xf32>
      %556 = arith.mulf %552, %555 : vector<1x1xf32>
      %557 = vector.broadcast %378 : vector<1x1xf32> to vector<1x4xf32>
      %558 = arith.mulf %557, %5 : vector<1x4xf32>
      %559 = vector.broadcast %421 : vector<1x1xf32> to vector<1x4xf32>
      %560 = arith.mulf %559, %10 : vector<1x4xf32>
      %561 = arith.addf %558, %560 : vector<1x4xf32>
      %562 = vector.broadcast %460 : vector<1x1xf32> to vector<1x4xf32>
      %563 = arith.mulf %562, %15 : vector<1x4xf32>
      %564 = arith.addf %561, %563 : vector<1x4xf32>
      %565 = vector.broadcast %512 : vector<1x1xf32> to vector<1x4xf32>
      %566 = arith.mulf %565, %20 : vector<1x4xf32>
      %567 = arith.addf %564, %566 : vector<1x4xf32>
      %568 = vector.broadcast %567 : vector<1x4xf32> to vector<4x4xf32>
      %569 = vector.broadcast %25 : vector<4x1xf32> to vector<4x4xf32>
      %570 = arith.mulf %568, %569 : vector<4x4xf32>
      %571 = vector.broadcast %393 : vector<1x1xf32> to vector<1x4xf32>
      %572 = arith.mulf %571, %5 : vector<1x4xf32>
      %573 = vector.broadcast %428 : vector<1x1xf32> to vector<1x4xf32>
      %574 = arith.mulf %573, %10 : vector<1x4xf32>
      %575 = arith.addf %572, %574 : vector<1x4xf32>
      %576 = vector.broadcast %475 : vector<1x1xf32> to vector<1x4xf32>
      %577 = arith.mulf %576, %15 : vector<1x4xf32>
      %578 = arith.addf %575, %577 : vector<1x4xf32>
      %579 = vector.broadcast %525 : vector<1x1xf32> to vector<1x4xf32>
      %580 = arith.mulf %579, %20 : vector<1x4xf32>
      %581 = arith.addf %578, %580 : vector<1x4xf32>
      %582 = vector.broadcast %581 : vector<1x4xf32> to vector<4x4xf32>
      %583 = vector.broadcast %30 : vector<4x1xf32> to vector<4x4xf32>
      %584 = arith.mulf %582, %583 : vector<4x4xf32>
      %585 = arith.addf %570, %584 : vector<4x4xf32>
      %586 = vector.broadcast %403 : vector<1x1xf32> to vector<1x4xf32>
      %587 = arith.mulf %586, %5 : vector<1x4xf32>
      %588 = vector.broadcast %437 : vector<1x1xf32> to vector<1x4xf32>
      %589 = arith.mulf %588, %10 : vector<1x4xf32>
      %590 = arith.addf %587, %589 : vector<1x4xf32>
      %591 = vector.broadcast %485 : vector<1x1xf32> to vector<1x4xf32>
      %592 = arith.mulf %591, %15 : vector<1x4xf32>
      %593 = arith.addf %590, %592 : vector<1x4xf32>
      %594 = vector.broadcast %537 : vector<1x1xf32> to vector<1x4xf32>
      %595 = arith.mulf %594, %20 : vector<1x4xf32>
      %596 = arith.addf %593, %595 : vector<1x4xf32>
      %597 = vector.broadcast %596 : vector<1x4xf32> to vector<4x4xf32>
      %598 = vector.broadcast %35 : vector<4x1xf32> to vector<4x4xf32>
      %599 = arith.mulf %597, %598 : vector<4x4xf32>
      %600 = arith.addf %585, %599 : vector<4x4xf32>
      %601 = vector.broadcast %412 : vector<1x1xf32> to vector<1x4xf32>
      %602 = arith.mulf %601, %5 : vector<1x4xf32>
      %603 = vector.broadcast %444 : vector<1x1xf32> to vector<1x4xf32>
      %604 = arith.mulf %603, %10 : vector<1x4xf32>
      %605 = arith.addf %602, %604 : vector<1x4xf32>
      %606 = vector.broadcast %494 : vector<1x1xf32> to vector<1x4xf32>
      %607 = arith.mulf %606, %15 : vector<1x4xf32>
      %608 = arith.addf %605, %607 : vector<1x4xf32>
      %609 = vector.broadcast %544 : vector<1x1xf32> to vector<1x4xf32>
      %610 = arith.mulf %609, %20 : vector<1x4xf32>
      %611 = arith.addf %608, %610 : vector<1x4xf32>
      %612 = vector.broadcast %611 : vector<1x4xf32> to vector<4x4xf32>
      %613 = vector.broadcast %40 : vector<4x1xf32> to vector<4x4xf32>
      %614 = arith.mulf %612, %613 : vector<4x4xf32>
      %615 = arith.addf %600, %614 : vector<4x4xf32>
      %616 = vector.broadcast %556 : vector<1x1xf32> to vector<4x4xf32>
      %617 = arith.mulf %615, %616 : vector<4x4xf32>
      %cst_78 = arith.constant dense<0.000000e+00> : vector<4x16xf32>
      %618 = tpu.matmul %617, %346, %cst_78 {dimension_numbers = #tpu.dot_dimension_numbers<[1], [0], [0], [1], [0, 0, 1, 1], [], []>} : vector<4x4xf32>, vector<4x16xf32>, vector<4x16xf32> -> vector<4x16xf32>
      %619 = arith.mulf %618, %346 : vector<4x16xf32>
      %cst_79 = arith.constant dense<0.000000e+00> : vector<16xf32>
      %620 = vector.multi_reduction <add>, %619, %cst_79 [0] : vector<4x16xf32> to vector<16xf32>
      %621 = vector.shape_cast %620 : vector<16xf32> to vector<1x16xf32>
      %622 = arith.subf %49, %621 : vector<1x16xf32>
      %cst_80 = arith.constant 3.125000e-02 : f32
      %623 = vector.broadcast %cst_80 : f32 to vector<1x16xf32>
      %624 = arith.mulf %622, %623 : vector<1x16xf32>
      %cst_81 = arith.constant 9.99999997E-7 : f32
      %625 = vector.broadcast %cst_81 : f32 to vector<1x16xf32>
      %626 = arith.maximumf %624, %625 : vector<1x16xf32>
      %627 = tpu.reciprocal %626 {approx = true} : vector<1x16xf32> -> vector<1x16xf32>
      %628 = arith.mulf %626, %627 : vector<1x16xf32>
      %cst_82 = arith.constant 2.000000e+00 : f32
      %629 = vector.broadcast %cst_82 : f32 to vector<1x16xf32>
      %630 = arith.subf %629, %628 : vector<1x16xf32>
      %631 = arith.mulf %627, %630 : vector<1x16xf32>
      %632 = vector.broadcast %631 : vector<1x16xf32> to vector<4x16xf32>
      %633 = arith.mulf %618, %632 : vector<4x16xf32>
      %cst_83 = arith.constant dense<0.000000e+00> : vector<4x4xf32>
      %634 = tpu.matmul %633, %618, %cst_83 {dimension_numbers = #tpu.dot_dimension_numbers<[1], [1], [0], [0], [0, 0, 1, 0], [], []>} : vector<4x16xf32>, vector<4x16xf32>, vector<4x4xf32> -> vector<4x4xf32>
      %635 = arith.addf %45, %634 : vector<4x4xf32>
      %636 = vector.extract_strided_slice %635 {offsets = [0, 0], sizes = [1, 1], strides = [1, 1]} : vector<4x4xf32> to vector<1x1xf32>
      %637 = vector.extract_strided_slice %635 {offsets = [0, 1], sizes = [1, 1], strides = [1, 1]} : vector<4x4xf32> to vector<1x1xf32>
      %638 = vector.extract_strided_slice %635 {offsets = [0, 2], sizes = [1, 1], strides = [1, 1]} : vector<4x4xf32> to vector<1x1xf32>
      %639 = vector.extract_strided_slice %635 {offsets = [0, 3], sizes = [1, 1], strides = [1, 1]} : vector<4x4xf32> to vector<1x1xf32>
      %640 = vector.extract_strided_slice %635 {offsets = [1, 0], sizes = [1, 1], strides = [1, 1]} : vector<4x4xf32> to vector<1x1xf32>
      %641 = vector.extract_strided_slice %635 {offsets = [1, 1], sizes = [1, 1], strides = [1, 1]} : vector<4x4xf32> to vector<1x1xf32>
      %642 = vector.extract_strided_slice %635 {offsets = [1, 2], sizes = [1, 1], strides = [1, 1]} : vector<4x4xf32> to vector<1x1xf32>
      %643 = vector.extract_strided_slice %635 {offsets = [1, 3], sizes = [1, 1], strides = [1, 1]} : vector<4x4xf32> to vector<1x1xf32>
      %644 = vector.extract_strided_slice %635 {offsets = [2, 0], sizes = [1, 1], strides = [1, 1]} : vector<4x4xf32> to vector<1x1xf32>
      %645 = vector.extract_strided_slice %635 {offsets = [2, 1], sizes = [1, 1], strides = [1, 1]} : vector<4x4xf32> to vector<1x1xf32>
      %646 = vector.extract_strided_slice %635 {offsets = [2, 2], sizes = [1, 1], strides = [1, 1]} : vector<4x4xf32> to vector<1x1xf32>
      %647 = vector.extract_strided_slice %635 {offsets = [2, 3], sizes = [1, 1], strides = [1, 1]} : vector<4x4xf32> to vector<1x1xf32>
      %648 = vector.extract_strided_slice %635 {offsets = [3, 0], sizes = [1, 1], strides = [1, 1]} : vector<4x4xf32> to vector<1x1xf32>
      %649 = vector.extract_strided_slice %635 {offsets = [3, 1], sizes = [1, 1], strides = [1, 1]} : vector<4x4xf32> to vector<1x1xf32>
      %650 = vector.extract_strided_slice %635 {offsets = [3, 2], sizes = [1, 1], strides = [1, 1]} : vector<4x4xf32> to vector<1x1xf32>
      %651 = vector.extract_strided_slice %635 {offsets = [3, 3], sizes = [1, 1], strides = [1, 1]} : vector<4x4xf32> to vector<1x1xf32>
      %652 = arith.mulf %646, %651 : vector<1x1xf32>
      %653 = arith.mulf %647, %650 : vector<1x1xf32>
      %654 = arith.subf %652, %653 : vector<1x1xf32>
      %655 = arith.mulf %641, %654 : vector<1x1xf32>
      %656 = arith.mulf %645, %651 : vector<1x1xf32>
      %657 = arith.mulf %647, %649 : vector<1x1xf32>
      %658 = arith.subf %656, %657 : vector<1x1xf32>
      %659 = arith.mulf %642, %658 : vector<1x1xf32>
      %cst_84 = arith.constant 0.000000e+00 : f32
      %660 = vector.broadcast %cst_84 : f32 to vector<1x1xf32>
      %661 = arith.subf %660, %659 : vector<1x1xf32>
      %662 = arith.addf %655, %661 : vector<1x1xf32>
      %663 = arith.mulf %645, %650 : vector<1x1xf32>
      %664 = arith.mulf %646, %649 : vector<1x1xf32>
      %665 = arith.subf %663, %664 : vector<1x1xf32>
      %666 = arith.mulf %643, %665 : vector<1x1xf32>
      %667 = arith.addf %662, %666 : vector<1x1xf32>
      %668 = arith.mulf %640, %654 : vector<1x1xf32>
      %669 = arith.mulf %644, %651 : vector<1x1xf32>
      %670 = arith.mulf %647, %648 : vector<1x1xf32>
      %671 = arith.subf %669, %670 : vector<1x1xf32>
      %672 = arith.mulf %642, %671 : vector<1x1xf32>
      %cst_85 = arith.constant 0.000000e+00 : f32
      %673 = vector.broadcast %cst_85 : f32 to vector<1x1xf32>
      %674 = arith.subf %673, %672 : vector<1x1xf32>
      %675 = arith.addf %668, %674 : vector<1x1xf32>
      %676 = arith.mulf %644, %650 : vector<1x1xf32>
      %677 = arith.mulf %646, %648 : vector<1x1xf32>
      %678 = arith.subf %676, %677 : vector<1x1xf32>
      %679 = arith.mulf %643, %678 : vector<1x1xf32>
      %680 = arith.addf %675, %679 : vector<1x1xf32>
      %cst_86 = arith.constant 0.000000e+00 : f32
      %681 = vector.broadcast %cst_86 : f32 to vector<1x1xf32>
      %682 = arith.subf %681, %680 : vector<1x1xf32>
      %683 = arith.mulf %640, %658 : vector<1x1xf32>
      %684 = arith.mulf %641, %671 : vector<1x1xf32>
      %cst_87 = arith.constant 0.000000e+00 : f32
      %685 = vector.broadcast %cst_87 : f32 to vector<1x1xf32>
      %686 = arith.subf %685, %684 : vector<1x1xf32>
      %687 = arith.addf %683, %686 : vector<1x1xf32>
      %688 = arith.mulf %644, %649 : vector<1x1xf32>
      %689 = arith.mulf %645, %648 : vector<1x1xf32>
      %690 = arith.subf %688, %689 : vector<1x1xf32>
      %691 = arith.mulf %643, %690 : vector<1x1xf32>
      %692 = arith.addf %687, %691 : vector<1x1xf32>
      %693 = arith.mulf %640, %665 : vector<1x1xf32>
      %694 = arith.mulf %641, %678 : vector<1x1xf32>
      %cst_88 = arith.constant 0.000000e+00 : f32
      %695 = vector.broadcast %cst_88 : f32 to vector<1x1xf32>
      %696 = arith.subf %695, %694 : vector<1x1xf32>
      %697 = arith.addf %693, %696 : vector<1x1xf32>
      %698 = arith.mulf %642, %690 : vector<1x1xf32>
      %699 = arith.addf %697, %698 : vector<1x1xf32>
      %cst_89 = arith.constant 0.000000e+00 : f32
      %700 = vector.broadcast %cst_89 : f32 to vector<1x1xf32>
      %701 = arith.subf %700, %699 : vector<1x1xf32>
      %702 = arith.mulf %637, %654 : vector<1x1xf32>
      %703 = arith.mulf %638, %658 : vector<1x1xf32>
      %cst_90 = arith.constant 0.000000e+00 : f32
      %704 = vector.broadcast %cst_90 : f32 to vector<1x1xf32>
      %705 = arith.subf %704, %703 : vector<1x1xf32>
      %706 = arith.addf %702, %705 : vector<1x1xf32>
      %707 = arith.mulf %639, %665 : vector<1x1xf32>
      %708 = arith.addf %706, %707 : vector<1x1xf32>
      %cst_91 = arith.constant 0.000000e+00 : f32
      %709 = vector.broadcast %cst_91 : f32 to vector<1x1xf32>
      %710 = arith.subf %709, %708 : vector<1x1xf32>
      %711 = arith.mulf %636, %654 : vector<1x1xf32>
      %712 = arith.mulf %638, %671 : vector<1x1xf32>
      %cst_92 = arith.constant 0.000000e+00 : f32
      %713 = vector.broadcast %cst_92 : f32 to vector<1x1xf32>
      %714 = arith.subf %713, %712 : vector<1x1xf32>
      %715 = arith.addf %711, %714 : vector<1x1xf32>
      %716 = arith.mulf %639, %678 : vector<1x1xf32>
      %717 = arith.addf %715, %716 : vector<1x1xf32>
      %718 = arith.mulf %636, %658 : vector<1x1xf32>
      %719 = arith.mulf %637, %671 : vector<1x1xf32>
      %cst_93 = arith.constant 0.000000e+00 : f32
      %720 = vector.broadcast %cst_93 : f32 to vector<1x1xf32>
      %721 = arith.subf %720, %719 : vector<1x1xf32>
      %722 = arith.addf %718, %721 : vector<1x1xf32>
      %723 = arith.mulf %639, %690 : vector<1x1xf32>
      %724 = arith.addf %722, %723 : vector<1x1xf32>
      %cst_94 = arith.constant 0.000000e+00 : f32
      %725 = vector.broadcast %cst_94 : f32 to vector<1x1xf32>
      %726 = arith.subf %725, %724 : vector<1x1xf32>
      %727 = arith.mulf %636, %665 : vector<1x1xf32>
      %728 = arith.mulf %637, %678 : vector<1x1xf32>
      %cst_95 = arith.constant 0.000000e+00 : f32
      %729 = vector.broadcast %cst_95 : f32 to vector<1x1xf32>
      %730 = arith.subf %729, %728 : vector<1x1xf32>
      %731 = arith.addf %727, %730 : vector<1x1xf32>
      %732 = arith.mulf %638, %690 : vector<1x1xf32>
      %733 = arith.addf %731, %732 : vector<1x1xf32>
      %734 = arith.mulf %642, %651 : vector<1x1xf32>
      %735 = arith.mulf %643, %650 : vector<1x1xf32>
      %736 = arith.subf %734, %735 : vector<1x1xf32>
      %737 = arith.mulf %637, %736 : vector<1x1xf32>
      %738 = arith.mulf %641, %651 : vector<1x1xf32>
      %739 = arith.mulf %643, %649 : vector<1x1xf32>
      %740 = arith.subf %738, %739 : vector<1x1xf32>
      %741 = arith.mulf %638, %740 : vector<1x1xf32>
      %cst_96 = arith.constant 0.000000e+00 : f32
      %742 = vector.broadcast %cst_96 : f32 to vector<1x1xf32>
      %743 = arith.subf %742, %741 : vector<1x1xf32>
      %744 = arith.addf %737, %743 : vector<1x1xf32>
      %745 = arith.mulf %641, %650 : vector<1x1xf32>
      %746 = arith.mulf %642, %649 : vector<1x1xf32>
      %747 = arith.subf %745, %746 : vector<1x1xf32>
      %748 = arith.mulf %639, %747 : vector<1x1xf32>
      %749 = arith.addf %744, %748 : vector<1x1xf32>
      %750 = arith.mulf %636, %736 : vector<1x1xf32>
      %751 = arith.mulf %640, %651 : vector<1x1xf32>
      %752 = arith.mulf %643, %648 : vector<1x1xf32>
      %753 = arith.subf %751, %752 : vector<1x1xf32>
      %754 = arith.mulf %638, %753 : vector<1x1xf32>
      %cst_97 = arith.constant 0.000000e+00 : f32
      %755 = vector.broadcast %cst_97 : f32 to vector<1x1xf32>
      %756 = arith.subf %755, %754 : vector<1x1xf32>
      %757 = arith.addf %750, %756 : vector<1x1xf32>
      %758 = arith.mulf %640, %650 : vector<1x1xf32>
      %759 = arith.mulf %642, %648 : vector<1x1xf32>
      %760 = arith.subf %758, %759 : vector<1x1xf32>
      %761 = arith.mulf %639, %760 : vector<1x1xf32>
      %762 = arith.addf %757, %761 : vector<1x1xf32>
      %cst_98 = arith.constant 0.000000e+00 : f32
      %763 = vector.broadcast %cst_98 : f32 to vector<1x1xf32>
      %764 = arith.subf %763, %762 : vector<1x1xf32>
      %765 = arith.mulf %636, %740 : vector<1x1xf32>
      %766 = arith.mulf %637, %753 : vector<1x1xf32>
      %cst_99 = arith.constant 0.000000e+00 : f32
      %767 = vector.broadcast %cst_99 : f32 to vector<1x1xf32>
      %768 = arith.subf %767, %766 : vector<1x1xf32>
      %769 = arith.addf %765, %768 : vector<1x1xf32>
      %770 = arith.mulf %640, %649 : vector<1x1xf32>
      %771 = arith.mulf %641, %648 : vector<1x1xf32>
      %772 = arith.subf %770, %771 : vector<1x1xf32>
      %773 = arith.mulf %639, %772 : vector<1x1xf32>
      %774 = arith.addf %769, %773 : vector<1x1xf32>
      %775 = arith.mulf %636, %747 : vector<1x1xf32>
      %776 = arith.mulf %637, %760 : vector<1x1xf32>
      %cst_100 = arith.constant 0.000000e+00 : f32
      %777 = vector.broadcast %cst_100 : f32 to vector<1x1xf32>
      %778 = arith.subf %777, %776 : vector<1x1xf32>
      %779 = arith.addf %775, %778 : vector<1x1xf32>
      %780 = arith.mulf %638, %772 : vector<1x1xf32>
      %781 = arith.addf %779, %780 : vector<1x1xf32>
      %cst_101 = arith.constant 0.000000e+00 : f32
      %782 = vector.broadcast %cst_101 : f32 to vector<1x1xf32>
      %783 = arith.subf %782, %781 : vector<1x1xf32>
      %784 = arith.mulf %642, %647 : vector<1x1xf32>
      %785 = arith.mulf %643, %646 : vector<1x1xf32>
      %786 = arith.subf %784, %785 : vector<1x1xf32>
      %787 = arith.mulf %637, %786 : vector<1x1xf32>
      %788 = arith.mulf %641, %647 : vector<1x1xf32>
      %789 = arith.mulf %643, %645 : vector<1x1xf32>
      %790 = arith.subf %788, %789 : vector<1x1xf32>
      %791 = arith.mulf %638, %790 : vector<1x1xf32>
      %cst_102 = arith.constant 0.000000e+00 : f32
      %792 = vector.broadcast %cst_102 : f32 to vector<1x1xf32>
      %793 = arith.subf %792, %791 : vector<1x1xf32>
      %794 = arith.addf %787, %793 : vector<1x1xf32>
      %795 = arith.mulf %641, %646 : vector<1x1xf32>
      %796 = arith.mulf %642, %645 : vector<1x1xf32>
      %797 = arith.subf %795, %796 : vector<1x1xf32>
      %798 = arith.mulf %639, %797 : vector<1x1xf32>
      %799 = arith.addf %794, %798 : vector<1x1xf32>
      %cst_103 = arith.constant 0.000000e+00 : f32
      %800 = vector.broadcast %cst_103 : f32 to vector<1x1xf32>
      %801 = arith.subf %800, %799 : vector<1x1xf32>
      %802 = arith.mulf %636, %786 : vector<1x1xf32>
      %803 = arith.mulf %640, %647 : vector<1x1xf32>
      %804 = arith.mulf %643, %644 : vector<1x1xf32>
      %805 = arith.subf %803, %804 : vector<1x1xf32>
      %806 = arith.mulf %638, %805 : vector<1x1xf32>
      %cst_104 = arith.constant 0.000000e+00 : f32
      %807 = vector.broadcast %cst_104 : f32 to vector<1x1xf32>
      %808 = arith.subf %807, %806 : vector<1x1xf32>
      %809 = arith.addf %802, %808 : vector<1x1xf32>
      %810 = arith.mulf %640, %646 : vector<1x1xf32>
      %811 = arith.mulf %642, %644 : vector<1x1xf32>
      %812 = arith.subf %810, %811 : vector<1x1xf32>
      %813 = arith.mulf %639, %812 : vector<1x1xf32>
      %814 = arith.addf %809, %813 : vector<1x1xf32>
      %815 = arith.mulf %636, %790 : vector<1x1xf32>
      %816 = arith.mulf %637, %805 : vector<1x1xf32>
      %cst_105 = arith.constant 0.000000e+00 : f32
      %817 = vector.broadcast %cst_105 : f32 to vector<1x1xf32>
      %818 = arith.subf %817, %816 : vector<1x1xf32>
      %819 = arith.addf %815, %818 : vector<1x1xf32>
      %820 = arith.mulf %640, %645 : vector<1x1xf32>
      %821 = arith.mulf %641, %644 : vector<1x1xf32>
      %822 = arith.subf %820, %821 : vector<1x1xf32>
      %823 = arith.mulf %639, %822 : vector<1x1xf32>
      %824 = arith.addf %819, %823 : vector<1x1xf32>
      %cst_106 = arith.constant 0.000000e+00 : f32
      %825 = vector.broadcast %cst_106 : f32 to vector<1x1xf32>
      %826 = arith.subf %825, %824 : vector<1x1xf32>
      %827 = arith.mulf %636, %797 : vector<1x1xf32>
      %828 = arith.mulf %637, %812 : vector<1x1xf32>
      %cst_107 = arith.constant 0.000000e+00 : f32
      %829 = vector.broadcast %cst_107 : f32 to vector<1x1xf32>
      %830 = arith.subf %829, %828 : vector<1x1xf32>
      %831 = arith.addf %827, %830 : vector<1x1xf32>
      %832 = arith.mulf %638, %822 : vector<1x1xf32>
      %833 = arith.addf %831, %832 : vector<1x1xf32>
      %834 = arith.mulf %636, %667 : vector<1x1xf32>
      %835 = arith.mulf %637, %682 : vector<1x1xf32>
      %836 = arith.addf %834, %835 : vector<1x1xf32>
      %837 = arith.mulf %638, %692 : vector<1x1xf32>
      %838 = arith.addf %836, %837 : vector<1x1xf32>
      %839 = arith.mulf %639, %701 : vector<1x1xf32>
      %840 = arith.addf %838, %839 : vector<1x1xf32>
      %841 = tpu.reciprocal %840 {approx = true} : vector<1x1xf32> -> vector<1x1xf32>
      %842 = arith.mulf %840, %841 : vector<1x1xf32>
      %cst_108 = arith.constant 2.000000e+00 : f32
      %843 = vector.broadcast %cst_108 : f32 to vector<1x1xf32>
      %844 = arith.subf %843, %842 : vector<1x1xf32>
      %845 = arith.mulf %841, %844 : vector<1x1xf32>
      %846 = vector.broadcast %667 : vector<1x1xf32> to vector<1x4xf32>
      %847 = arith.mulf %846, %5 : vector<1x4xf32>
      %848 = vector.broadcast %710 : vector<1x1xf32> to vector<1x4xf32>
      %849 = arith.mulf %848, %10 : vector<1x4xf32>
      %850 = arith.addf %847, %849 : vector<1x4xf32>
      %851 = vector.broadcast %749 : vector<1x1xf32> to vector<1x4xf32>
      %852 = arith.mulf %851, %15 : vector<1x4xf32>
      %853 = arith.addf %850, %852 : vector<1x4xf32>
      %854 = vector.broadcast %801 : vector<1x1xf32> to vector<1x4xf32>
      %855 = arith.mulf %854, %20 : vector<1x4xf32>
      %856 = arith.addf %853, %855 : vector<1x4xf32>
      %857 = vector.broadcast %856 : vector<1x4xf32> to vector<4x4xf32>
      %858 = vector.broadcast %25 : vector<4x1xf32> to vector<4x4xf32>
      %859 = arith.mulf %857, %858 : vector<4x4xf32>
      %860 = vector.broadcast %682 : vector<1x1xf32> to vector<1x4xf32>
      %861 = arith.mulf %860, %5 : vector<1x4xf32>
      %862 = vector.broadcast %717 : vector<1x1xf32> to vector<1x4xf32>
      %863 = arith.mulf %862, %10 : vector<1x4xf32>
      %864 = arith.addf %861, %863 : vector<1x4xf32>
      %865 = vector.broadcast %764 : vector<1x1xf32> to vector<1x4xf32>
      %866 = arith.mulf %865, %15 : vector<1x4xf32>
      %867 = arith.addf %864, %866 : vector<1x4xf32>
      %868 = vector.broadcast %814 : vector<1x1xf32> to vector<1x4xf32>
      %869 = arith.mulf %868, %20 : vector<1x4xf32>
      %870 = arith.addf %867, %869 : vector<1x4xf32>
      %871 = vector.broadcast %870 : vector<1x4xf32> to vector<4x4xf32>
      %872 = vector.broadcast %30 : vector<4x1xf32> to vector<4x4xf32>
      %873 = arith.mulf %871, %872 : vector<4x4xf32>
      %874 = arith.addf %859, %873 : vector<4x4xf32>
      %875 = vector.broadcast %692 : vector<1x1xf32> to vector<1x4xf32>
      %876 = arith.mulf %875, %5 : vector<1x4xf32>
      %877 = vector.broadcast %726 : vector<1x1xf32> to vector<1x4xf32>
      %878 = arith.mulf %877, %10 : vector<1x4xf32>
      %879 = arith.addf %876, %878 : vector<1x4xf32>
      %880 = vector.broadcast %774 : vector<1x1xf32> to vector<1x4xf32>
      %881 = arith.mulf %880, %15 : vector<1x4xf32>
      %882 = arith.addf %879, %881 : vector<1x4xf32>
      %883 = vector.broadcast %826 : vector<1x1xf32> to vector<1x4xf32>
      %884 = arith.mulf %883, %20 : vector<1x4xf32>
      %885 = arith.addf %882, %884 : vector<1x4xf32>
      %886 = vector.broadcast %885 : vector<1x4xf32> to vector<4x4xf32>
      %887 = vector.broadcast %35 : vector<4x1xf32> to vector<4x4xf32>
      %888 = arith.mulf %886, %887 : vector<4x4xf32>
      %889 = arith.addf %874, %888 : vector<4x4xf32>
      %890 = vector.broadcast %701 : vector<1x1xf32> to vector<1x4xf32>
      %891 = arith.mulf %890, %5 : vector<1x4xf32>
      %892 = vector.broadcast %733 : vector<1x1xf32> to vector<1x4xf32>
      %893 = arith.mulf %892, %10 : vector<1x4xf32>
      %894 = arith.addf %891, %893 : vector<1x4xf32>
      %895 = vector.broadcast %783 : vector<1x1xf32> to vector<1x4xf32>
      %896 = arith.mulf %895, %15 : vector<1x4xf32>
      %897 = arith.addf %894, %896 : vector<1x4xf32>
      %898 = vector.broadcast %833 : vector<1x1xf32> to vector<1x4xf32>
      %899 = arith.mulf %898, %20 : vector<1x4xf32>
      %900 = arith.addf %897, %899 : vector<1x4xf32>
      %901 = vector.broadcast %900 : vector<1x4xf32> to vector<4x4xf32>
      %902 = vector.broadcast %40 : vector<4x1xf32> to vector<4x4xf32>
      %903 = arith.mulf %901, %902 : vector<4x4xf32>
      %904 = arith.addf %889, %903 : vector<4x4xf32>
      %905 = vector.broadcast %845 : vector<1x1xf32> to vector<4x4xf32>
      %906 = arith.mulf %904, %905 : vector<4x4xf32>
      %cst_109 = arith.constant dense<0.000000e+00> : vector<4x32xf32>
      %907 = tpu.matmul %633, %0, %cst_109 {dimension_numbers = #tpu.dot_dimension_numbers<[1], [0], [0], [1], [0, 0, 1, 1], [], []>} : vector<4x16xf32>, vector<16x32xf32>, vector<4x32xf32> -> vector<4x32xf32>
      %cst_110 = arith.constant dense<0.000000e+00> : vector<4x32xf32>
      %908 = tpu.matmul %906, %907, %cst_110 {dimension_numbers = #tpu.dot_dimension_numbers<[1], [0], [0], [1], [0, 0, 1, 1], [], []>} : vector<4x4xf32>, vector<4x32xf32>, vector<4x32xf32> -> vector<4x32xf32>
      %cst_111 = arith.constant dense<0.000000e+00> : vector<4x16xf32>
      %909 = tpu.matmul %908, %0, %cst_111 {dimension_numbers = #tpu.dot_dimension_numbers<[1], [1], [0], [0], [0, 0, 1, 0], [], []>} : vector<4x32xf32>, vector<16x32xf32>, vector<4x16xf32> -> vector<4x16xf32>
      %910 = arith.mulf %631, %49 : vector<1x16xf32>
      %911 = vector.shape_cast %910 : vector<1x16xf32> to vector<1x1x16xf32>
      %cst_112 = arith.constant dense<0.000000e+00> : vector<1xf32>
      %912 = vector.multi_reduction <add>, %911, %cst_112 [1, 2] : vector<1x1x16xf32> to vector<1xf32>
      %913 = vector.shape_cast %912 : vector<1xf32> to vector<1x1x1xf32>
      %914 = vector.extract %913[0, 0, 0] : f32 from vector<1x1x1xf32>
      %cst_113 = arith.constant 5.000000e-01 : f32
      %915 = arith.mulf %cst_113, %914 : f32
      %916 = arith.mulf %633, %909 : vector<4x16xf32>
      %917 = vector.shape_cast %916 : vector<4x16xf32> to vector<1x4x16xf32>
      %cst_114 = arith.constant dense<0.000000e+00> : vector<1xf32>
      %918 = vector.multi_reduction <add>, %917, %cst_114 [1, 2] : vector<1x4x16xf32> to vector<1xf32>
      %919 = vector.shape_cast %918 : vector<1xf32> to vector<1x1x1xf32>
      %920 = vector.extract %919[0, 0, 0] : f32 from vector<1x1x1xf32>
      %921 = arith.subf %915, %920 : f32
      %cst_115 = arith.constant dense<0.000000e+00> : vector<4x32xf32>
      %922 = tpu.matmul %634, %908, %cst_115 {dimension_numbers = #tpu.dot_dimension_numbers<[1], [0], [0], [1], [0, 0, 1, 1], [], []>} : vector<4x4xf32>, vector<4x32xf32>, vector<4x32xf32> -> vector<4x32xf32>
      %923 = arith.mulf %634, %906 : vector<4x4xf32>
      %924 = vector.shape_cast %923 : vector<4x4xf32> to vector<1x4x4xf32>
      %cst_116 = arith.constant dense<0.000000e+00> : vector<1xf32>
      %925 = vector.multi_reduction <add>, %924, %cst_116 [1, 2] : vector<1x4x4xf32> to vector<1xf32>
      %926 = vector.shape_cast %925 : vector<1xf32> to vector<1x1x1xf32>
      %927 = vector.extract %926[0, 0, 0] : f32 from vector<1x1x1xf32>
      %cst_117 = arith.constant 3.200000e+01 : f32
      %928 = arith.mulf %cst_117, %927 : f32
      %929 = arith.mulf %922, %908 : vector<4x32xf32>
      %930 = vector.shape_cast %929 : vector<4x32xf32> to vector<1x4x32xf32>
      %cst_118 = arith.constant dense<0.000000e+00> : vector<1xf32>
      %931 = vector.multi_reduction <add>, %930, %cst_118 [1, 2] : vector<1x4x32xf32> to vector<1xf32>
      %932 = vector.shape_cast %931 : vector<1xf32> to vector<1x1x1xf32>
      %933 = vector.extract %932[0, 0, 0] : f32 from vector<1x1x1xf32>
      %934 = arith.addf %928, %933 : f32
      %cst_119 = arith.constant 5.000000e-01 : f32
      %935 = arith.mulf %cst_119, %934 : f32
      %cst_120 = arith.constant 9.99999997E-7 : f32
      %936 = vector.broadcast %cst_120 : f32 to vector<1x16xf32>
      %937 = arith.maximumf %624, %936 : vector<1x16xf32>
      %938 = math.log %937 : vector<1x16xf32>
      %939 = vector.shape_cast %938 : vector<1x16xf32> to vector<1x1x16xf32>
      %cst_121 = arith.constant dense<0.000000e+00> : vector<1xf32>
      %940 = vector.multi_reduction <add>, %939, %cst_121 [1, 2] : vector<1x1x16xf32> to vector<1xf32>
      %941 = vector.shape_cast %940 : vector<1xf32> to vector<1x1x1xf32>
      %942 = vector.extract %941[0, 0, 0] : f32 from vector<1x1x1xf32>
      %cst_122 = arith.constant 1.600000e+01 : f32
      %943 = arith.mulf %cst_122, %942 : f32
      %944 = arith.addf %921, %935 : f32
      %945 = arith.addf %944, %943 : f32
      %946 = vector.broadcast %arg5 : i32 to vector<1x3xi32>
      %947 = arith.cmpi eq, %46, %946 : vector<1x3xi32>
      %948 = vector.broadcast %945 : f32 to vector<1x3xf32>
      %949 = arith.select %947, %948, %arg8 : vector<1x3xi1>, vector<1x3xf32>
      scf.yield %618, %624, %949 : vector<4x16xf32>, vector<1x16xf32>, vector<1x3xf32>
    }
    %c3_i32_14 = arith.constant 3 : i32
    %c0_15 = arith.constant 0 : index
    %c0_16 = arith.constant 0 : index
    %55 = vector.load %arg3[%c0_15, %c0_16] : memref<5x16xf32, #tpu.memory_space<vmem>>, vector<4x16xf32>
    tpu.vector_store %arg3[%c0_15, %c0_16], %54#0 {strides = array<i32>} : memref<5x16xf32, #tpu.memory_space<vmem>>, vector<4x16xf32>,
    %c4 = arith.constant 4 : index
    %c0_17 = arith.constant 0 : index
    %56 = vector.load %arg3[%c4, %c0_17] : memref<5x16xf32, #tpu.memory_space<vmem>>, vector<1x16xf32>
    tpu.vector_store %arg3[%c4, %c0_17], %54#1 {strides = array<i32>} : memref<5x16xf32, #tpu.memory_space<vmem>>, vector<1x16xf32>,
    %c0_18 = arith.constant 0 : index
    %c0_19 = arith.constant 0 : index
    %57 = vector.load %arg4[%c0_18, %c0_19] : memref<1x3xf32, #tpu.memory_space<vmem>>, vector<1x3xf32>
    tpu.vector_store %arg4[%c0_18, %c0_19], %54#2 {strides = array<i32>} : memref<1x3xf32, #tpu.memory_space<vmem>>, vector<1x3xf32>,
    return
  }
}

</mosaic_0001>

<llo_original>
// kernel: pcca_forward.1
$region0: #{pcca_forward.1}
  #allocation0 [shape = 'u32[]', space=smem, size = 0x4, offset = 0x4, fixed_abs, tag = 'smem constant byte address 0x4 - core index']
  #allocation1 [shape = 'u32[144,128]{1,0:T(1,128)}', space=vmem, size = 0x12000, scoped, tag = 'internal scratch']
  %s0 = inlined_call_operand.hbm [shape: f32[16,32], index: 0, kind: input, shape index: {}]
  %s1 = inlined_call_operand.vmem [shape: f32[4,16], index: 1, kind: input, shape index: {}]
  %s2 = inlined_call_operand.vmem [shape: f32[1,16], index: 2, kind: input, shape index: {}]
  %s3 = inlined_call_operand.vmem [shape: f32[5,16], index: 3, kind: output, shape index: {0}]
  %s4 = inlined_call_operand.hbm [shape: f32[1,3], index: 4, kind: output, shape index: {1}]
  %5 = xla_tuple %s3, %s4
  %s6 = sld [smem:[#allocation0]]
  $region41: #{pcca_forward.1} parent=0
    _
  %s8 = ssub.s32 1, %s6
  %s9 = scalar_select 0, %s8, %s6
  $region1: #{pcca_forward.1} parent=0
    #allocation2 [shape = 'u8[8192]{0}', space=vmem, size = 0x2000, scoped, tag = 'input window, operand 0, single buffered']
    #allocation3 [shape = 's32[1]{0}', space=sflag, size = 0x4, scoped, tag = 'scoped memory for pcca_forward.1']
    #allocation4 [shape = 's32[1]{0}', space=sflag, size = 0x4, scoped, tag = 'scoped memory for pcca_forward.1']
    #allocation5 [shape = 'u8[512]{0}', space=vmem, size = 0x400, scoped, tag = 'output window, operand 1, single buffered']
    %10 = vsyncpa [#allocation3], 0
    %11 = vsyncpa [#allocation4], 0
    // Predicated region
    $region2: #{pcca_forward.1} parent=1 // pred_check
      _
    $region3: #{pcca_forward.1} parent=1 // pred_check_branch
      %13 = sbr.rel (0) target = $region5
    $region4: #{pcca_forward.1} parent=1 // pred_region
      %s15 = ssub.s32 256, 256
      %16 = vsyncadd [#allocation3], %s15
      %s17 = sshll.u32 [#allocation2], 4
      %s18 = int_to_ptr.vmem [resolvable:$true] %s17
      %23 = dma.hbm_to_vmem [thread:$0]  %s0, 256, %s18, [#allocation3], 128, 128, 8
    $region5: #{pcca_forward.1} parent=1 // pred_fallthru
      _
    // Predicated region
    $region6: #{pcca_forward.1} parent=1 // pred_check
      _
    $region7: #{pcca_forward.1} parent=1 // pred_check_branch
      %25 = sbr.rel (0) target = $region9
    $region8: #{pcca_forward.1} parent=1 // pred_region
      _
    $region9: #{pcca_forward.1} parent=1 // pred_fallthru
      _
    // Predicated region
    $region10: #{pcca_forward.1} parent=1 // pred_check
      _
    $region11: #{pcca_forward.1} parent=1 // pred_check_branch
      %27 = sbr.rel (0) target = $region13
    $region12: #{pcca_forward.1} parent=1 // pred_region
      _
    $region13: #{pcca_forward.1} parent=1 // pred_fallthru
      _
    // Predicated region
    $region14: #{pcca_forward.1} parent=1 // pred_check
      _
    $region15: #{pcca_forward.1} parent=1 // pred_check_branch
      %29 = sbr.rel (0) target = $region17
    $region16: #{pcca_forward.1} parent=1 // pred_region
      %30 = dma.done [#allocation3], 256
    $region17: #{pcca_forward.1} parent=1 // pred_fallthru
      _
    %v31 = vld [vmem:[#allocation2] sm:$0xff]
    %v32 = vld [vmem:[#allocation2 + $0x8] sm:$0xff]
    %v33 = vlaneseq
    %v34 = vand.u32 %v33, 127
    %vm35 = vcmp.eq.s32.totalorder %v34, 0
    %v36 = vsel %vm35, 1, 0
    %v37 = vcvt.s32.f32 %v36
    %vm38 = vcmp.eq.s32.totalorder %v34, 1
    %v39 = vsel %vm38, 1, 0
    %v40 = vcvt.s32.f32 %v39
    %vm41 = vcmp.eq.s32.totalorder %v34, 2
    %v42 = vsel %vm41, 1, 0
    %v43 = vcvt.s32.f32 %v42
    %vm44 = vcmp.eq.s32.totalorder %v34, 3
    %v45 = vsel %vm44, 1, 0
    %v46 = vcvt.s32.f32 %v45
    %v47 = vlaneseq
    %v48 = vshrl.u32 %v47, 7
    %vm49 = vcmp.eq.s32.totalorder %v48, 0
    %v50 = vsel %vm49, 1, 0
    %v51 = vcvt.s32.f32 %v50
    %vm52 = vcmp.eq.s32.totalorder %v48, 1
    %v53 = vsel %vm52, 1, 0
    %v54 = vcvt.s32.f32 %v53
    %vm55 = vcmp.eq.s32.totalorder %v48, 2
    %v56 = vsel %vm55, 1, 0
    %v57 = vcvt.s32.f32 %v56
    %vm58 = vcmp.eq.s32.totalorder %v48, 3
    %v59 = vsel %vm58, 1, 0
    %v60 = vcvt.s32.f32 %v59
    %vm61 = vcmp.eq.s32.totalorder %v48, %v34
    %v62 = vsel %vm61, 1, 0
    %v63 = vcvt.s32.f32 %v62
    %v64 = vmul.f32 %v31, %v31
    %v65 = vmul.f32 %v32, %v32
    %vm66 = vcmask 261120
    %v68 = vsel %vm66, 1.0, 0
    %v71 = vsel %vm66, %v64, 0
    %v74 = vsel %vm66, %v65, 0
    %76 = vmatprep.subr.mxu0 0.0
    %77 = vmatpush1.xpose.msra.mxu0 %v71
    %78 = vmatprep.subr.mxu0 0.0
    %79 = vmatpush1.xpose.msra.mxu0 %v74
    %80 = vmatprep.subr.mxu0 0.0
    %81 = vmatpush1.xpose.msra.mxu0 0.0
    %82 = vmatprep.subr.mxu0 0.0
    %83 = vmatpush1.xpose.msra.mxu0 0.0
    %84 = vmatprep.subr.mxu0 0.0
    %85 = vmatpush1.xpose.msra.mxu0 0.0
    %86 = vmatprep.subr.mxu0 0.0
    %87 = vmatpush1.xpose.msra.mxu0 0.0
    %88 = vmatprep.subr.mxu0 0.0
    %89 = vmatpush1.xpose.msra.mxu0 0.0
    %90 = vmatprep.subr.mxu0 0.0
    %91 = vmatpush1.xpose.msra.mxu0 0.0
    %92 = vmatprep.subr.mxu0 0.0
    %93 = vmatpush1.xpose.msra.mxu0 0.0
    %94 = vmatprep.subr.mxu0 0.0
    %95 = vmatpush1.xpose.msra.mxu0 0.0
    %96 = vmatprep.subr.mxu0 0.0
    %97 = vmatpush1.xpose.msra.mxu0 0.0
    %98 = vmatprep.subr.mxu0 0.0
    %99 = vmatpush1.xpose.msra.mxu0 0.0
    %100 = vmatprep.subr.mxu0 0.0
    %101 = vmatpush1.xpose.msra.mxu0 0.0
    %102 = vmatprep.subr.mxu0 0.0
    %103 = vmatpush1.xpose.msra.mxu0 0.0
    %104 = vmatprep.subr.mxu0 0.0
    %105 = vmatpush1.xpose.msra.mxu0 0.0
    %106 = vmatprep.subr.mxu0 0.0
    %107 = vmatpush1.xpose.msra.mxu0 0.0
    %108 = vmatprep.subr.mxu0 0.0
    %109 = vmatpush1.xpose.msra.mxu0 0.0
    %110 = vmatprep.subr.mxu0 0.0
    %111 = vmatpush1.xpose.msra.mxu0 0.0
    %112 = vmatprep.subr.mxu0 0.0
    %113 = vmatpush1.xpose.msra.mxu0 0.0
    %114 = vmatprep.subr.mxu0 0.0
    %115 = vmatpush1.xpose.msra.mxu0 0.0
    %116 = vmatprep.subr.mxu0 0.0
    %117 = vmatpush1.xpose.msra.mxu0 0.0
    %118 = vmatprep.subr.mxu0 0.0
    %119 = vmatpush1.xpose.msra.mxu0 0.0
    %120 = vmatprep.subr.mxu0 0.0
    %121 = vmatpush1.xpose.msra.mxu0 0.0
    %122 = vmatprep.subr.mxu0 0.0
    %123 = vmatpush1.xpose.msra.mxu0 0.0
    %124 = vmatprep.subr.mxu0 0.0
    %125 = vmatpush1.xpose.msra.mxu0 0.0
    %126 = vmatprep.subr.mxu0 0.0
    %127 = vmatpush1.xpose.msra.mxu0 0.0
    %128 = vmatprep.subr.mxu0 0.0
    %129 = vmatpush1.xpose.msra.mxu0 0.0
    %130 = vmatprep.subr.mxu0 0.0
    %131 = vmatpush1.xpose.msra.mxu0 0.0
    %132 = vmatprep.subr.mxu0 0.0
    %133 = vmatpush1.xpose.msra.mxu0 0.0
    %134 = vmatprep.subr.mxu0 0.0
    %135 = vmatpush1.xpose.msra.mxu0 0.0
    %136 = vmatprep.subr.mxu0 0.0
    %137 = vmatpush1.xpose.msra.mxu0 0.0
    %138 = vmatprep.subr.mxu0 0.0
    %139 = vmatpush1.xpose.msra.mxu0 0.0
    %140 = vmatprep.mubr.f32.mxu0 0.0
    %141 = vmatmul.mubr.f32.gmra.mrb[0].mxu0 %v68
    %v142 = vpop.f32.mrb[0].mxu0
    %v143 = vadd.f32 0.0, %v142
    %v144 = vpop.f32.mrb[0].mxu0
    %145 = vdwg.mxu0
    %v146 = vld [vmem:[%s1] sm:$0xf]
    %v147 = vld [vmem:[%s2] sm:$0x1]
    loop: start=0, step=1, limit=3
    $region18: #{pcca_forward.1} parent=1 // loop_pre_header
      _
    $region19: #{pcca_forward.1} parent=1 // loop_header
      %s149 = sphi 0, %s153
      %p150 = scmp.ge.s32.totalorder %s149, 3
      %v154 = vphi %v146, %v1655
      %v155 = vphi %v147, %v1668
      %v156 = vphi 0.0, %v2639
    $region20: #{pcca_forward.1} parent=1 // loop_header_branch
      %152 = sbr.rel (%p150) target = $region24
    $region21: #{pcca_forward.1} parent=1 // loop_body
      %v157 = vmax.f32 %v155, 1e-06
      %v158 = vrcp.pop %v157
      %v159 = vmul.f32 %v157, %v158
      %v160 = vsub.f32 2.0, %v159
      %v161 = vmul.f32 %v158, %v160
      %v162 = vlaneseq
      %v163 = vshrl.u32 %v162, 7
      %v164 = vsub.s32 0, %v163
      %v165 = vrot.slane %v161, %v164
      %v166 = vmul.f32 %v154, %v165
      %vm167 = vcmask 130048
      %v169 = vsel %vm167, %v166, 0
      %v172 = vsel %vm167, %v154, 0
      %174 = vmatprep.subr.mxu0 0.0
      %175 = vmatpush1.xpose.msra.mxu0 %v172
      %176 = vmatprep.subr.mxu0 0.0
      %177 = vmatpush1.xpose.msra.mxu0 0.0
      %178 = vmatprep.subr.mxu0 0.0
      %179 = vmatpush1.xpose.msra.mxu0 0.0
      %180 = vmatprep.subr.mxu0 0.0
      %181 = vmatpush1.xpose.msra.mxu0 0.0
      %182 = vmatprep.subr.mxu0 0.0
      %183 = vmatpush1.xpose.msra.mxu0 0.0
      %184 = vmatprep.subr.mxu0 0.0
      %185 = vmatpush1.xpose.msra.mxu0 0.0
      %186 = vmatprep.subr.mxu0 0.0
      %187 = vmatpush1.xpose.msra.mxu0 0.0
      %188 = vmatprep.subr.mxu0 0.0
      %189 = vmatpush1.xpose.msra.mxu0 0.0
      %190 = vmatprep.subr.mxu0 0.0
      %191 = vmatpush1.xpose.msra.mxu0 0.0
      %192 = vmatprep.subr.mxu0 0.0
      %193 = vmatpush1.xpose.msra.mxu0 0.0
      %194 = vmatprep.subr.mxu0 0.0
      %195 = vmatpush1.xpose.msra.mxu0 0.0
      %196 = vmatprep.subr.mxu0 0.0
      %197 = vmatpush1.xpose.msra.mxu0 0.0
      %198 = vmatprep.subr.mxu0 0.0
      %199 = vmatpush1.xpose.msra.mxu0 0.0
      %200 = vmatprep.subr.mxu0 0.0
      %201 = vmatpush1.xpose.msra.mxu0 0.0
      %202 = vmatprep.subr.mxu0 0.0
      %203 = vmatpush1.xpose.msra.mxu0 0.0
      %204 = vmatprep.subr.mxu0 0.0
      %205 = vmatpush1.xpose.msra.mxu0 0.0
      %206 = vmatprep.subr.mxu0 0.0
      %207 = vmatpush1.xpose.msra.mxu0 0.0
      %208 = vmatprep.subr.mxu0 0.0
      %209 = vmatpush1.xpose.msra.mxu0 0.0
      %210 = vmatprep.subr.mxu0 0.0
      %211 = vmatpush1.xpose.msra.mxu0 0.0
      %212 = vmatprep.subr.mxu0 0.0
      %213 = vmatpush1.xpose.msra.mxu0 0.0
      %214 = vmatprep.subr.mxu0 0.0
      %215 = vmatpush1.xpose.msra.mxu0 0.0
      %216 = vmatprep.subr.mxu0 0.0
      %217 = vmatpush1.xpose.msra.mxu0 0.0
      %218 = vmatprep.subr.mxu0 0.0
      %219 = vmatpush1.xpose.msra.mxu0 0.0
      %220 = vmatprep.subr.mxu0 0.0
      %221 = vmatpush1.xpose.msra.mxu0 0.0
      %222 = vmatprep.subr.mxu0 0.0
      %223 = vmatpush1.xpose.msra.mxu0 0.0
      %224 = vmatprep.subr.mxu0 0.0
      %225 = vmatpush1.xpose.msra.mxu0 0.0
      %226 = vmatprep.subr.mxu0 0.0
      %227 = vmatpush1.xpose.msra.mxu0 0.0
      %228 = vmatprep.subr.mxu0 0.0
      %229 = vmatpush1.xpose.msra.mxu0 0.0
      %230 = vmatprep.subr.mxu0 0.0
      %231 = vmatpush1.xpose.msra.mxu0 0.0
      %232 = vmatprep.subr.mxu0 0.0
      %233 = vmatpush1.xpose.msra.mxu0 0.0
      %234 = vmatprep.subr.mxu0 0.0
      %235 = vmatpush1.xpose.msra.mxu0 0.0
      %236 = vmatprep.subr.mxu0 0.0
      %237 = vmatpush1.xpose.msra.mxu0 0.0
      %238 = vmatprep.mubr.f32.mxu0 0.0
      %239 = vmatmul.mubr.f32.gmra.mrb[0].mxu0 %v169
      %v240 = vpop.f32.mrb[0].mxu0
      %v241 = vadd.f32 0.0, %v240
      %v242 = vpop.f32.mrb[0].mxu0
      %243 = vdwg.mxu0
      %v244 = vadd.f32 %v63, %v241
      %v246 = vrot.slane %v244, 1
      %247 = vrot.lane.b32.xlu0 %v246, 127
      %v248 = vpop.permute.xlu0 %247
      %v250 = vmul.f32 %v244, %v248
      %251 = vrot.lane.b32.xlu0 %v246, 1
      %v252 = vpop.permute.xlu0 %251
      %v254 = vmul.f32 %v244, %v252
      %256 = vrot.lane.b32.xlu0 %v254, 127
      %v257 = vpop.permute.xlu0 %256
      %v259 = vsub.f32 %v250, %v257
      %v261 = vrot.slane %v259, 1
      %262 = vrot.lane.b32.xlu0 %v261, 127
      %v263 = vpop.permute.xlu0 %262
      %v265 = vmul.f32 %v244, %v263
      %266 = vrot.lane.b32.xlu0 %v246, 126
      %v267 = vpop.permute.xlu0 %266
      %v269 = vmul.f32 %v244, %v267
      %270 = vrot.lane.b32.xlu0 %v246, 2
      %v271 = vpop.permute.xlu0 %270
      %v273 = vmul.f32 %v244, %v271
      %275 = vrot.lane.b32.xlu0 %v273, 126
      %v276 = vpop.permute.xlu0 %275
      %v278 = vsub.f32 %v269, %v276
      %v280 = vrot.slane %v278, 1
      %281 = vrot.lane.b32.xlu0 %v280, 1
      %v282 = vpop.permute.xlu0 %281
      %v284 = vmul.f32 %v244, %v282
      %v285 = vsub.f32 0.0, %v284
      %287 = vrot.lane.b32.xlu0 %v285, 127
      %v288 = vpop.permute.xlu0 %287
      %v290 = vadd.f32 %v265, %v288
      %291 = vrot.lane.b32.xlu0 %v261, 2
      %v292 = vpop.permute.xlu0 %291
      %v294 = vmul.f32 %v244, %v292
      %296 = vrot.lane.b32.xlu0 %v294, 126
      %v297 = vpop.permute.xlu0 %296
      %v299 = vadd.f32 %v290, %v297
      %300 = vrot.lane.b32.xlu0 %v261, 126
      %v301 = vpop.permute.xlu0 %300
      %v303 = vmul.f32 %v244, %v301
      %304 = vrot.lane.b32.xlu0 %v246, 125
      %v305 = vpop.permute.xlu0 %304
      %v307 = vmul.f32 %v244, %v305
      %308 = vrot.lane.b32.xlu0 %v246, 3
      %v309 = vpop.permute.xlu0 %308
      %v311 = vmul.f32 %v244, %v309
      %313 = vrot.lane.b32.xlu0 %v311, 125
      %v314 = vpop.permute.xlu0 %313
      %v316 = vsub.f32 %v307, %v314
      %v318 = vrot.slane %v316, 1
      %319 = vrot.lane.b32.xlu0 %v318, 2
      %v320 = vpop.permute.xlu0 %319
      %v322 = vmul.f32 %v244, %v320
      %v323 = vsub.f32 0.0, %v322
      %325 = vrot.lane.b32.xlu0 %v323, 126
      %v326 = vpop.permute.xlu0 %325
      %v328 = vadd.f32 %v303, %v326
      %329 = vrot.lane.b32.xlu0 %v280, 3
      %v330 = vpop.permute.xlu0 %329
      %v332 = vmul.f32 %v244, %v330
      %334 = vrot.lane.b32.xlu0 %v332, 125
      %v335 = vpop.permute.xlu0 %334
      %v337 = vadd.f32 %v328, %v335
      %v338 = vsub.f32 0.0, %v337
      %339 = vrot.lane.b32.xlu0 %v280, 127
      %v340 = vpop.permute.xlu0 %339
      %v342 = vmul.f32 %v244, %v340
      %343 = vrot.lane.b32.xlu0 %v318, 1
      %v344 = vpop.permute.xlu0 %343
      %v346 = vmul.f32 %v244, %v344
      %v347 = vsub.f32 0.0, %v346
      %349 = vrot.lane.b32.xlu0 %v347, 127
      %v350 = vpop.permute.xlu0 %349
      %v352 = vadd.f32 %v342, %v350
      %353 = vrot.lane.b32.xlu0 %v261, 3
      %v354 = vpop.permute.xlu0 %353
      %v356 = vmul.f32 %v244, %v354
      %358 = vrot.lane.b32.xlu0 %v356, 125
      %v359 = vpop.permute.xlu0 %358
      %v361 = vadd.f32 %v352, %v359
      %v362 = vsub.f32 0.0, %v299
      %v363 = vrot.slane %v259, 2
      %364 = vrot.lane.b32.xlu0 %v363, 127
      %v365 = vpop.permute.xlu0 %364
      %v367 = vmul.f32 %v244, %v365
      %v368 = vrot.slane %v278, 2
      %369 = vrot.lane.b32.xlu0 %v368, 1
      %v370 = vpop.permute.xlu0 %369
      %v372 = vmul.f32 %v244, %v370
      %v373 = vsub.f32 0.0, %v372
      %375 = vrot.lane.b32.xlu0 %v373, 127
      %v376 = vpop.permute.xlu0 %375
      %v378 = vadd.f32 %v367, %v376
      %379 = vrot.lane.b32.xlu0 %v363, 2
      %v380 = vpop.permute.xlu0 %379
      %v382 = vmul.f32 %v244, %v380
      %384 = vrot.lane.b32.xlu0 %v382, 126
      %v385 = vpop.permute.xlu0 %384
      %v387 = vadd.f32 %v378, %v385
      %v388 = vsub.f32 0.0, %v387
      %389 = vrot.lane.b32.xlu0 %v363, 126
      %v390 = vpop.permute.xlu0 %389
      %v392 = vmul.f32 %v244, %v390
      %v393 = vrot.slane %v316, 2
      %394 = vrot.lane.b32.xlu0 %v393, 2
      %v395 = vpop.permute.xlu0 %394
      %v397 = vmul.f32 %v244, %v395
      %v398 = vsub.f32 0.0, %v397
      %400 = vrot.lane.b32.xlu0 %v398, 126
      %v401 = vpop.permute.xlu0 %400
      %v403 = vadd.f32 %v392, %v401
      %404 = vrot.lane.b32.xlu0 %v368, 3
      %v405 = vpop.permute.xlu0 %404
      %v407 = vmul.f32 %v244, %v405
      %409 = vrot.lane.b32.xlu0 %v407, 125
      %v410 = vpop.permute.xlu0 %409
      %v412 = vadd.f32 %v403, %v410
      %413 = vrot.lane.b32.xlu0 %v368, 127
      %v414 = vpop.permute.xlu0 %413
      %v416 = vmul.f32 %v244, %v414
      %417 = vrot.lane.b32.xlu0 %v393, 1
      %v418 = vpop.permute.xlu0 %417
      %v420 = vmul.f32 %v244, %v418
      %v421 = vsub.f32 0.0, %v420
      %423 = vrot.lane.b32.xlu0 %v421, 127
      %v424 = vpop.permute.xlu0 %423
      %v426 = vadd.f32 %v416, %v424
      %427 = vrot.lane.b32.xlu0 %v363, 3
      %v428 = vpop.permute.xlu0 %427
      %v430 = vmul.f32 %v244, %v428
      %432 = vrot.lane.b32.xlu0 %v430, 125
      %v433 = vpop.permute.xlu0 %432
      %v435 = vadd.f32 %v426, %v433
      %v436 = vsub.f32 0.0, %v435
      %v437 = vrot.slane %v244, 2
      %438 = vrot.lane.b32.xlu0 %v437, 127
      %v439 = vpop.permute.xlu0 %438
      %v441 = vmul.f32 %v244, %v439
      %442 = vrot.lane.b32.xlu0 %v437, 1
      %v443 = vpop.permute.xlu0 %442
      %v445 = vmul.f32 %v244, %v443
      %447 = vrot.lane.b32.xlu0 %v445, 127
      %v448 = vpop.permute.xlu0 %447
      %v450 = vsub.f32 %v441, %v448
      %v452 = vrot.slane %v450, 1
      %453 = vrot.lane.b32.xlu0 %v452, 127
      %v454 = vpop.permute.xlu0 %453
      %v456 = vmul.f32 %v244, %v454
      %457 = vrot.lane.b32.xlu0 %v437, 126
      %v458 = vpop.permute.xlu0 %457
      %v460 = vmul.f32 %v244, %v458
      %461 = vrot.lane.b32.xlu0 %v437, 2
      %v462 = vpop.permute.xlu0 %461
      %v464 = vmul.f32 %v244, %v462
      %466 = vrot.lane.b32.xlu0 %v464, 126
      %v467 = vpop.permute.xlu0 %466
      %v469 = vsub.f32 %v460, %v467
      %v471 = vrot.slane %v469, 1
      %472 = vrot.lane.b32.xlu0 %v471, 1
      %v473 = vpop.permute.xlu0 %472
      %v475 = vmul.f32 %v244, %v473
      %v476 = vsub.f32 0.0, %v475
      %478 = vrot.lane.b32.xlu0 %v476, 127
      %v479 = vpop.permute.xlu0 %478
      %v481 = vadd.f32 %v456, %v479
      %482 = vrot.lane.b32.xlu0 %v452, 2
      %v483 = vpop.permute.xlu0 %482
      %v485 = vmul.f32 %v244, %v483
      %487 = vrot.lane.b32.xlu0 %v485, 126
      %v488 = vpop.permute.xlu0 %487
      %v490 = vadd.f32 %v481, %v488
      %491 = vrot.lane.b32.xlu0 %v452, 126
      %v492 = vpop.permute.xlu0 %491
      %v494 = vmul.f32 %v244, %v492
      %495 = vrot.lane.b32.xlu0 %v437, 125
      %v496 = vpop.permute.xlu0 %495
      %v498 = vmul.f32 %v244, %v496
      %499 = vrot.lane.b32.xlu0 %v437, 3
      %v500 = vpop.permute.xlu0 %499
      %v502 = vmul.f32 %v244, %v500
      %504 = vrot.lane.b32.xlu0 %v502, 125
      %v505 = vpop.permute.xlu0 %504
      %v507 = vsub.f32 %v498, %v505
      %v509 = vrot.slane %v507, 1
      %510 = vrot.lane.b32.xlu0 %v509, 2
      %v511 = vpop.permute.xlu0 %510
      %v513 = vmul.f32 %v244, %v511
      %v514 = vsub.f32 0.0, %v513
      %516 = vrot.lane.b32.xlu0 %v514, 126
      %v517 = vpop.permute.xlu0 %516
      %v519 = vadd.f32 %v494, %v517
      %520 = vrot.lane.b32.xlu0 %v471, 3
      %v521 = vpop.permute.xlu0 %520
      %v523 = vmul.f32 %v244, %v521
      %525 = vrot.lane.b32.xlu0 %v523, 125
      %v526 = vpop.permute.xlu0 %525
      %v528 = vadd.f32 %v519, %v526
      %v529 = vsub.f32 0.0, %v528
      %530 = vrot.lane.b32.xlu0 %v471, 127
      %v531 = vpop.permute.xlu0 %530
      %v533 = vmul.f32 %v244, %v531
      %534 = vrot.lane.b32.xlu0 %v509, 1
      %v535 = vpop.permute.xlu0 %534
      %v537 = vmul.f32 %v244, %v535
      %v538 = vsub.f32 0.0, %v537
      %540 = vrot.lane.b32.xlu0 %v538, 127
      %v541 = vpop.permute.xlu0 %540
      %v543 = vadd.f32 %v533, %v541
      %544 = vrot.lane.b32.xlu0 %v452, 3
      %v545 = vpop.permute.xlu0 %544
      %v547 = vmul.f32 %v244, %v545
      %549 = vrot.lane.b32.xlu0 %v547, 125
      %v550 = vpop.permute.xlu0 %549
      %v552 = vadd.f32 %v543, %v550
      %v553 = vsub.f32 0.0, %v490
      %v554 = vsub.f32 0.0, %v361
      %v556 = vrot.slane %v299, 1
      %557 = vrot.lane.b32.xlu0 %v556, 127
      %v558 = vpop.permute.xlu0 %557
      %v560 = vmul.f32 %v244, %v558
      %v562 = vrot.slane %v338, 1
      %563 = vrot.lane.b32.xlu0 %v562, 1
      %v564 = vpop.permute.xlu0 %563
      %v566 = vmul.f32 %v244, %v564
      %568 = vrot.lane.b32.xlu0 %v566, 127
      %v569 = vpop.permute.xlu0 %568
      %v571 = vadd.f32 %v560, %v569
      %v573 = vrot.slane %v361, 1
      %574 = vrot.lane.b32.xlu0 %v573, 2
      %v575 = vpop.permute.xlu0 %574
      %v577 = vmul.f32 %v244, %v575
      %579 = vrot.lane.b32.xlu0 %v577, 126
      %v580 = vpop.permute.xlu0 %579
      %v582 = vadd.f32 %v571, %v580
      %v584 = vrot.slane %v362, 1
      %585 = vrot.lane.b32.xlu0 %v584, 3
      %v586 = vpop.permute.xlu0 %585
      %v588 = vmul.f32 %v244, %v586
      %590 = vrot.lane.b32.xlu0 %v588, 125
      %v591 = vpop.permute.xlu0 %590
      %v593 = vadd.f32 %v582, %v591
      %v594 = vrcp.pop %v593
      %v595 = vmul.f32 %v593, %v594
      %v596 = vsub.f32 2.0, %v595
      %v597 = vmul.f32 %v594, %v596
      %598 = vset.pattern.permute.xlu0 1
      %599 = vperm.xlu0 %598, %v299
      %v600 = vpop.permute.xlu0 %599
      %v602 = vmul.f32 %v600, %v37
      %604 = vset.pattern.permute.xlu0 1
      %605 = vperm.xlu0 %604, %v388
      %v606 = vpop.permute.xlu0 %605
      %v608 = vmul.f32 %v606, %v40
      %v610 = vrot.slane %v608, 7
      %v612 = vadd.f32 %v602, %v610
      %614 = vset.pattern.permute.xlu0 1
      %615 = vperm.xlu0 %614, %v490
      %v616 = vpop.permute.xlu0 %615
      %v618 = vmul.f32 %v616, %v43
      %v620 = vrot.slane %v618, 7
      %v622 = vadd.f32 %v612, %v620
      %623 = vset.pattern.permute.xlu0 1
      %624 = vperm.xlu0 %623, %v362
      %v625 = vpop.permute.xlu0 %624
      %v627 = vmul.f32 %v625, %v46
      %v629 = vrot.slane %v627, 7
      %v631 = vadd.f32 %v622, %v629
      %v632 = vlaneseq
      %v633 = vshrl.u32 %v632, 7
      %v634 = vsub.s32 1, %v633
      %v635 = vrot.slane %v631, %v634
      %v636 = vmul.f32 %v635, %v51
      %637 = vset.pattern.permute.xlu0 0
      %638 = vperm.xlu0 %637, %v338
      %v639 = vpop.permute.xlu0 %638
      %v641 = vmul.f32 %v639, %v37
      %643 = vset.pattern.permute.xlu0 0
      %644 = vperm.xlu0 %643, %v412
      %v645 = vpop.permute.xlu0 %644
      %v647 = vmul.f32 %v645, %v40
      %v649 = vrot.slane %v647, 7
      %v651 = vadd.f32 %v641, %v649
      %653 = vset.pattern.permute.xlu0 0
      %654 = vperm.xlu0 %653, %v529
      %v655 = vpop.permute.xlu0 %654
      %v657 = vmul.f32 %v655, %v43
      %v659 = vrot.slane %v657, 7
      %v661 = vadd.f32 %v651, %v659
      %663 = vset.pattern.permute.xlu0 0
      %664 = vperm.xlu0 %663, %v337
      %v665 = vpop.permute.xlu0 %664
      %v667 = vmul.f32 %v665, %v46
      %v669 = vrot.slane %v667, 7
      %v671 = vadd.f32 %v661, %v669
      %v672 = vlaneseq
      %v673 = vshrl.u32 %v672, 7
      %v674 = vsub.s32 1, %v673
      %v675 = vrot.slane %v671, %v674
      %v676 = vmul.f32 %v675, %v54
      %v677 = vadd.f32 %v636, %v676
      %678 = vset.pattern.permute.xlu0 0
      %679 = vperm.xlu0 %678, %v361
      %v680 = vpop.permute.xlu0 %679
      %v682 = vmul.f32 %v680, %v37
      %684 = vset.pattern.permute.xlu0 0
      %685 = vperm.xlu0 %684, %v436
      %v686 = vpop.permute.xlu0 %685
      %v688 = vmul.f32 %v686, %v40
      %v690 = vrot.slane %v688, 7
      %v692 = vadd.f32 %v682, %v690
      %694 = vset.pattern.permute.xlu0 0
      %695 = vperm.xlu0 %694, %v552
      %v696 = vpop.permute.xlu0 %695
      %v698 = vmul.f32 %v696, %v43
      %v700 = vrot.slane %v698, 7
      %v702 = vadd.f32 %v692, %v700
      %704 = vset.pattern.permute.xlu0 0
      %705 = vperm.xlu0 %704, %v554
      %v706 = vpop.permute.xlu0 %705
      %v708 = vmul.f32 %v706, %v46
      %v710 = vrot.slane %v708, 7
      %v712 = vadd.f32 %v702, %v710
      %v713 = vlaneseq
      %v714 = vshrl.u32 %v713, 7
      %v715 = vsub.s32 1, %v714
      %v716 = vrot.slane %v712, %v715
      %v717 = vmul.f32 %v716, %v57
      %v718 = vadd.f32 %v677, %v717
      %719 = vset.pattern.permute.xlu0 0
      %720 = vperm.xlu0 %719, %v362
      %v721 = vpop.permute.xlu0 %720
      %v723 = vmul.f32 %v721, %v37
      %725 = vset.pattern.permute.xlu0 0
      %726 = vperm.xlu0 %725, %v387
      %v727 = vpop.permute.xlu0 %726
      %v729 = vmul.f32 %v727, %v40
      %v731 = vrot.slane %v729, 7
      %v733 = vadd.f32 %v723, %v731
      %735 = vset.pattern.permute.xlu0 0
      %736 = vperm.xlu0 %735, %v553
      %v737 = vpop.permute.xlu0 %736
      %v739 = vmul.f32 %v737, %v43
      %v741 = vrot.slane %v739, 7
      %v743 = vadd.f32 %v733, %v741
      %744 = vset.pattern.permute.xlu0 0
      %745 = vperm.xlu0 %744, %v299
      %v746 = vpop.permute.xlu0 %745
      %v748 = vmul.f32 %v746, %v46
      %v750 = vrot.slane %v748, 7
      %v752 = vadd.f32 %v743, %v750
      %v753 = vlaneseq
      %v754 = vshrl.u32 %v753, 7
      %v755 = vsub.s32 1, %v754
      %v756 = vrot.slane %v752, %v755
      %v757 = vmul.f32 %v756, %v60
      %v758 = vadd.f32 %v718, %v757
      %s760 = vtos %v597
      %v761 = vstv %s760
      %v763 = vmul.f32 %v758, %v761
      %764 = vmatprep.subr.mxu0 0.0
      %765 = vmatpush1.msra.mxu0 %v31
      %766 = vmatprep.subr.mxu0 0.0
      %767 = vmatpush1.msra.mxu0 %v32
      %768 = vmatprep.subr.mxu0 0.0
      %769 = vmatpush1.msra.mxu0 0.0
      %770 = vmatprep.subr.mxu0 0.0
      %771 = vmatpush1.msra.mxu0 0.0
      %772 = vmatprep.subr.mxu0 0.0
      %773 = vmatpush1.msra.mxu0 0.0
      %774 = vmatprep.subr.mxu0 0.0
      %775 = vmatpush1.msra.mxu0 0.0
      %776 = vmatprep.subr.mxu0 0.0
      %777 = vmatpush1.msra.mxu0 0.0
      %778 = vmatprep.subr.mxu0 0.0
      %779 = vmatpush1.msra.mxu0 0.0
      %780 = vmatprep.subr.mxu0 0.0
      %781 = vmatpush1.msra.mxu0 0.0
      %782 = vmatprep.subr.mxu0 0.0
      %783 = vmatpush1.msra.mxu0 0.0
      %784 = vmatprep.subr.mxu0 0.0
      %785 = vmatpush1.msra.mxu0 0.0
      %786 = vmatprep.subr.mxu0 0.0
      %787 = vmatpush1.msra.mxu0 0.0
      %788 = vmatprep.subr.mxu0 0.0
      %789 = vmatpush1.msra.mxu0 0.0
      %790 = vmatprep.subr.mxu0 0.0
      %791 = vmatpush1.msra.mxu0 0.0
      %792 = vmatprep.subr.mxu0 0.0
      %793 = vmatpush1.msra.mxu0 0.0
      %794 = vmatprep.subr.mxu0 0.0
      %795 = vmatpush1.msra.mxu0 0.0
      %796 = vmatprep.subr.mxu0 0.0
      %797 = vmatpush1.msra.mxu0 0.0
      %798 = vmatprep.subr.mxu0 0.0
      %799 = vmatpush1.msra.mxu0 0.0
      %800 = vmatprep.subr.mxu0 0.0
      %801 = vmatpush1.msra.mxu0 0.0
      %802 = vmatprep.subr.mxu0 0.0
      %803 = vmatpush1.msra.mxu0 0.0
      %804 = vmatprep.subr.mxu0 0.0
      %805 = vmatpush1.msra.mxu0 0.0
      %806 = vmatprep.subr.mxu0 0.0
      %807 = vmatpush1.msra.mxu0 0.0
      %808 = vmatprep.subr.mxu0 0.0
      %809 = vmatpush1.msra.mxu0 0.0
      %810 = vmatprep.subr.mxu0 0.0
      %811 = vmatpush1.msra.mxu0 0.0
      %812 = vmatprep.subr.mxu0 0.0
      %813 = vmatpush1.msra.mxu0 0.0
      %814 = vmatprep.subr.mxu0 0.0
      %815 = vmatpush1.msra.mxu0 0.0
      %816 = vmatprep.subr.mxu0 0.0
      %817 = vmatpush1.msra.mxu0 0.0
      %818 = vmatprep.subr.mxu0 0.0
      %819 = vmatpush1.msra.mxu0 0.0
      %820 = vmatprep.subr.mxu0 0.0
      %821 = vmatpush1.msra.mxu0 0.0
      %822 = vmatprep.subr.mxu0 0.0
      %823 = vmatpush1.msra.mxu0 0.0
      %824 = vmatprep.subr.mxu0 0.0
      %825 = vmatpush1.msra.mxu0 0.0
      %826 = vmatprep.subr.mxu0 0.0
      %827 = vmatpush1.msra.mxu0 0.0
      %828 = vmatprep.mubr.f32.mxu0 0.0
      %829 = vmatmul.mubr.f32.gmra.mrb[0].mxu0 %v169
      %v830 = vpop.f32.mrb[0].mxu0
      %v831 = vadd.f32 0.0, %v830
      %v832 = vpop.f32.mrb[0].mxu0
      %833 = vdwg.mxu0
      %vm834 = vcmask 31744
      %v836 = vsel %vm834, %v763, 0
      %vm838 = vcmask 1043456
      %v840 = vsel %vm838, %v831, 0
      %842 = vmatprep.subr.mxu0 0.0
      %843 = vmatpush1.msra.mxu0 %v840
      %844 = vmatprep.subr.mxu0 0.0
      %845 = vmatpush1.msra.mxu0 0.0
      %846 = vmatprep.subr.mxu0 0.0
      %847 = vmatpush1.msra.mxu0 0.0
      %848 = vmatprep.subr.mxu0 0.0
      %849 = vmatpush1.msra.mxu0 0.0
      %850 = vmatprep.subr.mxu0 0.0
      %851 = vmatpush1.msra.mxu0 0.0
      %852 = vmatprep.subr.mxu0 0.0
      %853 = vmatpush1.msra.mxu0 0.0
      %854 = vmatprep.subr.mxu0 0.0
      %855 = vmatpush1.msra.mxu0 0.0
      %856 = vmatprep.subr.mxu0 0.0
      %857 = vmatpush1.msra.mxu0 0.0
      %858 = vmatprep.subr.mxu0 0.0
      %859 = vmatpush1.msra.mxu0 0.0
      %860 = vmatprep.subr.mxu0 0.0
      %861 = vmatpush1.msra.mxu0 0.0
      %862 = vmatprep.subr.mxu0 0.0
      %863 = vmatpush1.msra.mxu0 0.0
      %864 = vmatprep.subr.mxu0 0.0
      %865 = vmatpush1.msra.mxu0 0.0
      %866 = vmatprep.subr.mxu0 0.0
      %867 = vmatpush1.msra.mxu0 0.0
      %868 = vmatprep.subr.mxu0 0.0
      %869 = vmatpush1.msra.mxu0 0.0
      %870 = vmatprep.subr.mxu0 0.0
      %871 = vmatpush1.msra.mxu0 0.0
      %872 = vmatprep.subr.mxu0 0.0
      %873 = vmatpush1.msra.mxu0 0.0
      %874 = vmatprep.subr.mxu0 0.0
      %875 = vmatpush1.msra.mxu0 0.0
      %876 = vmatprep.subr.mxu0 0.0
      %877 = vmatpush1.msra.mxu0 0.0
      %878 = vmatprep.subr.mxu0 0.0
      %879 = vmatpush1.msra.mxu0 0.0
      %880 = vmatprep.subr.mxu0 0.0
      %881 = vmatpush1.msra.mxu0 0.0
      %882 = vmatprep.subr.mxu0 0.0
      %883 = vmatpush1.msra.mxu0 0.0
      %884 = vmatprep.subr.mxu0 0.0
      %885 = vmatpush1.msra.mxu0 0.0
      %886 = vmatprep.subr.mxu0 0.0
      %887 = vmatpush1.msra.mxu0 0.0
      %888 = vmatprep.subr.mxu0 0.0
      %889 = vmatpush1.msra.mxu0 0.0
      %890 = vmatprep.subr.mxu0 0.0
      %891 = vmatpush1.msra.mxu0 0.0
      %892 = vmatprep.subr.mxu0 0.0
      %893 = vmatpush1.msra.mxu0 0.0
      %894 = vmatprep.subr.mxu0 0.0
      %895 = vmatpush1.msra.mxu0 0.0
      %896 = vmatprep.subr.mxu0 0.0
      %897 = vmatpush1.msra.mxu0 0.0
      %898 = vmatprep.subr.mxu0 0.0
      %899 = vmatpush1.msra.mxu0 0.0
      %900 = vmatprep.subr.mxu0 0.0
      %901 = vmatpush1.msra.mxu0 0.0
      %902 = vmatprep.subr.mxu0 0.0
      %903 = vmatpush1.msra.mxu0 0.0
      %904 = vmatprep.subr.mxu0 0.0
      %905 = vmatpush1.msra.mxu0 0.0
      %906 = vmatprep.mubr.f32.mxu0 0.0
      %907 = vmatmul.mubr.f32.gmra.mrb[0].mxu0 %v836
      %v908 = vpop.f32.mrb[0].mxu0
      %v909 = vadd.f32 0.0, %v908
      %v910 = vpop.f32.mrb[0].mxu0
      %911 = vdwg.mxu0
      %v912 = vmul.f32 %v763, 32.0
      %v914 = vsel %vm66, %v909, 0
      %916 = vmatprep.subr.mxu0 0.0
      %917 = vmatpush1.xpose.msra.mxu0 %v914
      %918 = vmatprep.subr.mxu0 0.0
      %919 = vmatpush1.xpose.msra.mxu0 0.0
      %920 = vmatprep.subr.mxu0 0.0
      %921 = vmatpush1.xpose.msra.mxu0 0.0
      %922 = vmatprep.subr.mxu0 0.0
      %923 = vmatpush1.xpose.msra.mxu0 0.0
      %924 = vmatprep.subr.mxu0 0.0
      %925 = vmatpush1.xpose.msra.mxu0 0.0
      %926 = vmatprep.subr.mxu0 0.0
      %927 = vmatpush1.xpose.msra.mxu0 0.0
      %928 = vmatprep.subr.mxu0 0.0
      %929 = vmatpush1.xpose.msra.mxu0 0.0
      %930 = vmatprep.subr.mxu0 0.0
      %931 = vmatpush1.xpose.msra.mxu0 0.0
      %932 = vmatprep.subr.mxu0 0.0
      %933 = vmatpush1.xpose.msra.mxu0 0.0
      %934 = vmatprep.subr.mxu0 0.0
      %935 = vmatpush1.xpose.msra.mxu0 0.0
      %936 = vmatprep.subr.mxu0 0.0
      %937 = vmatpush1.xpose.msra.mxu0 0.0
      %938 = vmatprep.subr.mxu0 0.0
      %939 = vmatpush1.xpose.msra.mxu0 0.0
      %940 = vmatprep.subr.mxu0 0.0
      %941 = vmatpush1.xpose.msra.mxu0 0.0
      %942 = vmatprep.subr.mxu0 0.0
      %943 = vmatpush1.xpose.msra.mxu0 0.0
      %944 = vmatprep.subr.mxu0 0.0
      %945 = vmatpush1.xpose.msra.mxu0 0.0
      %946 = vmatprep.subr.mxu0 0.0
      %947 = vmatpush1.xpose.msra.mxu0 0.0
      %948 = vmatprep.subr.mxu0 0.0
      %949 = vmatpush1.xpose.msra.mxu0 0.0
      %950 = vmatprep.subr.mxu0 0.0
      %951 = vmatpush1.xpose.msra.mxu0 0.0
      %952 = vmatprep.subr.mxu0 0.0
      %953 = vmatpush1.xpose.msra.mxu0 0.0
      %954 = vmatprep.subr.mxu0 0.0
      %955 = vmatpush1.xpose.msra.mxu0 0.0
      %956 = vmatprep.subr.mxu0 0.0
      %957 = vmatpush1.xpose.msra.mxu0 0.0
      %958 = vmatprep.subr.mxu0 0.0
      %959 = vmatpush1.xpose.msra.mxu0 0.0
      %960 = vmatprep.subr.mxu0 0.0
      %961 = vmatpush1.xpose.msra.mxu0 0.0
      %962 = vmatprep.subr.mxu0 0.0
      %963 = vmatpush1.xpose.msra.mxu0 0.0
      %964 = vmatprep.subr.mxu0 0.0
      %965 = vmatpush1.xpose.msra.mxu0 0.0
      %966 = vmatprep.subr.mxu0 0.0
      %967 = vmatpush1.xpose.msra.mxu0 0.0
      %968 = vmatprep.subr.mxu0 0.0
      %969 = vmatpush1.xpose.msra.mxu0 0.0
      %970 = vmatprep.subr.mxu0 0.0
      %971 = vmatpush1.xpose.msra.mxu0 0.0
      %972 = vmatprep.subr.mxu0 0.0
      %973 = vmatpush1.xpose.msra.mxu0 0.0
      %974 = vmatprep.subr.mxu0 0.0
      %975 = vmatpush1.xpose.msra.mxu0 0.0
      %976 = vmatprep.subr.mxu0 0.0
      %977 = vmatpush1.xpose.msra.mxu0 0.0
      %978 = vmatprep.subr.mxu0 0.0
      %979 = vmatpush1.xpose.msra.mxu0 0.0
      %980 = vmatprep.mubr.f32.mxu0 0.0
      %981 = vmatmul.mubr.f32.gmra.mrb[0].mxu0 %v914
      %v982 = vpop.f32.mrb[0].mxu0
      %v983 = vadd.f32 0.0, %v982
      %v984 = vpop.f32.mrb[0].mxu0
      %985 = vdwg.mxu0
      %v986 = vadd.f32 %v912, %v983
      %v988 = vsel %vm66, %v31, 0
      %v991 = vsel %vm66, %v32, 0
      %993 = vmatprep.subr.mxu0 0.0
      %994 = vmatpush1.xpose.msra.mxu0 %v988
      %995 = vmatprep.subr.mxu0 0.0
      %996 = vmatpush1.xpose.msra.mxu0 %v991
      %997 = vmatprep.subr.mxu0 0.0
      %998 = vmatpush1.xpose.msra.mxu0 0.0
      %999 = vmatprep.subr.mxu0 0.0
      %1000 = vmatpush1.xpose.msra.mxu0 0.0
      %1001 = vmatprep.subr.mxu0 0.0
      %1002 = vmatpush1.xpose.msra.mxu0 0.0
      %1003 = vmatprep.subr.mxu0 0.0
      %1004 = vmatpush1.xpose.msra.mxu0 0.0
      %1005 = vmatprep.subr.mxu0 0.0
      %1006 = vmatpush1.xpose.msra.mxu0 0.0
      %1007 = vmatprep.subr.mxu0 0.0
      %1008 = vmatpush1.xpose.msra.mxu0 0.0
      %1009 = vmatprep.subr.mxu0 0.0
      %1010 = vmatpush1.xpose.msra.mxu0 0.0
      %1011 = vmatprep.subr.mxu0 0.0
      %1012 = vmatpush1.xpose.msra.mxu0 0.0
      %1013 = vmatprep.subr.mxu0 0.0
      %1014 = vmatpush1.xpose.msra.mxu0 0.0
      %1015 = vmatprep.subr.mxu0 0.0
      %1016 = vmatpush1.xpose.msra.mxu0 0.0
      %1017 = vmatprep.subr.mxu0 0.0
      %1018 = vmatpush1.xpose.msra.mxu0 0.0
      %1019 = vmatprep.subr.mxu0 0.0
      %1020 = vmatpush1.xpose.msra.mxu0 0.0
      %1021 = vmatprep.subr.mxu0 0.0
      %1022 = vmatpush1.xpose.msra.mxu0 0.0
      %1023 = vmatprep.subr.mxu0 0.0
      %1024 = vmatpush1.xpose.msra.mxu0 0.0
      %1025 = vmatprep.subr.mxu0 0.0
      %1026 = vmatpush1.xpose.msra.mxu0 0.0
      %1027 = vmatprep.subr.mxu0 0.0
      %1028 = vmatpush1.xpose.msra.mxu0 0.0
      %1029 = vmatprep.subr.mxu0 0.0
      %1030 = vmatpush1.xpose.msra.mxu0 0.0
      %1031 = vmatprep.subr.mxu0 0.0
      %1032 = vmatpush1.xpose.msra.mxu0 0.0
      %1033 = vmatprep.subr.mxu0 0.0
      %1034 = vmatpush1.xpose.msra.mxu0 0.0
      %1035 = vmatprep.subr.mxu0 0.0
      %1036 = vmatpush1.xpose.msra.mxu0 0.0
      %1037 = vmatprep.subr.mxu0 0.0
      %1038 = vmatpush1.xpose.msra.mxu0 0.0
      %1039 = vmatprep.subr.mxu0 0.0
      %1040 = vmatpush1.xpose.msra.mxu0 0.0
      %1041 = vmatprep.subr.mxu0 0.0
      %1042 = vmatpush1.xpose.msra.mxu0 0.0
      %1043 = vmatprep.subr.mxu0 0.0
      %1044 = vmatpush1.xpose.msra.mxu0 0.0
      %1045 = vmatprep.subr.mxu0 0.0
      %1046 = vmatpush1.xpose.msra.mxu0 0.0
      %1047 = vmatprep.subr.mxu0 0.0
      %1048 = vmatpush1.xpose.msra.mxu0 0.0
      %1049 = vmatprep.subr.mxu0 0.0
      %1050 = vmatpush1.xpose.msra.mxu0 0.0
      %1051 = vmatprep.subr.mxu0 0.0
      %1052 = vmatpush1.xpose.msra.mxu0 0.0
      %1053 = vmatprep.subr.mxu0 0.0
      %1054 = vmatpush1.xpose.msra.mxu0 0.0
      %1055 = vmatprep.subr.mxu0 0.0
      %1056 = vmatpush1.xpose.msra.mxu0 0.0
      %1057 = vmatprep.mubr.f32.mxu0 0.0
      %1058 = vmatmul.mubr.f32.gmra.mrb[0].mxu0 %v914
      %v1059 = vpop.f32.mrb[0].mxu0
      %v1060 = vadd.f32 0.0, %v1059
      %v1061 = vpop.f32.mrb[0].mxu0
      %1062 = vdwg.mxu0
      %v1064 = vrot.slane %v986, 1
      %1065 = vrot.lane.b32.xlu0 %v1064, 127
      %v1066 = vpop.permute.xlu0 %1065
      %v1068 = vmul.f32 %v986, %v1066
      %1069 = vrot.lane.b32.xlu0 %v1064, 1
      %v1070 = vpop.permute.xlu0 %1069
      %v1072 = vmul.f32 %v986, %v1070
      %1074 = vrot.lane.b32.xlu0 %v1072, 127
      %v1075 = vpop.permute.xlu0 %1074
      %v1077 = vsub.f32 %v1068, %v1075
      %v1079 = vrot.slane %v1077, 1
      %1080 = vrot.lane.b32.xlu0 %v1079, 127
      %v1081 = vpop.permute.xlu0 %1080
      %v1083 = vmul.f32 %v986, %v1081
      %1084 = vrot.lane.b32.xlu0 %v1064, 126
      %v1085 = vpop.permute.xlu0 %1084
      %v1087 = vmul.f32 %v986, %v1085
      %1088 = vrot.lane.b32.xlu0 %v1064, 2
      %v1089 = vpop.permute.xlu0 %1088
      %v1091 = vmul.f32 %v986, %v1089
      %1093 = vrot.lane.b32.xlu0 %v1091, 126
      %v1094 = vpop.permute.xlu0 %1093
      %v1096 = vsub.f32 %v1087, %v1094
      %v1098 = vrot.slane %v1096, 1
      %1099 = vrot.lane.b32.xlu0 %v1098, 1
      %v1100 = vpop.permute.xlu0 %1099
      %v1102 = vmul.f32 %v986, %v1100
      %v1103 = vsub.f32 0.0, %v1102
      %1105 = vrot.lane.b32.xlu0 %v1103, 127
      %v1106 = vpop.permute.xlu0 %1105
      %v1108 = vadd.f32 %v1083, %v1106
      %1109 = vrot.lane.b32.xlu0 %v1079, 2
      %v1110 = vpop.permute.xlu0 %1109
      %v1112 = vmul.f32 %v986, %v1110
      %1114 = vrot.lane.b32.xlu0 %v1112, 126
      %v1115 = vpop.permute.xlu0 %1114
      %v1117 = vadd.f32 %v1108, %v1115
      %1118 = vrot.lane.b32.xlu0 %v1079, 126
      %v1119 = vpop.permute.xlu0 %1118
      %v1121 = vmul.f32 %v986, %v1119
      %1122 = vrot.lane.b32.xlu0 %v1064, 125
      %v1123 = vpop.permute.xlu0 %1122
      %v1125 = vmul.f32 %v986, %v1123
      %1126 = vrot.lane.b32.xlu0 %v1064, 3
      %v1127 = vpop.permute.xlu0 %1126
      %v1129 = vmul.f32 %v986, %v1127
      %1131 = vrot.lane.b32.xlu0 %v1129, 125
      %v1132 = vpop.permute.xlu0 %1131
      %v1134 = vsub.f32 %v1125, %v1132
      %v1136 = vrot.slane %v1134, 1
      %1137 = vrot.lane.b32.xlu0 %v1136, 2
      %v1138 = vpop.permute.xlu0 %1137
      %v1140 = vmul.f32 %v986, %v1138
      %v1141 = vsub.f32 0.0, %v1140
      %1143 = vrot.lane.b32.xlu0 %v1141, 126
      %v1144 = vpop.permute.xlu0 %1143
      %v1146 = vadd.f32 %v1121, %v1144
      %1147 = vrot.lane.b32.xlu0 %v1098, 3
      %v1148 = vpop.permute.xlu0 %1147
      %v1150 = vmul.f32 %v986, %v1148
      %1152 = vrot.lane.b32.xlu0 %v1150, 125
      %v1153 = vpop.permute.xlu0 %1152
      %v1155 = vadd.f32 %v1146, %v1153
      %v1156 = vsub.f32 0.0, %v1155
      %1157 = vrot.lane.b32.xlu0 %v1098, 127
      %v1158 = vpop.permute.xlu0 %1157
      %v1160 = vmul.f32 %v986, %v1158
      %1161 = vrot.lane.b32.xlu0 %v1136, 1
      %v1162 = vpop.permute.xlu0 %1161
      %v1164 = vmul.f32 %v986, %v1162
      %v1165 = vsub.f32 0.0, %v1164
      %1167 = vrot.lane.b32.xlu0 %v1165, 127
      %v1168 = vpop.permute.xlu0 %1167
      %v1170 = vadd.f32 %v1160, %v1168
      %1171 = vrot.lane.b32.xlu0 %v1079, 3
      %v1172 = vpop.permute.xlu0 %1171
      %v1174 = vmul.f32 %v986, %v1172
      %1176 = vrot.lane.b32.xlu0 %v1174, 125
      %v1177 = vpop.permute.xlu0 %1176
      %v1179 = vadd.f32 %v1170, %v1177
      %v1180 = vsub.f32 0.0, %v1117
      %v1181 = vrot.slane %v1077, 2
      %1182 = vrot.lane.b32.xlu0 %v1181, 127
      %v1183 = vpop.permute.xlu0 %1182
      %v1185 = vmul.f32 %v986, %v1183
      %v1186 = vrot.slane %v1096, 2
      %1187 = vrot.lane.b32.xlu0 %v1186, 1
      %v1188 = vpop.permute.xlu0 %1187
      %v1190 = vmul.f32 %v986, %v1188
      %v1191 = vsub.f32 0.0, %v1190
      %1193 = vrot.lane.b32.xlu0 %v1191, 127
      %v1194 = vpop.permute.xlu0 %1193
      %v1196 = vadd.f32 %v1185, %v1194
      %1197 = vrot.lane.b32.xlu0 %v1181, 2
      %v1198 = vpop.permute.xlu0 %1197
      %v1200 = vmul.f32 %v986, %v1198
      %1202 = vrot.lane.b32.xlu0 %v1200, 126
      %v1203 = vpop.permute.xlu0 %1202
      %v1205 = vadd.f32 %v1196, %v1203
      %v1206 = vsub.f32 0.0, %v1205
      %1207 = vrot.lane.b32.xlu0 %v1181, 126
      %v1208 = vpop.permute.xlu0 %1207
      %v1210 = vmul.f32 %v986, %v1208
      %v1211 = vrot.slane %v1134, 2
      %1212 = vrot.lane.b32.xlu0 %v1211, 2
      %v1213 = vpop.permute.xlu0 %1212
      %v1215 = vmul.f32 %v986, %v1213
      %v1216 = vsub.f32 0.0, %v1215
      %1218 = vrot.lane.b32.xlu0 %v1216, 126
      %v1219 = vpop.permute.xlu0 %1218
      %v1221 = vadd.f32 %v1210, %v1219
      %1222 = vrot.lane.b32.xlu0 %v1186, 3
      %v1223 = vpop.permute.xlu0 %1222
      %v1225 = vmul.f32 %v986, %v1223
      %1227 = vrot.lane.b32.xlu0 %v1225, 125
      %v1228 = vpop.permute.xlu0 %1227
      %v1230 = vadd.f32 %v1221, %v1228
      %1231 = vrot.lane.b32.xlu0 %v1186, 127
      %v1232 = vpop.permute.xlu0 %1231
      %v1234 = vmul.f32 %v986, %v1232
      %1235 = vrot.lane.b32.xlu0 %v1211, 1
      %v1236 = vpop.permute.xlu0 %1235
      %v1238 = vmul.f32 %v986, %v1236
      %v1239 = vsub.f32 0.0, %v1238
      %1241 = vrot.lane.b32.xlu0 %v1239, 127
      %v1242 = vpop.permute.xlu0 %1241
      %v1244 = vadd.f32 %v1234, %v1242
      %1245 = vrot.lane.b32.xlu0 %v1181, 3
      %v1246 = vpop.permute.xlu0 %1245
      %v1248 = vmul.f32 %v986, %v1246
      %1250 = vrot.lane.b32.xlu0 %v1248, 125
      %v1251 = vpop.permute.xlu0 %1250
      %v1253 = vadd.f32 %v1244, %v1251
      %v1254 = vsub.f32 0.0, %v1253
      %v1255 = vrot.slane %v986, 2
      %1256 = vrot.lane.b32.xlu0 %v1255, 127
      %v1257 = vpop.permute.xlu0 %1256
      %v1259 = vmul.f32 %v986, %v1257
      %1260 = vrot.lane.b32.xlu0 %v1255, 1
      %v1261 = vpop.permute.xlu0 %1260
      %v1263 = vmul.f32 %v986, %v1261
      %1265 = vrot.lane.b32.xlu0 %v1263, 127
      %v1266 = vpop.permute.xlu0 %1265
      %v1268 = vsub.f32 %v1259, %v1266
      %v1270 = vrot.slane %v1268, 1
      %1271 = vrot.lane.b32.xlu0 %v1270, 127
      %v1272 = vpop.permute.xlu0 %1271
      %v1274 = vmul.f32 %v986, %v1272
      %1275 = vrot.lane.b32.xlu0 %v1255, 126
      %v1276 = vpop.permute.xlu0 %1275
      %v1278 = vmul.f32 %v986, %v1276
      %1279 = vrot.lane.b32.xlu0 %v1255, 2
      %v1280 = vpop.permute.xlu0 %1279
      %v1282 = vmul.f32 %v986, %v1280
      %1284 = vrot.lane.b32.xlu0 %v1282, 126
      %v1285 = vpop.permute.xlu0 %1284
      %v1287 = vsub.f32 %v1278, %v1285
      %v1289 = vrot.slane %v1287, 1
      %1290 = vrot.lane.b32.xlu0 %v1289, 1
      %v1291 = vpop.permute.xlu0 %1290
      %v1293 = vmul.f32 %v986, %v1291
      %v1294 = vsub.f32 0.0, %v1293
      %1296 = vrot.lane.b32.xlu0 %v1294, 127
      %v1297 = vpop.permute.xlu0 %1296
      %v1299 = vadd.f32 %v1274, %v1297
      %1300 = vrot.lane.b32.xlu0 %v1270, 2
      %v1301 = vpop.permute.xlu0 %1300
      %v1303 = vmul.f32 %v986, %v1301
      %1305 = vrot.lane.b32.xlu0 %v1303, 126
      %v1306 = vpop.permute.xlu0 %1305
      %v1308 = vadd.f32 %v1299, %v1306
      %1309 = vrot.lane.b32.xlu0 %v1270, 126
      %v1310 = vpop.permute.xlu0 %1309
      %v1312 = vmul.f32 %v986, %v1310
      %1313 = vrot.lane.b32.xlu0 %v1255, 125
      %v1314 = vpop.permute.xlu0 %1313
      %v1316 = vmul.f32 %v986, %v1314
      %1317 = vrot.lane.b32.xlu0 %v1255, 3
      %v1318 = vpop.permute.xlu0 %1317
      %v1320 = vmul.f32 %v986, %v1318
      %1322 = vrot.lane.b32.xlu0 %v1320, 125
      %v1323 = vpop.permute.xlu0 %1322
      %v1325 = vsub.f32 %v1316, %v1323
      %v1327 = vrot.slane %v1325, 1
      %1328 = vrot.lane.b32.xlu0 %v1327, 2
      %v1329 = vpop.permute.xlu0 %1328
      %v1331 = vmul.f32 %v986, %v1329
      %v1332 = vsub.f32 0.0, %v1331
      %1334 = vrot.lane.b32.xlu0 %v1332, 126
      %v1335 = vpop.permute.xlu0 %1334
      %v1337 = vadd.f32 %v1312, %v1335
      %1338 = vrot.lane.b32.xlu0 %v1289, 3
      %v1339 = vpop.permute.xlu0 %1338
      %v1341 = vmul.f32 %v986, %v1339
      %1343 = vrot.lane.b32.xlu0 %v1341, 125
      %v1344 = vpop.permute.xlu0 %1343
      %v1346 = vadd.f32 %v1337, %v1344
      %v1347 = vsub.f32 0.0, %v1346
      %1348 = vrot.lane.b32.xlu0 %v1289, 127
      %v1349 = vpop.permute.xlu0 %1348
      %v1351 = vmul.f32 %v986, %v1349
      %1352 = vrot.lane.b32.xlu0 %v1327, 1
      %v1353 = vpop.permute.xlu0 %1352
      %v1355 = vmul.f32 %v986, %v1353
      %v1356 = vsub.f32 0.0, %v1355
      %1358 = vrot.lane.b32.xlu0 %v1356, 127
      %v1359 = vpop.permute.xlu0 %1358
      %v1361 = vadd.f32 %v1351, %v1359
      %1362 = vrot.lane.b32.xlu0 %v1270, 3
      %v1363 = vpop.permute.xlu0 %1362
      %v1365 = vmul.f32 %v986, %v1363
      %1367 = vrot.lane.b32.xlu0 %v1365, 125
      %v1368 = vpop.permute.xlu0 %1367
      %v1370 = vadd.f32 %v1361, %v1368
      %v1371 = vsub.f32 0.0, %v1308
      %v1372 = vsub.f32 0.0, %v1179
      %v1374 = vrot.slane %v1117, 1
      %1375 = vrot.lane.b32.xlu0 %v1374, 127
      %v1376 = vpop.permute.xlu0 %1375
      %v1378 = vmul.f32 %v986, %v1376
      %v1380 = vrot.slane %v1156, 1
      %1381 = vrot.lane.b32.xlu0 %v1380, 1
      %v1382 = vpop.permute.xlu0 %1381
      %v1384 = vmul.f32 %v986, %v1382
      %1386 = vrot.lane.b32.xlu0 %v1384, 127
      %v1387 = vpop.permute.xlu0 %1386
      %v1389 = vadd.f32 %v1378, %v1387
      %v1391 = vrot.slane %v1179, 1
      %1392 = vrot.lane.b32.xlu0 %v1391, 2
      %v1393 = vpop.permute.xlu0 %1392
      %v1395 = vmul.f32 %v986, %v1393
      %1397 = vrot.lane.b32.xlu0 %v1395, 126
      %v1398 = vpop.permute.xlu0 %1397
      %v1400 = vadd.f32 %v1389, %v1398
      %v1402 = vrot.slane %v1180, 1
      %1403 = vrot.lane.b32.xlu0 %v1402, 3
      %v1404 = vpop.permute.xlu0 %1403
      %v1406 = vmul.f32 %v986, %v1404
      %1408 = vrot.lane.b32.xlu0 %v1406, 125
      %v1409 = vpop.permute.xlu0 %1408
      %v1411 = vadd.f32 %v1400, %v1409
      %v1412 = vrcp.pop %v1411
      %v1413 = vmul.f32 %v1411, %v1412
      %v1414 = vsub.f32 2.0, %v1413
      %v1415 = vmul.f32 %v1412, %v1414
      %1416 = vset.pattern.permute.xlu0 1
      %1417 = vperm.xlu0 %1416, %v1117
      %v1418 = vpop.permute.xlu0 %1417
      %v1420 = vmul.f32 %v1418, %v37
      %1422 = vset.pattern.permute.xlu0 1
      %1423 = vperm.xlu0 %1422, %v1206
      %v1424 = vpop.permute.xlu0 %1423
      %v1426 = vmul.f32 %v1424, %v40
      %v1428 = vrot.slane %v1426, 7
      %v1430 = vadd.f32 %v1420, %v1428
      %1432 = vset.pattern.permute.xlu0 1
      %1433 = vperm.xlu0 %1432, %v1308
      %v1434 = vpop.permute.xlu0 %1433
      %v1436 = vmul.f32 %v1434, %v43
      %v1438 = vrot.slane %v1436, 7
      %v1440 = vadd.f32 %v1430, %v1438
      %1441 = vset.pattern.permute.xlu0 1
      %1442 = vperm.xlu0 %1441, %v1180
      %v1443 = vpop.permute.xlu0 %1442
      %v1445 = vmul.f32 %v1443, %v46
      %v1447 = vrot.slane %v1445, 7
      %v1449 = vadd.f32 %v1440, %v1447
      %v1450 = vlaneseq
      %v1451 = vshrl.u32 %v1450, 7
      %v1452 = vsub.s32 1, %v1451
      %v1453 = vrot.slane %v1449, %v1452
      %v1454 = vmul.f32 %v1453, %v51
      %1455 = vset.pattern.permute.xlu0 0
      %1456 = vperm.xlu0 %1455, %v1156
      %v1457 = vpop.permute.xlu0 %1456
      %v1459 = vmul.f32 %v1457, %v37
      %1461 = vset.pattern.permute.xlu0 0
      %1462 = vperm.xlu0 %1461, %v1230
      %v1463 = vpop.permute.xlu0 %1462
      %v1465 = vmul.f32 %v1463, %v40
      %v1467 = vrot.slane %v1465, 7
      %v1469 = vadd.f32 %v1459, %v1467
      %1471 = vset.pattern.permute.xlu0 0
      %1472 = vperm.xlu0 %1471, %v1347
      %v1473 = vpop.permute.xlu0 %1472
      %v1475 = vmul.f32 %v1473, %v43
      %v1477 = vrot.slane %v1475, 7
      %v1479 = vadd.f32 %v1469, %v1477
      %1481 = vset.pattern.permute.xlu0 0
      %1482 = vperm.xlu0 %1481, %v1155
      %v1483 = vpop.permute.xlu0 %1482
      %v1485 = vmul.f32 %v1483, %v46
      %v1487 = vrot.slane %v1485, 7
      %v1489 = vadd.f32 %v1479, %v1487
      %v1490 = vlaneseq
      %v1491 = vshrl.u32 %v1490, 7
      %v1492 = vsub.s32 1, %v1491
      %v1493 = vrot.slane %v1489, %v1492
      %v1494 = vmul.f32 %v1493, %v54
      %v1495 = vadd.f32 %v1454, %v1494
      %1496 = vset.pattern.permute.xlu0 0
      %1497 = vperm.xlu0 %1496, %v1179
      %v1498 = vpop.permute.xlu0 %1497
      %v1500 = vmul.f32 %v1498, %v37
      %1502 = vset.pattern.permute.xlu0 0
      %1503 = vperm.xlu0 %1502, %v1254
      %v1504 = vpop.permute.xlu0 %1503
      %v1506 = vmul.f32 %v1504, %v40
      %v1508 = vrot.slane %v1506, 7
      %v1510 = vadd.f32 %v1500, %v1508
      %1512 = vset.pattern.permute.xlu0 0
      %1513 = vperm.xlu0 %1512, %v1370
      %v1514 = vpop.permute.xlu0 %1513
      %v1516 = vmul.f32 %v1514, %v43
      %v1518 = vrot.slane %v1516, 7
      %v1520 = vadd.f32 %v1510, %v1518
      %1522 = vset.pattern.permute.xlu0 0
      %1523 = vperm.xlu0 %1522, %v1372
      %v1524 = vpop.permute.xlu0 %1523
      %v1526 = vmul.f32 %v1524, %v46
      %v1528 = vrot.slane %v1526, 7
      %v1530 = vadd.f32 %v1520, %v1528
      %v1531 = vlaneseq
      %v1532 = vshrl.u32 %v1531, 7
      %v1533 = vsub.s32 1, %v1532
      %v1534 = vrot.slane %v1530, %v1533
      %v1535 = vmul.f32 %v1534, %v57
      %v1536 = vadd.f32 %v1495, %v1535
      %1537 = vset.pattern.permute.xlu0 0
      %1538 = vperm.xlu0 %1537, %v1180
      %v1539 = vpop.permute.xlu0 %1538
      %v1541 = vmul.f32 %v1539, %v37
      %1543 = vset.pattern.permute.xlu0 0
      %1544 = vperm.xlu0 %1543, %v1205
      %v1545 = vpop.permute.xlu0 %1544
      %v1547 = vmul.f32 %v1545, %v40
      %v1549 = vrot.slane %v1547, 7
      %v1551 = vadd.f32 %v1541, %v1549
      %1553 = vset.pattern.permute.xlu0 0
      %1554 = vperm.xlu0 %1553, %v1371
      %v1555 = vpop.permute.xlu0 %1554
      %v1557 = vmul.f32 %v1555, %v43
      %v1559 = vrot.slane %v1557, 7
      %v1561 = vadd.f32 %v1551, %v1559
      %1562 = vset.pattern.permute.xlu0 0
      %1563 = vperm.xlu0 %1562, %v1117
      %v1564 = vpop.permute.xlu0 %1563
      %v1566 = vmul.f32 %v1564, %v46
      %v1568 = vrot.slane %v1566, 7
      %v1570 = vadd.f32 %v1561, %v1568
      %v1571 = vlaneseq
      %v1572 = vshrl.u32 %v1571, 7
      %v1573 = vsub.s32 1, %v1572
      %v1574 = vrot.slane %v1570, %v1573
      %v1575 = vmul.f32 %v1574, %v60
      %v1576 = vadd.f32 %v1536, %v1575
      %s1578 = vtos %v1415
      %v1579 = vstv %s1578
      %v1581 = vmul.f32 %v1576, %v1579
      %v1583 = vsel %vm834, %v1581, 0
      %v1586 = vsel %vm838, %v1060, 0
      %1588 = vmatprep.subr.mxu0 0.0
      %1589 = vmatpush1.msra.mxu0 %v1586
      %1590 = vmatprep.subr.mxu0 0.0
      %1591 = vmatpush1.msra.mxu0 0.0
      %1592 = vmatprep.subr.mxu0 0.0
      %1593 = vmatpush1.msra.mxu0 0.0
      %1594 = vmatprep.subr.mxu0 0.0
      %1595 = vmatpush1.msra.mxu0 0.0
      %1596 = vmatprep.subr.mxu0 0.0
      %1597 = vmatpush1.msra.mxu0 0.0
      %1598 = vmatprep.subr.mxu0 0.0
      %1599 = vmatpush1.msra.mxu0 0.0
      %1600 = vmatprep.subr.mxu0 0.0
      %1601 = vmatpush1.msra.mxu0 0.0
      %1602 = vmatprep.subr.mxu0 0.0
      %1603 = vmatpush1.msra.mxu0 0.0
      %1604 = vmatprep.subr.mxu0 0.0
      %1605 = vmatpush1.msra.mxu0 0.0
      %1606 = vmatprep.subr.mxu0 0.0
      %1607 = vmatpush1.msra.mxu0 0.0
      %1608 = vmatprep.subr.mxu0 0.0
      %1609 = vmatpush1.msra.mxu0 0.0
      %1610 = vmatprep.subr.mxu0 0.0
      %1611 = vmatpush1.msra.mxu0 0.0
      %1612 = vmatprep.subr.mxu0 0.0
      %1613 = vmatpush1.msra.mxu0 0.0
      %1614 = vmatprep.subr.mxu0 0.0
      %1615 = vmatpush1.msra.mxu0 0.0
      %1616 = vmatprep.subr.mxu0 0.0
      %1617 = vmatpush1.msra.mxu0 0.0
      %1618 = vmatprep.subr.mxu0 0.0
      %1619 = vmatpush1.msra.mxu0 0.0
      %1620 = vmatprep.subr.mxu0 0.0
      %1621 = vmatpush1.msra.mxu0 0.0
      %1622 = vmatprep.subr.mxu0 0.0
      %1623 = vmatpush1.msra.mxu0 0.0
      %1624 = vmatprep.subr.mxu0 0.0
      %1625 = vmatpush1.msra.mxu0 0.0
      %1626 = vmatprep.subr.mxu0 0.0
      %1627 = vmatpush1.msra.mxu0 0.0
      %1628 = vmatprep.subr.mxu0 0.0
      %1629 = vmatpush1.msra.mxu0 0.0
      %1630 = vmatprep.subr.mxu0 0.0
      %1631 = vmatpush1.msra.mxu0 0.0
      %1632 = vmatprep.subr.mxu0 0.0
      %1633 = vmatpush1.msra.mxu0 0.0
      %1634 = vmatprep.subr.mxu0 0.0
      %1635 = vmatpush1.msra.mxu0 0.0
      %1636 = vmatprep.subr.mxu0 0.0
      %1637 = vmatpush1.msra.mxu0 0.0
      %1638 = vmatprep.subr.mxu0 0.0
      %1639 = vmatpush1.msra.mxu0 0.0
      %1640 = vmatprep.subr.mxu0 0.0
      %1641 = vmatpush1.msra.mxu0 0.0
      %1642 = vmatprep.subr.mxu0 0.0
      %1643 = vmatpush1.msra.mxu0 0.0
      %1644 = vmatprep.subr.mxu0 0.0
      %1645 = vmatpush1.msra.mxu0 0.0
      %1646 = vmatprep.subr.mxu0 0.0
      %1647 = vmatpush1.msra.mxu0 0.0
      %1648 = vmatprep.subr.mxu0 0.0
      %1649 = vmatpush1.msra.mxu0 0.0
      %1650 = vmatprep.subr.mxu0 0.0
      %1651 = vmatpush1.msra.mxu0 0.0
      %1652 = vmatprep.mubr.f32.mxu0 0.0
      %1653 = vmatmul.mubr.f32.gmra.mrb[0].mxu0 %v1583
      %v1654 = vpop.f32.mrb[0].mxu0
      %v1655 = vadd.f32 0.0, %v1654
      %v1656 = vpop.f32.mrb[0].mxu0
      %1657 = vdwg.mxu0
      %v1658 = vmul.f32 %v1655, %v1060
      %vm1659 = vcmask 125952
      %v1660 = vsel %vm1659, %v1658, 0.0
      %v1661 = vrot.slane %v1660, 4
      %v1662 = vadd.f32 %v1660, %v1661
      %v1663 = vrot.slane %v1662, 2
      %v1664 = vadd.f32 %v1662, %v1663
      %v1665 = vrot.slane %v1664, 1
      %v1666 = vadd.f32 %v1664, %v1665
      %v1667 = vsub.f32 %v143, %v1666
      %v1668 = vmul.f32 %v1667, 0.03125
      %v1669 = vmax.f32 %v1668, 1e-06
      %v1670 = vrcp.pop %v1669
      %v1671 = vmul.f32 %v1669, %v1670
      %v1672 = vsub.f32 2.0, %v1671
      %v1673 = vmul.f32 %v1670, %v1672
      %v1674 = vlaneseq
      %v1675 = vshrl.u32 %v1674, 7
      %v1676 = vsub.s32 0, %v1675
      %v1677 = vrot.slane %v1673, %v1676
      %v1678 = vmul.f32 %v1655, %v1677
      %v1680 = vsel %vm167, %v1678, 0
      %v1683 = vsel %vm167, %v1655, 0
      %1685 = vmatprep.subr.mxu0 0.0
      %1686 = vmatpush1.xpose.msra.mxu0 %v1683
      %1687 = vmatprep.subr.mxu0 0.0
      %1688 = vmatpush1.xpose.msra.mxu0 0.0
      %1689 = vmatprep.subr.mxu0 0.0
      %1690 = vmatpush1.xpose.msra.mxu0 0.0
      %1691 = vmatprep.subr.mxu0 0.0
      %1692 = vmatpush1.xpose.msra.mxu0 0.0
      %1693 = vmatprep.subr.mxu0 0.0
      %1694 = vmatpush1.xpose.msra.mxu0 0.0
      %1695 = vmatprep.subr.mxu0 0.0
      %1696 = vmatpush1.xpose.msra.mxu0 0.0
      %1697 = vmatprep.subr.mxu0 0.0
      %1698 = vmatpush1.xpose.msra.mxu0 0.0
      %1699 = vmatprep.subr.mxu0 0.0
      %1700 = vmatpush1.xpose.msra.mxu0 0.0
      %1701 = vmatprep.subr.mxu0 0.0
      %1702 = vmatpush1.xpose.msra.mxu0 0.0
      %1703 = vmatprep.subr.mxu0 0.0
      %1704 = vmatpush1.xpose.msra.mxu0 0.0
      %1705 = vmatprep.subr.mxu0 0.0
      %1706 = vmatpush1.xpose.msra.mxu0 0.0
      %1707 = vmatprep.subr.mxu0 0.0
      %1708 = vmatpush1.xpose.msra.mxu0 0.0
      %1709 = vmatprep.subr.mxu0 0.0
      %1710 = vmatpush1.xpose.msra.mxu0 0.0
      %1711 = vmatprep.subr.mxu0 0.0
      %1712 = vmatpush1.xpose.msra.mxu0 0.0
      %1713 = vmatprep.subr.mxu0 0.0
      %1714 = vmatpush1.xpose.msra.mxu0 0.0
      %1715 = vmatprep.subr.mxu0 0.0
      %1716 = vmatpush1.xpose.msra.mxu0 0.0
      %1717 = vmatprep.subr.mxu0 0.0
      %1718 = vmatpush1.xpose.msra.mxu0 0.0
      %1719 = vmatprep.subr.mxu0 0.0
      %1720 = vmatpush1.xpose.msra.mxu0 0.0
      %1721 = vmatprep.subr.mxu0 0.0
      %1722 = vmatpush1.xpose.msra.mxu0 0.0
      %1723 = vmatprep.subr.mxu0 0.0
      %1724 = vmatpush1.xpose.msra.mxu0 0.0
      %1725 = vmatprep.subr.mxu0 0.0
      %1726 = vmatpush1.xpose.msra.mxu0 0.0
      %1727 = vmatprep.subr.mxu0 0.0
      %1728 = vmatpush1.xpose.msra.mxu0 0.0
      %1729 = vmatprep.subr.mxu0 0.0
      %1730 = vmatpush1.xpose.msra.mxu0 0.0
      %1731 = vmatprep.subr.mxu0 0.0
      %1732 = vmatpush1.xpose.msra.mxu0 0.0
      %1733 = vmatprep.subr.mxu0 0.0
      %1734 = vmatpush1.xpose.msra.mxu0 0.0
      %1735 = vmatprep.subr.mxu0 0.0
      %1736 = vmatpush1.xpose.msra.mxu0 0.0
      %1737 = vmatprep.subr.mxu0 0.0
      %1738 = vmatpush1.xpose.msra.mxu0 0.0
      %1739 = vmatprep.subr.mxu0 0.0
      %1740 = vmatpush1.xpose.msra.mxu0 0.0
      %1741 = vmatprep.subr.mxu0 0.0
      %1742 = vmatpush1.xpose.msra.mxu0 0.0
      %1743 = vmatprep.subr.mxu0 0.0
      %1744 = vmatpush1.xpose.msra.mxu0 0.0
      %1745 = vmatprep.subr.mxu0 0.0
      %1746 = vmatpush1.xpose.msra.mxu0 0.0
      %1747 = vmatprep.subr.mxu0 0.0
      %1748 = vmatpush1.xpose.msra.mxu0 0.0
      %1749 = vmatprep.mubr.f32.mxu0 0.0
      %1750 = vmatmul.mubr.f32.gmra.mrb[0].mxu0 %v1680
      %v1751 = vpop.f32.mrb[0].mxu0
      %v1752 = vadd.f32 0.0, %v1751
      %v1753 = vpop.f32.mrb[0].mxu0
      %1754 = vdwg.mxu0
      %v1755 = vadd.f32 %v63, %v1752
      %v1757 = vrot.slane %v1755, 1
      %1758 = vrot.lane.b32.xlu0 %v1757, 127
      %v1759 = vpop.permute.xlu0 %1758
      %v1761 = vmul.f32 %v1755, %v1759
      %1762 = vrot.lane.b32.xlu0 %v1757, 1
      %v1763 = vpop.permute.xlu0 %1762
      %v1765 = vmul.f32 %v1755, %v1763
      %1767 = vrot.lane.b32.xlu0 %v1765, 127
      %v1768 = vpop.permute.xlu0 %1767
      %v1770 = vsub.f32 %v1761, %v1768
      %v1772 = vrot.slane %v1770, 1
      %1773 = vrot.lane.b32.xlu0 %v1772, 127
      %v1774 = vpop.permute.xlu0 %1773
      %v1776 = vmul.f32 %v1755, %v1774
      %1777 = vrot.lane.b32.xlu0 %v1757, 126
      %v1778 = vpop.permute.xlu0 %1777
      %v1780 = vmul.f32 %v1755, %v1778
      %1781 = vrot.lane.b32.xlu0 %v1757, 2
      %v1782 = vpop.permute.xlu0 %1781
      %v1784 = vmul.f32 %v1755, %v1782
      %1786 = vrot.lane.b32.xlu0 %v1784, 126
      %v1787 = vpop.permute.xlu0 %1786
      %v1789 = vsub.f32 %v1780, %v1787
      %v1791 = vrot.slane %v1789, 1
      %1792 = vrot.lane.b32.xlu0 %v1791, 1
      %v1793 = vpop.permute.xlu0 %1792
      %v1795 = vmul.f32 %v1755, %v1793
      %v1796 = vsub.f32 0.0, %v1795
      %1798 = vrot.lane.b32.xlu0 %v1796, 127
      %v1799 = vpop.permute.xlu0 %1798
      %v1801 = vadd.f32 %v1776, %v1799
      %1802 = vrot.lane.b32.xlu0 %v1772, 2
      %v1803 = vpop.permute.xlu0 %1802
      %v1805 = vmul.f32 %v1755, %v1803
      %1807 = vrot.lane.b32.xlu0 %v1805, 126
      %v1808 = vpop.permute.xlu0 %1807
      %v1810 = vadd.f32 %v1801, %v1808
      %1811 = vrot.lane.b32.xlu0 %v1772, 126
      %v1812 = vpop.permute.xlu0 %1811
      %v1814 = vmul.f32 %v1755, %v1812
      %1815 = vrot.lane.b32.xlu0 %v1757, 125
      %v1816 = vpop.permute.xlu0 %1815
      %v1818 = vmul.f32 %v1755, %v1816
      %1819 = vrot.lane.b32.xlu0 %v1757, 3
      %v1820 = vpop.permute.xlu0 %1819
      %v1822 = vmul.f32 %v1755, %v1820
      %1824 = vrot.lane.b32.xlu0 %v1822, 125
      %v1825 = vpop.permute.xlu0 %1824
      %v1827 = vsub.f32 %v1818, %v1825
      %v1829 = vrot.slane %v1827, 1
      %1830 = vrot.lane.b32.xlu0 %v1829, 2
      %v1831 = vpop.permute.xlu0 %1830
      %v1833 = vmul.f32 %v1755, %v1831
      %v1834 = vsub.f32 0.0, %v1833
      %1836 = vrot.lane.b32.xlu0 %v1834, 126
      %v1837 = vpop.permute.xlu0 %1836
      %v1839 = vadd.f32 %v1814, %v1837
      %1840 = vrot.lane.b32.xlu0 %v1791, 3
      %v1841 = vpop.permute.xlu0 %1840
      %v1843 = vmul.f32 %v1755, %v1841
      %1845 = vrot.lane.b32.xlu0 %v1843, 125
      %v1846 = vpop.permute.xlu0 %1845
      %v1848 = vadd.f32 %v1839, %v1846
      %v1849 = vsub.f32 0.0, %v1848
      %1850 = vrot.lane.b32.xlu0 %v1791, 127
      %v1851 = vpop.permute.xlu0 %1850
      %v1853 = vmul.f32 %v1755, %v1851
      %1854 = vrot.lane.b32.xlu0 %v1829, 1
      %v1855 = vpop.permute.xlu0 %1854
      %v1857 = vmul.f32 %v1755, %v1855
      %v1858 = vsub.f32 0.0, %v1857
      %1860 = vrot.lane.b32.xlu0 %v1858, 127
      %v1861 = vpop.permute.xlu0 %1860
      %v1863 = vadd.f32 %v1853, %v1861
      %1864 = vrot.lane.b32.xlu0 %v1772, 3
      %v1865 = vpop.permute.xlu0 %1864
      %v1867 = vmul.f32 %v1755, %v1865
      %1869 = vrot.lane.b32.xlu0 %v1867, 125
      %v1870 = vpop.permute.xlu0 %1869
      %v1872 = vadd.f32 %v1863, %v1870
      %v1873 = vsub.f32 0.0, %v1810
      %v1874 = vrot.slane %v1770, 2
      %1875 = vrot.lane.b32.xlu0 %v1874, 127
      %v1876 = vpop.permute.xlu0 %1875
      %v1878 = vmul.f32 %v1755, %v1876
      %v1879 = vrot.slane %v1789, 2
      %1880 = vrot.lane.b32.xlu0 %v1879, 1
      %v1881 = vpop.permute.xlu0 %1880
      %v1883 = vmul.f32 %v1755, %v1881
      %v1884 = vsub.f32 0.0, %v1883
      %1886 = vrot.lane.b32.xlu0 %v1884, 127
      %v1887 = vpop.permute.xlu0 %1886
      %v1889 = vadd.f32 %v1878, %v1887
      %1890 = vrot.lane.b32.xlu0 %v1874, 2
      %v1891 = vpop.permute.xlu0 %1890
      %v1893 = vmul.f32 %v1755, %v1891
      %1895 = vrot.lane.b32.xlu0 %v1893, 126
      %v1896 = vpop.permute.xlu0 %1895
      %v1898 = vadd.f32 %v1889, %v1896
      %v1899 = vsub.f32 0.0, %v1898
      %1900 = vrot.lane.b32.xlu0 %v1874, 126
      %v1901 = vpop.permute.xlu0 %1900
      %v1903 = vmul.f32 %v1755, %v1901
      %v1904 = vrot.slane %v1827, 2
      %1905 = vrot.lane.b32.xlu0 %v1904, 2
      %v1906 = vpop.permute.xlu0 %1905
      %v1908 = vmul.f32 %v1755, %v1906
      %v1909 = vsub.f32 0.0, %v1908
      %1911 = vrot.lane.b32.xlu0 %v1909, 126
      %v1912 = vpop.permute.xlu0 %1911
      %v1914 = vadd.f32 %v1903, %v1912
      %1915 = vrot.lane.b32.xlu0 %v1879, 3
      %v1916 = vpop.permute.xlu0 %1915
      %v1918 = vmul.f32 %v1755, %v1916
      %1920 = vrot.lane.b32.xlu0 %v1918, 125
      %v1921 = vpop.permute.xlu0 %1920
      %v1923 = vadd.f32 %v1914, %v1921
      %1924 = vrot.lane.b32.xlu0 %v1879, 127
      %v1925 = vpop.permute.xlu0 %1924
      %v1927 = vmul.f32 %v1755, %v1925
      %1928 = vrot.lane.b32.xlu0 %v1904, 1
      %v1929 = vpop.permute.xlu0 %1928
      %v1931 = vmul.f32 %v1755, %v1929
      %v1932 = vsub.f32 0.0, %v1931
      %1934 = vrot.lane.b32.xlu0 %v1932, 127
      %v1935 = vpop.permute.xlu0 %1934
      %v1937 = vadd.f32 %v1927, %v1935
      %1938 = vrot.lane.b32.xlu0 %v1874, 3
      %v1939 = vpop.permute.xlu0 %1938
      %v1941 = vmul.f32 %v1755, %v1939
      %1943 = vrot.lane.b32.xlu0 %v1941, 125
      %v1944 = vpop.permute.xlu0 %1943
      %v1946 = vadd.f32 %v1937, %v1944
      %v1947 = vsub.f32 0.0, %v1946
      %v1948 = vrot.slane %v1755, 2
      %1949 = vrot.lane.b32.xlu0 %v1948, 127
      %v1950 = vpop.permute.xlu0 %1949
      %v1952 = vmul.f32 %v1755, %v1950
      %1953 = vrot.lane.b32.xlu0 %v1948, 1
      %v1954 = vpop.permute.xlu0 %1953
      %v1956 = vmul.f32 %v1755, %v1954
      %1958 = vrot.lane.b32.xlu0 %v1956, 127
      %v1959 = vpop.permute.xlu0 %1958
      %v1961 = vsub.f32 %v1952, %v1959
      %v1963 = vrot.slane %v1961, 1
      %1964 = vrot.lane.b32.xlu0 %v1963, 127
      %v1965 = vpop.permute.xlu0 %1964
      %v1967 = vmul.f32 %v1755, %v1965
      %1968 = vrot.lane.b32.xlu0 %v1948, 126
      %v1969 = vpop.permute.xlu0 %1968
      %v1971 = vmul.f32 %v1755, %v1969
      %1972 = vrot.lane.b32.xlu0 %v1948, 2
      %v1973 = vpop.permute.xlu0 %1972
      %v1975 = vmul.f32 %v1755, %v1973
      %1977 = vrot.lane.b32.xlu0 %v1975, 126
      %v1978 = vpop.permute.xlu0 %1977
      %v1980 = vsub.f32 %v1971, %v1978
      %v1982 = vrot.slane %v1980, 1
      %1983 = vrot.lane.b32.xlu0 %v1982, 1
      %v1984 = vpop.permute.xlu0 %1983
      %v1986 = vmul.f32 %v1755, %v1984
      %v1987 = vsub.f32 0.0, %v1986
      %1989 = vrot.lane.b32.xlu0 %v1987, 127
      %v1990 = vpop.permute.xlu0 %1989
      %v1992 = vadd.f32 %v1967, %v1990
      %1993 = vrot.lane.b32.xlu0 %v1963, 2
      %v1994 = vpop.permute.xlu0 %1993
      %v1996 = vmul.f32 %v1755, %v1994
      %1998 = vrot.lane.b32.xlu0 %v1996, 126
      %v1999 = vpop.permute.xlu0 %1998
      %v2001 = vadd.f32 %v1992, %v1999
      %2002 = vrot.lane.b32.xlu0 %v1963, 126
      %v2003 = vpop.permute.xlu0 %2002
      %v2005 = vmul.f32 %v1755, %v2003
      %2006 = vrot.lane.b32.xlu0 %v1948, 125
      %v2007 = vpop.permute.xlu0 %2006
      %v2009 = vmul.f32 %v1755, %v2007
      %2010 = vrot.lane.b32.xlu0 %v1948, 3
      %v2011 = vpop.permute.xlu0 %2010
      %v2013 = vmul.f32 %v1755, %v2011
      %2015 = vrot.lane.b32.xlu0 %v2013, 125
      %v2016 = vpop.permute.xlu0 %2015
      %v2018 = vsub.f32 %v2009, %v2016
      %v2020 = vrot.slane %v2018, 1
      %2021 = vrot.lane.b32.xlu0 %v2020, 2
      %v2022 = vpop.permute.xlu0 %2021
      %v2024 = vmul.f32 %v1755, %v2022
      %v2025 = vsub.f32 0.0, %v2024
      %2027 = vrot.lane.b32.xlu0 %v2025, 126
      %v2028 = vpop.permute.xlu0 %2027
      %v2030 = vadd.f32 %v2005, %v2028
      %2031 = vrot.lane.b32.xlu0 %v1982, 3
      %v2032 = vpop.permute.xlu0 %2031
      %v2034 = vmul.f32 %v1755, %v2032
      %2036 = vrot.lane.b32.xlu0 %v2034, 125
      %v2037 = vpop.permute.xlu0 %2036
      %v2039 = vadd.f32 %v2030, %v2037
      %v2040 = vsub.f32 0.0, %v2039
      %2041 = vrot.lane.b32.xlu0 %v1982, 127
      %v2042 = vpop.permute.xlu0 %2041
      %v2044 = vmul.f32 %v1755, %v2042
      %2045 = vrot.lane.b32.xlu0 %v2020, 1
      %v2046 = vpop.permute.xlu0 %2045
      %v2048 = vmul.f32 %v1755, %v2046
      %v2049 = vsub.f32 0.0, %v2048
      %2051 = vrot.lane.b32.xlu0 %v2049, 127
      %v2052 = vpop.permute.xlu0 %2051
      %v2054 = vadd.f32 %v2044, %v2052
      %2055 = vrot.lane.b32.xlu0 %v1963, 3
      %v2056 = vpop.permute.xlu0 %2055
      %v2058 = vmul.f32 %v1755, %v2056
      %2060 = vrot.lane.b32.xlu0 %v2058, 125
      %v2061 = vpop.permute.xlu0 %2060
      %v2063 = vadd.f32 %v2054, %v2061
      %v2064 = vsub.f32 0.0, %v2001
      %v2065 = vsub.f32 0.0, %v1872
      %v2067 = vrot.slane %v1810, 1
      %2068 = vrot.lane.b32.xlu0 %v2067, 127
      %v2069 = vpop.permute.xlu0 %2068
      %v2071 = vmul.f32 %v1755, %v2069
      %v2073 = vrot.slane %v1849, 1
      %2074 = vrot.lane.b32.xlu0 %v2073, 1
      %v2075 = vpop.permute.xlu0 %2074
      %v2077 = vmul.f32 %v1755, %v2075
      %2079 = vrot.lane.b32.xlu0 %v2077, 127
      %v2080 = vpop.permute.xlu0 %2079
      %v2082 = vadd.f32 %v2071, %v2080
      %v2084 = vrot.slane %v1872, 1
      %2085 = vrot.lane.b32.xlu0 %v2084, 2
      %v2086 = vpop.permute.xlu0 %2085
      %v2088 = vmul.f32 %v1755, %v2086
      %2090 = vrot.lane.b32.xlu0 %v2088, 126
      %v2091 = vpop.permute.xlu0 %2090
      %v2093 = vadd.f32 %v2082, %v2091
      %v2095 = vrot.slane %v1873, 1
      %2096 = vrot.lane.b32.xlu0 %v2095, 3
      %v2097 = vpop.permute.xlu0 %2096
      %v2099 = vmul.f32 %v1755, %v2097
      %2101 = vrot.lane.b32.xlu0 %v2099, 125
      %v2102 = vpop.permute.xlu0 %2101
      %v2104 = vadd.f32 %v2093, %v2102
      %v2105 = vrcp.pop %v2104
      %v2106 = vmul.f32 %v2104, %v2105
      %v2107 = vsub.f32 2.0, %v2106
      %v2108 = vmul.f32 %v2105, %v2107
      %2109 = vset.pattern.permute.xlu0 1
      %2110 = vperm.xlu0 %2109, %v1810
      %v2111 = vpop.permute.xlu0 %2110
      %v2113 = vmul.f32 %v2111, %v37
      %2115 = vset.pattern.permute.xlu0 1
      %2116 = vperm.xlu0 %2115, %v1899
      %v2117 = vpop.permute.xlu0 %2116
      %v2119 = vmul.f32 %v2117, %v40
      %v2121 = vrot.slane %v2119, 7
      %v2123 = vadd.f32 %v2113, %v2121
      %2125 = vset.pattern.permute.xlu0 1
      %2126 = vperm.xlu0 %2125, %v2001
      %v2127 = vpop.permute.xlu0 %2126
      %v2129 = vmul.f32 %v2127, %v43
      %v2131 = vrot.slane %v2129, 7
      %v2133 = vadd.f32 %v2123, %v2131
      %2134 = vset.pattern.permute.xlu0 1
      %2135 = vperm.xlu0 %2134, %v1873
      %v2136 = vpop.permute.xlu0 %2135
      %v2138 = vmul.f32 %v2136, %v46
      %v2140 = vrot.slane %v2138, 7
      %v2142 = vadd.f32 %v2133, %v2140
      %v2143 = vlaneseq
      %v2144 = vshrl.u32 %v2143, 7
      %v2145 = vsub.s32 1, %v2144
      %v2146 = vrot.slane %v2142, %v2145
      %v2147 = vmul.f32 %v2146, %v51
      %2148 = vset.pattern.permute.xlu0 0
      %2149 = vperm.xlu0 %2148, %v1849
      %v2150 = vpop.permute.xlu0 %2149
      %v2152 = vmul.f32 %v2150, %v37
      %2154 = vset.pattern.permute.xlu0 0
      %2155 = vperm.xlu0 %2154, %v1923
      %v2156 = vpop.permute.xlu0 %2155
      %v2158 = vmul.f32 %v2156, %v40
      %v2160 = vrot.slane %v2158, 7
      %v2162 = vadd.f32 %v2152, %v2160
      %2164 = vset.pattern.permute.xlu0 0
      %2165 = vperm.xlu0 %2164, %v2040
      %v2166 = vpop.permute.xlu0 %2165
      %v2168 = vmul.f32 %v2166, %v43
      %v2170 = vrot.slane %v2168, 7
      %v2172 = vadd.f32 %v2162, %v2170
      %2174 = vset.pattern.permute.xlu0 0
      %2175 = vperm.xlu0 %2174, %v1848
      %v2176 = vpop.permute.xlu0 %2175
      %v2178 = vmul.f32 %v2176, %v46
      %v2180 = vrot.slane %v2178, 7
      %v2182 = vadd.f32 %v2172, %v2180
      %v2183 = vlaneseq
      %v2184 = vshrl.u32 %v2183, 7
      %v2185 = vsub.s32 1, %v2184
      %v2186 = vrot.slane %v2182, %v2185
      %v2187 = vmul.f32 %v2186, %v54
      %v2188 = vadd.f32 %v2147, %v2187
      %2189 = vset.pattern.permute.xlu0 0
      %2190 = vperm.xlu0 %2189, %v1872
      %v2191 = vpop.permute.xlu0 %2190
      %v2193 = vmul.f32 %v2191, %v37
      %2195 = vset.pattern.permute.xlu0 0
      %2196 = vperm.xlu0 %2195, %v1947
      %v2197 = vpop.permute.xlu0 %2196
      %v2199 = vmul.f32 %v2197, %v40
      %v2201 = vrot.slane %v2199, 7
      %v2203 = vadd.f32 %v2193, %v2201
      %2205 = vset.pattern.permute.xlu0 0
      %2206 = vperm.xlu0 %2205, %v2063
      %v2207 = vpop.permute.xlu0 %2206
      %v2209 = vmul.f32 %v2207, %v43
      %v2211 = vrot.slane %v2209, 7
      %v2213 = vadd.f32 %v2203, %v2211
      %2215 = vset.pattern.permute.xlu0 0
      %2216 = vperm.xlu0 %2215, %v2065
      %v2217 = vpop.permute.xlu0 %2216
      %v2219 = vmul.f32 %v2217, %v46
      %v2221 = vrot.slane %v2219, 7
      %v2223 = vadd.f32 %v2213, %v2221
      %v2224 = vlaneseq
      %v2225 = vshrl.u32 %v2224, 7
      %v2226 = vsub.s32 1, %v2225
      %v2227 = vrot.slane %v2223, %v2226
      %v2228 = vmul.f32 %v2227, %v57
      %v2229 = vadd.f32 %v2188, %v2228
      %2230 = vset.pattern.permute.xlu0 0
      %2231 = vperm.xlu0 %2230, %v1873
      %v2232 = vpop.permute.xlu0 %2231
      %v2234 = vmul.f32 %v2232, %v37
      %2236 = vset.pattern.permute.xlu0 0
      %2237 = vperm.xlu0 %2236, %v1898
      %v2238 = vpop.permute.xlu0 %2237
      %v2240 = vmul.f32 %v2238, %v40
      %v2242 = vrot.slane %v2240, 7
      %v2244 = vadd.f32 %v2234, %v2242
      %2246 = vset.pattern.permute.xlu0 0
      %2247 = vperm.xlu0 %2246, %v2064
      %v2248 = vpop.permute.xlu0 %2247
      %v2250 = vmul.f32 %v2248, %v43
      %v2252 = vrot.slane %v2250, 7
      %v2254 = vadd.f32 %v2244, %v2252
      %2255 = vset.pattern.permute.xlu0 0
      %2256 = vperm.xlu0 %2255, %v1810
      %v2257 = vpop.permute.xlu0 %2256
      %v2259 = vmul.f32 %v2257, %v46
      %v2261 = vrot.slane %v2259, 7
      %v2263 = vadd.f32 %v2254, %v2261
      %v2264 = vlaneseq
      %v2265 = vshrl.u32 %v2264, 7
      %v2266 = vsub.s32 1, %v2265
      %v2267 = vrot.slane %v2263, %v2266
      %v2268 = vmul.f32 %v2267, %v60
      %v2269 = vadd.f32 %v2229, %v2268
      %s2271 = vtos %v2108
      %v2272 = vstv %s2271
      %v2274 = vmul.f32 %v2269, %v2272
      %2275 = vmatprep.subr.mxu0 0.0
      %2276 = vmatpush1.msra.mxu0 %v31
      %2277 = vmatprep.subr.mxu0 0.0
      %2278 = vmatpush1.msra.mxu0 %v32
      %2279 = vmatprep.subr.mxu0 0.0
      %2280 = vmatpush1.msra.mxu0 0.0
      %2281 = vmatprep.subr.mxu0 0.0
      %2282 = vmatpush1.msra.mxu0 0.0
      %2283 = vmatprep.subr.mxu0 0.0
      %2284 = vmatpush1.msra.mxu0 0.0
      %2285 = vmatprep.subr.mxu0 0.0
      %2286 = vmatpush1.msra.mxu0 0.0
      %2287 = vmatprep.subr.mxu0 0.0
      %2288 = vmatpush1.msra.mxu0 0.0
      %2289 = vmatprep.subr.mxu0 0.0
      %2290 = vmatpush1.msra.mxu0 0.0
      %2291 = vmatprep.subr.mxu0 0.0
      %2292 = vmatpush1.msra.mxu0 0.0
      %2293 = vmatprep.subr.mxu0 0.0
      %2294 = vmatpush1.msra.mxu0 0.0
      %2295 = vmatprep.subr.mxu0 0.0
      %2296 = vmatpush1.msra.mxu0 0.0
      %2297 = vmatprep.subr.mxu0 0.0
      %2298 = vmatpush1.msra.mxu0 0.0
      %2299 = vmatprep.subr.mxu0 0.0
      %2300 = vmatpush1.msra.mxu0 0.0
      %2301 = vmatprep.subr.mxu0 0.0
      %2302 = vmatpush1.msra.mxu0 0.0
      %2303 = vmatprep.subr.mxu0 0.0
      %2304 = vmatpush1.msra.mxu0 0.0
      %2305 = vmatprep.subr.mxu0 0.0
      %2306 = vmatpush1.msra.mxu0 0.0
      %2307 = vmatprep.subr.mxu0 0.0
      %2308 = vmatpush1.msra.mxu0 0.0
      %2309 = vmatprep.subr.mxu0 0.0
      %2310 = vmatpush1.msra.mxu0 0.0
      %2311 = vmatprep.subr.mxu0 0.0
      %2312 = vmatpush1.msra.mxu0 0.0
      %2313 = vmatprep.subr.mxu0 0.0
      %2314 = vmatpush1.msra.mxu0 0.0
      %2315 = vmatprep.subr.mxu0 0.0
      %2316 = vmatpush1.msra.mxu0 0.0
      %2317 = vmatprep.subr.mxu0 0.0
      %2318 = vmatpush1.msra.mxu0 0.0
      %2319 = vmatprep.subr.mxu0 0.0
      %2320 = vmatpush1.msra.mxu0 0.0
      %2321 = vmatprep.subr.mxu0 0.0
      %2322 = vmatpush1.msra.mxu0 0.0
      %2323 = vmatprep.subr.mxu0 0.0
      %2324 = vmatpush1.msra.mxu0 0.0
      %2325 = vmatprep.subr.mxu0 0.0
      %2326 = vmatpush1.msra.mxu0 0.0
      %2327 = vmatprep.subr.mxu0 0.0
      %2328 = vmatpush1.msra.mxu0 0.0
      %2329 = vmatprep.subr.mxu0 0.0
      %2330 = vmatpush1.msra.mxu0 0.0
      %2331 = vmatprep.subr.mxu0 0.0
      %2332 = vmatpush1.msra.mxu0 0.0
      %2333 = vmatprep.subr.mxu0 0.0
      %2334 = vmatpush1.msra.mxu0 0.0
      %2335 = vmatprep.subr.mxu0 0.0
      %2336 = vmatpush1.msra.mxu0 0.0
      %2337 = vmatprep.subr.mxu0 0.0
      %2338 = vmatpush1.msra.mxu0 0.0
      %2339 = vmatprep.mubr.f32.mxu0 0.0
      %2340 = vmatmul.mubr.f32.gmra.mrb[0].mxu0 %v1680
      %v2341 = vpop.f32.mrb[0].mxu0
      %v2342 = vadd.f32 0.0, %v2341
      %v2343 = vpop.f32.mrb[0].mxu0
      %2344 = vdwg.mxu0
      %v2346 = vsel %vm834, %v2274, 0
      %v2349 = vsel %vm838, %v2342, 0
      %2351 = vmatprep.subr.mxu0 0.0
      %2352 = vmatpush1.msra.mxu0 %v2349
      %2353 = vmatprep.subr.mxu0 0.0
      %2354 = vmatpush1.msra.mxu0 0.0
      %2355 = vmatprep.subr.mxu0 0.0
      %2356 = vmatpush1.msra.mxu0 0.0
      %2357 = vmatprep.subr.mxu0 0.0
      %2358 = vmatpush1.msra.mxu0 0.0
      %2359 = vmatprep.subr.mxu0 0.0
      %2360 = vmatpush1.msra.mxu0 0.0
      %2361 = vmatprep.subr.mxu0 0.0
      %2362 = vmatpush1.msra.mxu0 0.0
      %2363 = vmatprep.subr.mxu0 0.0
      %2364 = vmatpush1.msra.mxu0 0.0
      %2365 = vmatprep.subr.mxu0 0.0
      %2366 = vmatpush1.msra.mxu0 0.0
      %2367 = vmatprep.subr.mxu0 0.0
      %2368 = vmatpush1.msra.mxu0 0.0
      %2369 = vmatprep.subr.mxu0 0.0
      %2370 = vmatpush1.msra.mxu0 0.0
      %2371 = vmatprep.subr.mxu0 0.0
      %2372 = vmatpush1.msra.mxu0 0.0
      %2373 = vmatprep.subr.mxu0 0.0
      %2374 = vmatpush1.msra.mxu0 0.0
      %2375 = vmatprep.subr.mxu0 0.0
      %2376 = vmatpush1.msra.mxu0 0.0
      %2377 = vmatprep.subr.mxu0 0.0
      %2378 = vmatpush1.msra.mxu0 0.0
      %2379 = vmatprep.subr.mxu0 0.0
      %2380 = vmatpush1.msra.mxu0 0.0
      %2381 = vmatprep.subr.mxu0 0.0
      %2382 = vmatpush1.msra.mxu0 0.0
      %2383 = vmatprep.subr.mxu0 0.0
      %2384 = vmatpush1.msra.mxu0 0.0
      %2385 = vmatprep.subr.mxu0 0.0
      %2386 = vmatpush1.msra.mxu0 0.0
      %2387 = vmatprep.subr.mxu0 0.0
      %2388 = vmatpush1.msra.mxu0 0.0
      %2389 = vmatprep.subr.mxu0 0.0
      %2390 = vmatpush1.msra.mxu0 0.0
      %2391 = vmatprep.subr.mxu0 0.0
      %2392 = vmatpush1.msra.mxu0 0.0
      %2393 = vmatprep.subr.mxu0 0.0
      %2394 = vmatpush1.msra.mxu0 0.0
      %2395 = vmatprep.subr.mxu0 0.0
      %2396 = vmatpush1.msra.mxu0 0.0
      %2397 = vmatprep.subr.mxu0 0.0
      %2398 = vmatpush1.msra.mxu0 0.0
      %2399 = vmatprep.subr.mxu0 0.0
      %2400 = vmatpush1.msra.mxu0 0.0
      %2401 = vmatprep.subr.mxu0 0.0
      %2402 = vmatpush1.msra.mxu0 0.0
      %2403 = vmatprep.subr.mxu0 0.0
      %2404 = vmatpush1.msra.mxu0 0.0
      %2405 = vmatprep.subr.mxu0 0.0
      %2406 = vmatpush1.msra.mxu0 0.0
      %2407 = vmatprep.subr.mxu0 0.0
      %2408 = vmatpush1.msra.mxu0 0.0
      %2409 = vmatprep.subr.mxu0 0.0
      %2410 = vmatpush1.msra.mxu0 0.0
      %2411 = vmatprep.subr.mxu0 0.0
      %2412 = vmatpush1.msra.mxu0 0.0
      %2413 = vmatprep.subr.mxu0 0.0
      %2414 = vmatpush1.msra.mxu0 0.0
      %2415 = vmatprep.mubr.f32.mxu0 0.0
      %2416 = vmatmul.mubr.f32.gmra.mrb[0].mxu0 %v2346
      %v2417 = vpop.f32.mrb[0].mxu0
      %v2418 = vadd.f32 0.0, %v2417
      %v2419 = vpop.f32.mrb[0].mxu0
      %2420 = vdwg.mxu0
      %v2422 = vsel %vm66, %v2418, 0
      %2424 = vmatprep.subr.mxu0 0.0
      %2425 = vmatpush1.xpose.msra.mxu0 %v988
      %2426 = vmatprep.subr.mxu0 0.0
      %2427 = vmatpush1.xpose.msra.mxu0 %v991
      %2428 = vmatprep.subr.mxu0 0.0
      %2429 = vmatpush1.xpose.msra.mxu0 0.0
      %2430 = vmatprep.subr.mxu0 0.0
      %2431 = vmatpush1.xpose.msra.mxu0 0.0
      %2432 = vmatprep.subr.mxu0 0.0
      %2433 = vmatpush1.xpose.msra.mxu0 0.0
      %2434 = vmatprep.subr.mxu0 0.0
      %2435 = vmatpush1.xpose.msra.mxu0 0.0
      %2436 = vmatprep.subr.mxu0 0.0
      %2437 = vmatpush1.xpose.msra.mxu0 0.0
      %2438 = vmatprep.subr.mxu0 0.0
      %2439 = vmatpush1.xpose.msra.mxu0 0.0
      %2440 = vmatprep.subr.mxu0 0.0
      %2441 = vmatpush1.xpose.msra.mxu0 0.0
      %2442 = vmatprep.subr.mxu0 0.0
      %2443 = vmatpush1.xpose.msra.mxu0 0.0
      %2444 = vmatprep.subr.mxu0 0.0
      %2445 = vmatpush1.xpose.msra.mxu0 0.0
      %2446 = vmatprep.subr.mxu0 0.0
      %2447 = vmatpush1.xpose.msra.mxu0 0.0
      %2448 = vmatprep.subr.mxu0 0.0
      %2449 = vmatpush1.xpose.msra.mxu0 0.0
      %2450 = vmatprep.subr.mxu0 0.0
      %2451 = vmatpush1.xpose.msra.mxu0 0.0
      %2452 = vmatprep.subr.mxu0 0.0
      %2453 = vmatpush1.xpose.msra.mxu0 0.0
      %2454 = vmatprep.subr.mxu0 0.0
      %2455 = vmatpush1.xpose.msra.mxu0 0.0
      %2456 = vmatprep.subr.mxu0 0.0
      %2457 = vmatpush1.xpose.msra.mxu0 0.0
      %2458 = vmatprep.subr.mxu0 0.0
      %2459 = vmatpush1.xpose.msra.mxu0 0.0
      %2460 = vmatprep.subr.mxu0 0.0
      %2461 = vmatpush1.xpose.msra.mxu0 0.0
      %2462 = vmatprep.subr.mxu0 0.0
      %2463 = vmatpush1.xpose.msra.mxu0 0.0
      %2464 = vmatprep.subr.mxu0 0.0
      %2465 = vmatpush1.xpose.msra.mxu0 0.0
      %2466 = vmatprep.subr.mxu0 0.0
      %2467 = vmatpush1.xpose.msra.mxu0 0.0
      %2468 = vmatprep.subr.mxu0 0.0
      %2469 = vmatpush1.xpose.msra.mxu0 0.0
      %2470 = vmatprep.subr.mxu0 0.0
      %2471 = vmatpush1.xpose.msra.mxu0 0.0
      %2472 = vmatprep.subr.mxu0 0.0
      %2473 = vmatpush1.xpose.msra.mxu0 0.0
      %2474 = vmatprep.subr.mxu0 0.0
      %2475 = vmatpush1.xpose.msra.mxu0 0.0
      %2476 = vmatprep.subr.mxu0 0.0
      %2477 = vmatpush1.xpose.msra.mxu0 0.0
      %2478 = vmatprep.subr.mxu0 0.0
      %2479 = vmatpush1.xpose.msra.mxu0 0.0
      %2480 = vmatprep.subr.mxu0 0.0
      %2481 = vmatpush1.xpose.msra.mxu0 0.0
      %2482 = vmatprep.subr.mxu0 0.0
      %2483 = vmatpush1.xpose.msra.mxu0 0.0
      %2484 = vmatprep.subr.mxu0 0.0
      %2485 = vmatpush1.xpose.msra.mxu0 0.0
      %2486 = vmatprep.subr.mxu0 0.0
      %2487 = vmatpush1.xpose.msra.mxu0 0.0
      %2488 = vmatprep.mubr.f32.mxu0 0.0
      %2489 = vmatmul.mubr.f32.gmra.mrb[0].mxu0 %v2422
      %v2490 = vpop.f32.mrb[0].mxu0
      %v2491 = vadd.f32 0.0, %v2490
      %v2492 = vpop.f32.mrb[0].mxu0
      %2493 = vdwg.mxu0
      %v2494 = vmul.f32 %v1673, %v143
      %vm2495 = vcmask 122880
      %v2496 = vsel %vm2495, %v2494, 0.0
      %2497 = vadd.xlane.f32.xlu0 %v2496
      %v2498 = vpop.xlane.xlu0 %2497
      %v2499 = vrot.slane %v2498, 4
      %v2500 = vadd.f32 %v2498, %v2499
      %v2501 = vrot.slane %v2500, 2
      %v2502 = vadd.f32 %v2500, %v2501
      %v2503 = vrot.slane %v2502, 1
      %v2504 = vadd.f32 %v2502, %v2503
      %s2505 = vtos %v2504
      %s2506 = smul.f32 %s2505, 0.5
      %v2507 = vmul.f32 %v1678, %v2491
      %v2508 = vsel %vm1659, %v2507, 0.0
      %2509 = vadd.xlane.f32.xlu0 %v2508
      %v2510 = vpop.xlane.xlu0 %2509
      %v2511 = vrot.slane %v2510, 4
      %v2512 = vadd.f32 %v2510, %v2511
      %v2513 = vrot.slane %v2512, 2
      %v2514 = vadd.f32 %v2512, %v2513
      %v2515 = vrot.slane %v2514, 1
      %v2516 = vadd.f32 %v2514, %v2515
      %s2517 = vtos %v2516
      %s2518 = ssub.f32 %s2506, %s2517
      %v2520 = vsel %vm834, %v1752, 0
      %v2522 = vsel %vm838, %v2418, 0
      %2524 = vmatprep.subr.mxu0 0.0
      %2525 = vmatpush1.msra.mxu0 %v2522
      %2526 = vmatprep.subr.mxu0 0.0
      %2527 = vmatpush1.msra.mxu0 0.0
      %2528 = vmatprep.subr.mxu0 0.0
      %2529 = vmatpush1.msra.mxu0 0.0
      %2530 = vmatprep.subr.mxu0 0.0
      %2531 = vmatpush1.msra.mxu0 0.0
      %2532 = vmatprep.subr.mxu0 0.0
      %2533 = vmatpush1.msra.mxu0 0.0
      %2534 = vmatprep.subr.mxu0 0.0
      %2535 = vmatpush1.msra.mxu0 0.0
      %2536 = vmatprep.subr.mxu0 0.0
      %2537 = vmatpush1.msra.mxu0 0.0
      %2538 = vmatprep.subr.mxu0 0.0
      %2539 = vmatpush1.msra.mxu0 0.0
      %2540 = vmatprep.subr.mxu0 0.0
      %2541 = vmatpush1.msra.mxu0 0.0
      %2542 = vmatprep.subr.mxu0 0.0
      %2543 = vmatpush1.msra.mxu0 0.0
      %2544 = vmatprep.subr.mxu0 0.0
      %2545 = vmatpush1.msra.mxu0 0.0
      %2546 = vmatprep.subr.mxu0 0.0
      %2547 = vmatpush1.msra.mxu0 0.0
      %2548 = vmatprep.subr.mxu0 0.0
      %2549 = vmatpush1.msra.mxu0 0.0
      %2550 = vmatprep.subr.mxu0 0.0
      %2551 = vmatpush1.msra.mxu0 0.0
      %2552 = vmatprep.subr.mxu0 0.0
      %2553 = vmatpush1.msra.mxu0 0.0
      %2554 = vmatprep.subr.mxu0 0.0
      %2555 = vmatpush1.msra.mxu0 0.0
      %2556 = vmatprep.subr.mxu0 0.0
      %2557 = vmatpush1.msra.mxu0 0.0
      %2558 = vmatprep.subr.mxu0 0.0
      %2559 = vmatpush1.msra.mxu0 0.0
      %2560 = vmatprep.subr.mxu0 0.0
      %2561 = vmatpush1.msra.mxu0 0.0
      %2562 = vmatprep.subr.mxu0 0.0
      %2563 = vmatpush1.msra.mxu0 0.0
      %2564 = vmatprep.subr.mxu0 0.0
      %2565 = vmatpush1.msra.mxu0 0.0
      %2566 = vmatprep.subr.mxu0 0.0
      %2567 = vmatpush1.msra.mxu0 0.0
      %2568 = vmatprep.subr.mxu0 0.0
      %2569 = vmatpush1.msra.mxu0 0.0
      %2570 = vmatprep.subr.mxu0 0.0
      %2571 = vmatpush1.msra.mxu0 0.0
      %2572 = vmatprep.subr.mxu0 0.0
      %2573 = vmatpush1.msra.mxu0 0.0
      %2574 = vmatprep.subr.mxu0 0.0
      %2575 = vmatpush1.msra.mxu0 0.0
      %2576 = vmatprep.subr.mxu0 0.0
      %2577 = vmatpush1.msra.mxu0 0.0
      %2578 = vmatprep.subr.mxu0 0.0
      %2579 = vmatpush1.msra.mxu0 0.0
      %2580 = vmatprep.subr.mxu0 0.0
      %2581 = vmatpush1.msra.mxu0 0.0
      %2582 = vmatprep.subr.mxu0 0.0
      %2583 = vmatpush1.msra.mxu0 0.0
      %2584 = vmatprep.subr.mxu0 0.0
      %2585 = vmatpush1.msra.mxu0 0.0
      %2586 = vmatprep.subr.mxu0 0.0
      %2587 = vmatpush1.msra.mxu0 0.0
      %2588 = vmatprep.mubr.f32.mxu0 0.0
      %2589 = vmatmul.mubr.f32.gmra.mrb[0].mxu0 %v2520
      %v2590 = vpop.f32.mrb[0].mxu0
      %v2591 = vadd.f32 0.0, %v2590
      %v2592 = vpop.f32.mrb[0].mxu0
      %2593 = vdwg.mxu0
      %v2594 = vmul.f32 %v1752, %v2274
      %vm2595 = vcmask 27648
      %v2596 = vsel %vm2595, %v2594, 0.0
      %2597 = vadd.xlane.f32.xlu0 %v2596
      %v2598 = vpop.xlane.xlu0 %2597
      %v2599 = vrot.slane %v2598, 4
      %v2600 = vadd.f32 %v2598, %v2599
      %v2601 = vrot.slane %v2600, 2
      %v2602 = vadd.f32 %v2600, %v2601
      %v2603 = vrot.slane %v2602, 1
      %v2604 = vadd.f32 %v2602, %v2603
      %s2605 = vtos %v2604
      %s2606 = smul.f32 %s2605, 32.0
      %v2607 = vmul.f32 %v2591, %v2418
      %vm2608 = vcmask 257024
      %v2609 = vsel %vm2608, %v2607, 0.0
      %2610 = vadd.xlane.f32.xlu0 %v2609
      %v2611 = vpop.xlane.xlu0 %2610
      %v2612 = vrot.slane %v2611, 4
      %v2613 = vadd.f32 %v2611, %v2612
      %v2614 = vrot.slane %v2613, 2
      %v2615 = vadd.f32 %v2613, %v2614
      %v2616 = vrot.slane %v2615, 1
      %v2617 = vadd.f32 %v2615, %v2616
      %s2618 = vtos %v2617
      %s2619 = sadd.f32 %s2606, %s2618
      %s2620 = smul.f32 %s2619, 0.5
      %v2621 = vlog2.pop %v1669
      %v2622 = vmul.f32 %v2621, 0.6931472
      %v2623 = vsel %vm2495, %v2622, 0.0
      %2624 = vadd.xlane.f32.xlu0 %v2623
      %v2625 = vpop.xlane.xlu0 %2624
      %v2626 = vrot.slane %v2625, 4
      %v2627 = vadd.f32 %v2625, %v2626
      %v2628 = vrot.slane %v2627, 2
      %v2629 = vadd.f32 %v2627, %v2628
      %v2630 = vrot.slane %v2629, 1
      %v2631 = vadd.f32 %v2629, %v2630
      %s2632 = vtos %v2631
      %s2633 = smul.f32 %s2632, 16.0
      %s2634 = sadd.f32 %s2518, %s2620
      %s2635 = sadd.f32 %s2634, %s2633
      %v2636 = vstv %s149
      %vm2637 = vcmp.eq.s32.totalorder %v34, %v2636
      %v2638 = vstv %s2635
      %v2639 = vsel %vm2637, %v2638, %v156
    $region22: #{pcca_forward.1} parent=1 // loop_footer
      %s153 = sadd.s32 1, %s149
    $region23: #{pcca_forward.1} parent=1 // loop_footer_branch
      %148 = sbr.rel target = $region19
    $region24: #{pcca_forward.1} parent=1 // loop_exit
      _
    %vm2640 = vcmask 125952
    %2641 = vst.msk [vmem:[%s3] sm:$0xf] %vm2640, %v154
    %vm2642 = vcmask 122880
    %2643 = vst.msk [vmem:[%s3 + $0x4] sm:$0x1] %vm2642, %v155
    %vm2644 = vcmask 16384
    %2645 = vst.msk [vmem:[#allocation5] sm:$0x1] %vm2644, %v156
    // Predicated region
    $region25: #{pcca_forward.1} parent=1 // pred_check
      _
    $region26: #{pcca_forward.1} parent=1 // pred_check_branch
      %2647 = sbr.rel (0) target = $region28
    $region27: #{pcca_forward.1} parent=1 // pred_region
      _
    $region28: #{pcca_forward.1} parent=1 // pred_fallthru
      _
    // Predicated region
    $region29: #{pcca_forward.1} parent=1 // pred_check
      _
    $region30: #{pcca_forward.1} parent=1 // pred_check_branch
      %2649 = sbr.rel (0) target = $region32
    $region31: #{pcca_forward.1} parent=1 // pred_region
      %s2651 = ssub.s32 16, 16
      %2652 = vsyncadd [#allocation4], %s2651
      %s2654 = sshll.u32 [#allocation5], 4
      %s2655 = int_to_ptr.vmem [resolvable:$true] %s2654
      %2657 = dma.vmem_to_hbm [thread:$0]  %s2655, 16, %s4, [#allocation4]
    $region32: #{pcca_forward.1} parent=1 // pred_fallthru
      _
    // Predicated region
    $region33: #{pcca_forward.1} parent=1 // pred_check
      _
    $region34: #{pcca_forward.1} parent=1 // pred_check_branch
      %2659 = sbr.rel (0) target = $region36
    $region35: #{pcca_forward.1} parent=1 // pred_region
      _
    $region36: #{pcca_forward.1} parent=1 // pred_fallthru
      _
    // Predicated region
    $region37: #{pcca_forward.1} parent=1 // pred_check
      _
    $region38: #{pcca_forward.1} parent=1 // pred_check_branch
      %2661 = sbr.rel (0) target = $region40
    $region39: #{pcca_forward.1} parent=1 // pred_region
      %2662 = dma.done [#allocation4], 16
    $region40: #{pcca_forward.1} parent=1 // pred_fallthru
      _
    %2663 = vsyncpa [#allocation3], 1
    %2664 = vsyncpa [#allocation4], 1

</llo_original>
